<compile_context>
chip_gen: v7x
topology: tpu7x:2x2x1
jax: 0.10.0
libtpu: 0.0.40
codegen_flags: <defaults>
</compile_context>

<pallas_src>
import jax
import jax.numpy as jnp
from jax.experimental import pallas as pl
from jax.experimental.pallas import tpu as pltpu

# ---- model constants (from STID_DSC.__init__) -------------------------------
NUM_NODES = 321
NODE_DIM = 32
INPUT_LEN = 168
INPUT_DIM = 3
EMBED_DIM = 32
OUTPUT_LEN = 1
NUM_LAYER = 6
TEMP_DIM_TID = 32
TEMP_DIM_DIW = 32
HIDDEN_DIM = EMBED_DIM + NODE_DIM + TEMP_DIM_TID + TEMP_DIM_DIW   # 128
ALIGN_DIM = 64
TS_IN = INPUT_DIM * INPUT_LEN                                     # 504
TS_IN_PAD = 512                                                   # 4 * 128 lanes
EMB_CAT = NODE_DIM + TEMP_DIM_TID + TEMP_DIM_DIW                  # 96


def _round_up(x, m):
    return ((x + m - 1) // m) * m


def _cdiv(a, b):
    return -(-a // b)


def _choose_tm(m_rows):
    # Largest row tile <= 2048 that minimizes tail padding and keeps an EVEN
    # number of grid steps (v7x megacore: both TensorCores get balanced work on
    # the "parallel" axis). Multiple of 16 keeps bf16 (16,128) sublane packing
    # clean. VMEM per step at tm=2048 is ~10 MiB with double buffering, well
    # under every generation's scoped limit.
    TM_CAP = 2048
    n_steps = max(_cdiv(m_rows, TM_CAP), 1)
    if n_steps % 2:
        n_steps += 1
    tm = _round_up(_cdiv(m_rows, n_steps), 16)
    return max(tm, 16)


# ---- Pallas kernel -----------------------------------------------------------
def stid_kernel(x_ts_ref, emb_ref, w_ts_ref, b_in_ref,
                w1_ref, b1_ref, w2_ref, b2_ref,
                w_head_ref, b_head_ref, out_ref):
    # fused time_series_emb_layer + channel concat:
    #   h[:, 0:32]   = X_ts @ W_ts + b_ts          (MXU, K = 512 padded)
    #   h[:, 32:128] = [node | tid | diw] emb      (streamed block, VPU add)
    h = (jnp.dot(x_ts_ref[...], w_ts_ref[...],
                 preferred_element_type=jnp.float32)
         + emb_ref[...].astype(jnp.float32)
         + b_in_ref[...])
    # encoder: 6 x (fc2(drop(relu(fc1(h)))) + h); dropout is identity in eval.
    # bf16 MXU operands, f32 accumulation, residual kept in f32.
    for layer in range(NUM_LAYER):
        z = jnp.dot(h.astype(jnp.bfloat16), w1_ref[layer],
                    preferred_element_type=jnp.float32) + b1_ref[layer]
        z = jnp.maximum(z, 0.0)
        z = jnp.dot(z.astype(jnp.bfloat16), w2_ref[layer],
                    preferred_element_type=jnp.float32) + b2_ref[layer]
        h = h + z
    # fused output heads: cols [0:64] = hidden_align, col 64 = prediction.
    # TODO(synk): on v6e/v7x the head could be folded into the layer loop
    # (256-wide MXU N makes it free) — skipped here to keep v5e cost and f32
    # accumulation-order parity with the PyTorch graph.
    out_ref[...] = (jnp.dot(h.astype(jnp.bfloat16), w_head_ref[...],
                            preferred_element_type=jnp.float32)
                    + b_head_ref[...])


def stid_pallas(x_ts, emb, kp, tm):
    """x_ts: [m_pad, 512] bf16; emb: [m_pad, 128] bf16 (lanes 0:32 zero)."""
    m_pad = x_ts.shape[0]
    grid = (m_pad // tm,)

    def const_spec(shape):
        zeros = (0,) * len(shape)
        return pl.BlockSpec(shape, lambda i, _z=zeros: _z)

    in_specs = [
        pl.BlockSpec((tm, TS_IN_PAD), lambda i: (i, 0)),         # X_ts (streamed)
        pl.BlockSpec((tm, HIDDEN_DIM), lambda i: (i, 0)),        # emb (streamed)
        const_spec((TS_IN_PAD, HIDDEN_DIM)),                     # W_ts  (resident)
        const_spec((1, HIDDEN_DIM)),                             # b_in
        const_spec((NUM_LAYER, HIDDEN_DIM, HIDDEN_DIM)),         # W1
        const_spec((NUM_LAYER, 1, HIDDEN_DIM)),                  # b1
        const_spec((NUM_LAYER, HIDDEN_DIM, HIDDEN_DIM)),         # W2
        const_spec((NUM_LAYER, 1, HIDDEN_DIM)),                  # b2
        const_spec((HIDDEN_DIM, HIDDEN_DIM)),                    # W_head
        const_spec((1, HIDDEN_DIM)),                             # b_head
    ]
    out_specs = pl.BlockSpec((tm, HIDDEN_DIM), lambda i: (i, 0))
    out_shape = jax.ShapeDtypeStruct((m_pad, HIDDEN_DIM), jnp.float32)

    return pl.pallas_call(
        stid_kernel,
        out_shape=out_shape,
        grid_spec=pltpu.PrefetchScalarGridSpec(
            num_scalar_prefetch=0,
            grid=grid,
            in_specs=in_specs,
            out_specs=out_specs,
        ),
        compiler_params=pltpu.CompilerParams(
            dimension_semantics=("parallel",)),
    )(x_ts, emb, kp["w_ts"], kp["b_in"], kp["w1"], kp["b1"],
      kp["w2"], kp["b2"], kp["w_head"], kp["b_head"])


# ---- deterministic parameter init (shapes per STID_DSC.__init__) -------------
def init_params(key):
    ks = jax.random.split(key, 10)

    def xavier(k, shape):
        a = (6.0 / (shape[0] + shape[1])) ** 0.5
        return jax.random.uniform(k, shape, jnp.float32, -a, a)

    def conv1x1(kw, kb, cin, cout):
        # PyTorch Conv2d weight is [cout, cin, 1, 1]; transpose to [cin, cout]
        # for the row-major matmul layout used in the kernel.
        bound = 1.0 / (cin ** 0.5)
        w = jax.random.uniform(kw, (cout, cin), jnp.float32, -bound, bound)
        b = jax.random.uniform(kb, (cout,), jnp.float32, -bound, bound)
        return w.T, b.reshape(1, cout)

    node_emb = xavier(ks[0], (NUM_NODES, NODE_DIM))
    tid_emb = xavier(ks[1], (288, TEMP_DIM_TID))
    diw_emb = xavier(ks[2], (7, TEMP_DIM_DIW))
    w_ts, b_ts = conv1x1(ks[3], ks[4], TS_IN, EMBED_DIM)

    lkeys = jax.random.split(ks[5], NUM_LAYER * 4)
    w1s, b1s, w2s, b2s = [], [], [], []
    for l in range(NUM_LAYER):
        w1, b1 = conv1x1(lkeys[4 * l + 0], lkeys[4 * l + 1], HIDDEN_DIM, HIDDEN_DIM)
        w2, b2 = conv1x1(lkeys[4 * l + 2], lkeys[4 * l + 3], HIDDEN_DIM, HIDDEN_DIM)
        w1s.append(w1); b1s.append(b1); w2s.append(w2); b2s.append(b2)

    w_al, b_al = conv1x1(ks[6], ks[7], HIDDEN_DIM, ALIGN_DIM)
    w_reg, b_reg = conv1x1(ks[8], ks[9], HIDDEN_DIM, OUTPUT_LEN)

    return dict(node_emb=node_emb, tid_emb=tid_emb, diw_emb=diw_emb,
                w_ts=w_ts, b_ts=b_ts,
                w1=jnp.stack(w1s), b1=jnp.stack(b1s),
                w2=jnp.stack(w2s), b2=jnp.stack(b2s),
                w_al=w_al, b_al=b_al, w_reg=w_reg, b_reg=b_reg)


# ---- build fused kernel parameters (bf16 weights, f32 biases) ----------------
def build_kernel_params(p):
    # W_ts padded 504 -> 512 on K; output lanes 32:128 stay zero (filled by the
    # streamed embedding block in the kernel).
    w_ts = jnp.zeros((TS_IN_PAD, HIDDEN_DIM), jnp.float32)
    w_ts = w_ts.at[:TS_IN, :EMBED_DIM].set(p["w_ts"])
    b_in = jnp.concatenate([p["b_ts"], jnp.zeros((1, EMB_CAT), jnp.float32)], axis=-1)

    # fused heads: [W_al | W_reg | 0] -> [128,128]
    w_head = jnp.zeros((HIDDEN_DIM, HIDDEN_DIM), jnp.float32)
    w_head = w_head.at[:, :ALIGN_DIM].set(p["w_al"])
    w_head = w_head.at[:, ALIGN_DIM:ALIGN_DIM + OUTPUT_LEN].set(p["w_reg"])
    b_head = jnp.zeros((1, HIDDEN_DIM), jnp.float32)
    b_head = b_head.at[:, :ALIGN_DIM].set(p["b_al"])
    b_head = b_head.at[:, ALIGN_DIM:ALIGN_DIM + OUTPUT_LEN].set(p["b_reg"])

    return dict(
        w_ts=w_ts.astype(jnp.bfloat16), b_in=b_in,
        w1=p["w1"].astype(jnp.bfloat16), b1=p["b1"],
        w2=p["w2"].astype(jnp.bfloat16), b2=p["b2"],
        w_head=w_head.astype(jnp.bfloat16), b_head=b_head,
    )


# ---- glue: build padded bf16 kernel inputs from [B, L, N, C] history_data ----
def _prepare(history_data, params):
    B, L, N, _ = history_data.shape
    M = B * N
    tm = _choose_tm(M)
    m_pad = _round_up(M, tm)

    # TODO(synk): embedding gathers stay in plain JAX (data-dependent indexing).
    # clip guards time-of-day == 1.0 (index 288) and out-of-range day-of-week.
    tid_idx = jnp.clip((history_data[:, -1, :, 1] * 288.0).astype(jnp.int32), 0, 287)
    diw_idx = jnp.clip(history_data[:, -1, :, 2].astype(jnp.int32), 0, 6)
    tid_e = params["tid_emb"].astype(jnp.bfloat16)[tid_idx]                  # [B,N,32]
    diw_e = params["diw_emb"].astype(jnp.bfloat16)[diw_idx]                  # [B,N,32]
    node_e = jnp.broadcast_to(params["node_emb"].astype(jnp.bfloat16)[None],
                              (B, N, NODE_DIM))                              # [B,N,32]

    # time-series features: mimic PyTorch transpose(1,2).view(B,N,L*C)
    # (channel index = t*C + c). Cast to bf16 BEFORE padding so the padded
    # kernel input buffer is written exactly once.
    x_flat = jnp.transpose(history_data[..., :INPUT_DIM],
                           (0, 2, 1, 3)).reshape(M, TS_IN).astype(jnp.bfloat16)
    x_ts = jnp.pad(x_flat, ((0, m_pad - M), (0, TS_IN_PAD - TS_IN)))         # [m_pad,512] bf16

    # embedding block already positioned in lanes [32:128]; lanes [0:32] zero.
    emb = jnp.concatenate(
        [jnp.zeros((B, N, EMBED_DIM), jnp.bfloat16), node_e, tid_e, diw_e],
        axis=-1).reshape(M, HIDDEN_DIM)
    emb = jnp.pad(emb, ((0, m_pad - M), (0, 0)))                             # [m_pad,128] bf16

    kp = build_kernel_params(params)
    return x_ts, emb, kp, M, tm


def _unpack_outputs(out, M, B, N):
    out = out[:M]
    align = out[:, :ALIGN_DIM].reshape(B, N, ALIGN_DIM)
    pred = out[:, ALIGN_DIM:ALIGN_DIM + OUTPUT_LEN].reshape(B, N, OUTPUT_LEN)
    # back to PyTorch NCHW outputs: prediction [B,1,N,1], hidden_align [B,64,N,1]
    prediction = jnp.transpose(pred, (0, 2, 1))[..., None]
    hidden_align = jnp.transpose(align, (0, 2, 1))[..., None]
    return prediction, hidden_align


def stid_dsc_forward(history_data, params):
    B, L, N, _ = history_data.shape
    x_ts, emb, kp, M, tm = _prepare(history_data, params)
    out = stid_pallas(x_ts, emb, kp, tm)
    return _unpack_outputs(out, M, B, N)


# ---- pure-JAX reference (identical bf16-weight / f32-accumulate math) --------
def _mlp_chain_ref(x_ts, emb, kp):
    h = (jnp.dot(x_ts, kp["w_ts"], preferred_element_type=jnp.float32)
         + emb.astype(jnp.float32) + kp["b_in"])
    for l in range(NUM_LAYER):
        z = jnp.dot(h.astype(jnp.bfloat16), kp["w1"][l],
                    preferred_element_type=jnp.float32) + kp["b1"][l]
        z = jnp.maximum(z, 0.0)
        z = jnp.dot(z.astype(jnp.bfloat16), kp["w2"][l],
                    preferred_element_type=jnp.float32) + kp["b2"][l]
        h = h + z
    return (jnp.dot(h.astype(jnp.bfloat16), kp["w_head"],
                    preferred_element_type=jnp.float32) + kp["b_head"])


def stid_dsc_reference(history_data, params):
    B, L, N, _ = history_data.shape
    x_ts, emb, kp, M, tm = _prepare(history_data, params)
    out = _mlp_chain_ref(x_ts, emb, kp)
    return _unpack_outputs(out, M, B, N)


if __name__ == "__main__":
    key = jax.random.PRNGKey(0)
    k_feat, k_tid, k_diw, k_params = jax.random.split(key, 4)

    B = 2
    # feature 0: arbitrary signal; feature 1: time-of-day in [0,1);
    # feature 2: day-of-week index in {0,...,6} (stored as float, as the model expects)
    feat0 = jax.random.normal(k_feat, (B, INPUT_LEN, NUM_NODES, 1), jnp.float32)
    tid = jax.random.uniform(k_tid, (B, INPUT_LEN, NUM_NODES, 1), jnp.float32)
    diw = jax.random.randint(k_diw, (B, INPUT_LEN, NUM_NODES, 1), 0, 7).astype(jnp.float32)
    history_data = jnp.concatenate([feat0, tid, diw], axis=-1)   # [2, 168, 321, 3]

    params = init_params(k_params)

    pred, align = jax.jit(stid_dsc_forward)(history_data, params)
    pred = jax.block_until_ready(pred)
    align = jax.block_until_ready(align)

    assert pred.shape == (B, OUTPUT_LEN, NUM_NODES, 1), pred.shape
    assert align.shape == (B, ALIGN_DIM, NUM_NODES, 1), align.shape

    # validate against a pure-JAX reference that uses the identical bf16-weight /
    # f32-accumulation math (differences are only MXU accumulation order)
    pred_ref, align_ref = jax.jit(stid_dsc_reference)(history_data, params)
    pred_ref = jax.block_until_ready(pred_ref)
    align_ref = jax.block_until_ready(align_ref)
    assert jnp.allclose(pred, pred_ref, rtol=1e-2, atol=1e-2), \
        float(jnp.max(jnp.abs(pred - pred_ref)))
    assert jnp.allclose(align, align_ref, rtol=1e-2, atol=1e-2), \
        float(jnp.max(jnp.abs(align - align_ref)))

    print("KERNEL_OK")
</pallas_src>

<mosaic_0001>
module attributes {stable_mosaic.version = 11 : i64} {
  func.func @stid_kernel(%arg0: i32, %arg1: memref<336x512xbf16, #tpu.memory_space<vmem>>, %arg2: memref<336x128xbf16, #tpu.memory_space<vmem>>, %arg3: memref<512x128xbf16, #tpu.memory_space<vmem>>, %arg4: memref<1x128xf32, #tpu.memory_space<vmem>>, %arg5: memref<6x128x128xbf16, #tpu.memory_space<vmem>>, %arg6: memref<6x1x128xf32, #tpu.memory_space<vmem>>, %arg7: memref<6x128x128xbf16, #tpu.memory_space<vmem>>, %arg8: memref<6x1x128xf32, #tpu.memory_space<vmem>>, %arg9: memref<128x128xbf16, #tpu.memory_space<vmem>>, %arg10: memref<1x128xf32, #tpu.memory_space<vmem>>, %arg11: memref<336x128xf32, #tpu.memory_space<vmem>>) attributes {dimension_semantics = [#tpu.dimension_semantics<parallel>], iteration_bounds = array<i64: 2>, scalar_prefetch = 0 : i64, scratch_operands = 0 : i64, tpu.core_type = #tpu.core_type<tc>, window_params = [{transform_indices = @transform_0, window_bounds = array<i64: 336, 512>}, {transform_indices = @transform_1, window_bounds = array<i64: 336, 128>}, {pipeline_mode = #tpu.pipeline_mode<synchronous>, transform_indices = @transform_2, window_bounds = array<i64: 512, 128>}, {pipeline_mode = #tpu.pipeline_mode<synchronous>, transform_indices = @transform_3, window_bounds = array<i64: 1, 128>}, {pipeline_mode = #tpu.pipeline_mode<synchronous>, transform_indices = @transform_4, window_bounds = array<i64: 6, 128, 128>}, {pipeline_mode = #tpu.pipeline_mode<synchronous>, transform_indices = @transform_5, window_bounds = array<i64: 6, 1, 128>}, {pipeline_mode = #tpu.pipeline_mode<synchronous>, transform_indices = @transform_6, window_bounds = array<i64: 6, 128, 128>}, {pipeline_mode = #tpu.pipeline_mode<synchronous>, transform_indices = @transform_7, window_bounds = array<i64: 6, 1, 128>}, {pipeline_mode = #tpu.pipeline_mode<synchronous>, transform_indices = @transform_8, window_bounds = array<i64: 128, 128>}, {pipeline_mode = #tpu.pipeline_mode<synchronous>, transform_indices = @transform_9, window_bounds = array<i64: 1, 128>}, {transform_indices = @transform_10, window_bounds = array<i64: 336, 128>}]} {
    %c0 = arith.constant 0 : index
    %c0_0 = arith.constant 0 : index
    %0 = vector.load %arg1[%c0, %c0_0] : memref<336x512xbf16, #tpu.memory_space<vmem>>, vector<336x512xbf16>
    %c0_1 = arith.constant 0 : index
    %c0_2 = arith.constant 0 : index
    %1 = vector.load %arg3[%c0_1, %c0_2] : memref<512x128xbf16, #tpu.memory_space<vmem>>, vector<512x128xbf16>
    %cst = arith.constant dense<0.000000e+00> : vector<336x128xf32>
    %2 = tpu.matmul %0, %1, %cst {dimension_numbers = #tpu.dot_dimension_numbers<[1], [0], [0], [1], [0, 0, 1, 1], [], []>} : vector<336x512xbf16>, vector<512x128xbf16>, vector<336x128xf32> -> vector<336x128xf32>
    %c0_3 = arith.constant 0 : index
    %c0_4 = arith.constant 0 : index
    %3 = vector.load %arg2[%c0_3, %c0_4] : memref<336x128xbf16, #tpu.memory_space<vmem>>, vector<336x128xbf16>
    %4 = arith.extf %3 : vector<336x128xbf16> to vector<336x128xf32>
    %5 = arith.addf %2, %4 : vector<336x128xf32>
    %c0_5 = arith.constant 0 : index
    %c0_6 = arith.constant 0 : index
    %6 = vector.load %arg4[%c0_5, %c0_6] : memref<1x128xf32, #tpu.memory_space<vmem>>, vector<1x128xf32>
    %7 = vector.broadcast %6 : vector<1x128xf32> to vector<336x128xf32>
    %8 = arith.addf %5, %7 : vector<336x128xf32>
    %9 = arith.truncf %8 : vector<336x128xf32> to vector<336x128xbf16>
    %c0_7 = arith.constant 0 : index
    %c0_8 = arith.constant 0 : index
    %c0_9 = arith.constant 0 : index
    %10 = vector.load %arg5[%c0_7, %c0_8, %c0_9] : memref<6x128x128xbf16, #tpu.memory_space<vmem>>, vector<1x128x128xbf16>
    %11 = vector.shape_cast %10 : vector<1x128x128xbf16> to vector<128x128xbf16>
    %cst_10 = arith.constant dense<0.000000e+00> : vector<336x128xf32>
    %12 = tpu.matmul %9, %11, %cst_10 {dimension_numbers = #tpu.dot_dimension_numbers<[1], [0], [0], [1], [0, 0, 1, 1], [], []>} : vector<336x128xbf16>, vector<128x128xbf16>, vector<336x128xf32> -> vector<336x128xf32>
    %c0_11 = arith.constant 0 : index
    %c0_12 = arith.constant 0 : index
    %c0_13 = arith.constant 0 : index
    %13 = vector.load %arg6[%c0_11, %c0_12, %c0_13] : memref<6x1x128xf32, #tpu.memory_space<vmem>>, vector<1x1x128xf32>
    %14 = vector.shape_cast %13 : vector<1x1x128xf32> to vector<1x128xf32>
    %15 = vector.broadcast %14 : vector<1x128xf32> to vector<336x128xf32>
    %16 = arith.addf %12, %15 : vector<336x128xf32>
    %cst_14 = arith.constant 0.000000e+00 : f32
    %17 = vector.broadcast %cst_14 : f32 to vector<336x128xf32>
    %18 = arith.maximumf %16, %17 : vector<336x128xf32>
    %19 = arith.truncf %18 : vector<336x128xf32> to vector<336x128xbf16>
    %c0_15 = arith.constant 0 : index
    %c0_16 = arith.constant 0 : index
    %c0_17 = arith.constant 0 : index
    %20 = vector.load %arg7[%c0_15, %c0_16, %c0_17] : memref<6x128x128xbf16, #tpu.memory_space<vmem>>, vector<1x128x128xbf16>
    %21 = vector.shape_cast %20 : vector<1x128x128xbf16> to vector<128x128xbf16>
    %cst_18 = arith.constant dense<0.000000e+00> : vector<336x128xf32>
    %22 = tpu.matmul %19, %21, %cst_18 {dimension_numbers = #tpu.dot_dimension_numbers<[1], [0], [0], [1], [0, 0, 1, 1], [], []>} : vector<336x128xbf16>, vector<128x128xbf16>, vector<336x128xf32> -> vector<336x128xf32>
    %c0_19 = arith.constant 0 : index
    %c0_20 = arith.constant 0 : index
    %c0_21 = arith.constant 0 : index
    %23 = vector.load %arg8[%c0_19, %c0_20, %c0_21] : memref<6x1x128xf32, #tpu.memory_space<vmem>>, vector<1x1x128xf32>
    %24 = vector.shape_cast %23 : vector<1x1x128xf32> to vector<1x128xf32>
    %25 = vector.broadcast %24 : vector<1x128xf32> to vector<336x128xf32>
    %26 = arith.addf %22, %25 : vector<336x128xf32>
    %27 = arith.addf %8, %26 : vector<336x128xf32>
    %28 = arith.truncf %27 : vector<336x128xf32> to vector<336x128xbf16>
    %c1 = arith.constant 1 : index
    %c0_22 = arith.constant 0 : index
    %c0_23 = arith.constant 0 : index
    %29 = vector.load %arg5[%c1, %c0_22, %c0_23] : memref<6x128x128xbf16, #tpu.memory_space<vmem>>, vector<1x128x128xbf16>
    %30 = vector.shape_cast %29 : vector<1x128x128xbf16> to vector<128x128xbf16>
    %cst_24 = arith.constant dense<0.000000e+00> : vector<336x128xf32>
    %31 = tpu.matmul %28, %30, %cst_24 {dimension_numbers = #tpu.dot_dimension_numbers<[1], [0], [0], [1], [0, 0, 1, 1], [], []>} : vector<336x128xbf16>, vector<128x128xbf16>, vector<336x128xf32> -> vector<336x128xf32>
    %c1_25 = arith.constant 1 : index
    %c0_26 = arith.constant 0 : index
    %c0_27 = arith.constant 0 : index
    %32 = vector.load %arg6[%c1_25, %c0_26, %c0_27] : memref<6x1x128xf32, #tpu.memory_space<vmem>>, vector<1x1x128xf32>
    %33 = vector.shape_cast %32 : vector<1x1x128xf32> to vector<1x128xf32>
    %34 = vector.broadcast %33 : vector<1x128xf32> to vector<336x128xf32>
    %35 = arith.addf %31, %34 : vector<336x128xf32>
    %cst_28 = arith.constant 0.000000e+00 : f32
    %36 = vector.broadcast %cst_28 : f32 to vector<336x128xf32>
    %37 = arith.maximumf %35, %36 : vector<336x128xf32>
    %38 = arith.truncf %37 : vector<336x128xf32> to vector<336x128xbf16>
    %c1_29 = arith.constant 1 : index
    %c0_30 = arith.constant 0 : index
    %c0_31 = arith.constant 0 : index
    %39 = vector.load %arg7[%c1_29, %c0_30, %c0_31] : memref<6x128x128xbf16, #tpu.memory_space<vmem>>, vector<1x128x128xbf16>
    %40 = vector.shape_cast %39 : vector<1x128x128xbf16> to vector<128x128xbf16>
    %cst_32 = arith.constant dense<0.000000e+00> : vector<336x128xf32>
    %41 = tpu.matmul %38, %40, %cst_32 {dimension_numbers = #tpu.dot_dimension_numbers<[1], [0], [0], [1], [0, 0, 1, 1], [], []>} : vector<336x128xbf16>, vector<128x128xbf16>, vector<336x128xf32> -> vector<336x128xf32>
    %c1_33 = arith.constant 1 : index
    %c0_34 = arith.constant 0 : index
    %c0_35 = arith.constant 0 : index
    %42 = vector.load %arg8[%c1_33, %c0_34, %c0_35] : memref<6x1x128xf32, #tpu.memory_space<vmem>>, vector<1x1x128xf32>
    %43 = vector.shape_cast %42 : vector<1x1x128xf32> to vector<1x128xf32>
    %44 = vector.broadcast %43 : vector<1x128xf32> to vector<336x128xf32>
    %45 = arith.addf %41, %44 : vector<336x128xf32>
    %46 = arith.addf %27, %45 : vector<336x128xf32>
    %47 = arith.truncf %46 : vector<336x128xf32> to vector<336x128xbf16>
    %c2 = arith.constant 2 : index
    %c0_36 = arith.constant 0 : index
    %c0_37 = arith.constant 0 : index
    %48 = vector.load %arg5[%c2, %c0_36, %c0_37] : memref<6x128x128xbf16, #tpu.memory_space<vmem>>, vector<1x128x128xbf16>
    %49 = vector.shape_cast %48 : vector<1x128x128xbf16> to vector<128x128xbf16>
    %cst_38 = arith.constant dense<0.000000e+00> : vector<336x128xf32>
    %50 = tpu.matmul %47, %49, %cst_38 {dimension_numbers = #tpu.dot_dimension_numbers<[1], [0], [0], [1], [0, 0, 1, 1], [], []>} : vector<336x128xbf16>, vector<128x128xbf16>, vector<336x128xf32> -> vector<336x128xf32>
    %c2_39 = arith.constant 2 : index
    %c0_40 = arith.constant 0 : index
    %c0_41 = arith.constant 0 : index
    %51 = vector.load %arg6[%c2_39, %c0_40, %c0_41] : memref<6x1x128xf32, #tpu.memory_space<vmem>>, vector<1x1x128xf32>
    %52 = vector.shape_cast %51 : vector<1x1x128xf32> to vector<1x128xf32>
    %53 = vector.broadcast %52 : vector<1x128xf32> to vector<336x128xf32>
    %54 = arith.addf %50, %53 : vector<336x128xf32>
    %cst_42 = arith.constant 0.000000e+00 : f32
    %55 = vector.broadcast %cst_42 : f32 to vector<336x128xf32>
    %56 = arith.maximumf %54, %55 : vector<336x128xf32>
    %57 = arith.truncf %56 : vector<336x128xf32> to vector<336x128xbf16>
    %c2_43 = arith.constant 2 : index
    %c0_44 = arith.constant 0 : index
    %c0_45 = arith.constant 0 : index
    %58 = vector.load %arg7[%c2_43, %c0_44, %c0_45] : memref<6x128x128xbf16, #tpu.memory_space<vmem>>, vector<1x128x128xbf16>
    %59 = vector.shape_cast %58 : vector<1x128x128xbf16> to vector<128x128xbf16>
    %cst_46 = arith.constant dense<0.000000e+00> : vector<336x128xf32>
    %60 = tpu.matmul %57, %59, %cst_46 {dimension_numbers = #tpu.dot_dimension_numbers<[1], [0], [0], [1], [0, 0, 1, 1], [], []>} : vector<336x128xbf16>, vector<128x128xbf16>, vector<336x128xf32> -> vector<336x128xf32>
    %c2_47 = arith.constant 2 : index
    %c0_48 = arith.constant 0 : index
    %c0_49 = arith.constant 0 : index
    %61 = vector.load %arg8[%c2_47, %c0_48, %c0_49] : memref<6x1x128xf32, #tpu.memory_space<vmem>>, vector<1x1x128xf32>
    %62 = vector.shape_cast %61 : vector<1x1x128xf32> to vector<1x128xf32>
    %63 = vector.broadcast %62 : vector<1x128xf32> to vector<336x128xf32>
    %64 = arith.addf %60, %63 : vector<336x128xf32>
    %65 = arith.addf %46, %64 : vector<336x128xf32>
    %66 = arith.truncf %65 : vector<336x128xf32> to vector<336x128xbf16>
    %c3 = arith.constant 3 : index
    %c0_50 = arith.constant 0 : index
    %c0_51 = arith.constant 0 : index
    %67 = vector.load %arg5[%c3, %c0_50, %c0_51] : memref<6x128x128xbf16, #tpu.memory_space<vmem>>, vector<1x128x128xbf16>
    %68 = vector.shape_cast %67 : vector<1x128x128xbf16> to vector<128x128xbf16>
    %cst_52 = arith.constant dense<0.000000e+00> : vector<336x128xf32>
    %69 = tpu.matmul %66, %68, %cst_52 {dimension_numbers = #tpu.dot_dimension_numbers<[1], [0], [0], [1], [0, 0, 1, 1], [], []>} : vector<336x128xbf16>, vector<128x128xbf16>, vector<336x128xf32> -> vector<336x128xf32>
    %c3_53 = arith.constant 3 : index
    %c0_54 = arith.constant 0 : index
    %c0_55 = arith.constant 0 : index
    %70 = vector.load %arg6[%c3_53, %c0_54, %c0_55] : memref<6x1x128xf32, #tpu.memory_space<vmem>>, vector<1x1x128xf32>
    %71 = vector.shape_cast %70 : vector<1x1x128xf32> to vector<1x128xf32>
    %72 = vector.broadcast %71 : vector<1x128xf32> to vector<336x128xf32>
    %73 = arith.addf %69, %72 : vector<336x128xf32>
    %cst_56 = arith.constant 0.000000e+00 : f32
    %74 = vector.broadcast %cst_56 : f32 to vector<336x128xf32>
    %75 = arith.maximumf %73, %74 : vector<336x128xf32>
    %76 = arith.truncf %75 : vector<336x128xf32> to vector<336x128xbf16>
    %c3_57 = arith.constant 3 : index
    %c0_58 = arith.constant 0 : index
    %c0_59 = arith.constant 0 : index
    %77 = vector.load %arg7[%c3_57, %c0_58, %c0_59] : memref<6x128x128xbf16, #tpu.memory_space<vmem>>, vector<1x128x128xbf16>
    %78 = vector.shape_cast %77 : vector<1x128x128xbf16> to vector<128x128xbf16>
    %cst_60 = arith.constant dense<0.000000e+00> : vector<336x128xf32>
    %79 = tpu.matmul %76, %78, %cst_60 {dimension_numbers = #tpu.dot_dimension_numbers<[1], [0], [0], [1], [0, 0, 1, 1], [], []>} : vector<336x128xbf16>, vector<128x128xbf16>, vector<336x128xf32> -> vector<336x128xf32>
    %c3_61 = arith.constant 3 : index
    %c0_62 = arith.constant 0 : index
    %c0_63 = arith.constant 0 : index
    %80 = vector.load %arg8[%c3_61, %c0_62, %c0_63] : memref<6x1x128xf32, #tpu.memory_space<vmem>>, vector<1x1x128xf32>
    %81 = vector.shape_cast %80 : vector<1x1x128xf32> to vector<1x128xf32>
    %82 = vector.broadcast %81 : vector<1x128xf32> to vector<336x128xf32>
    %83 = arith.addf %79, %82 : vector<336x128xf32>
    %84 = arith.addf %65, %83 : vector<336x128xf32>
    %85 = arith.truncf %84 : vector<336x128xf32> to vector<336x128xbf16>
    %c4 = arith.constant 4 : index
    %c0_64 = arith.constant 0 : index
    %c0_65 = arith.constant 0 : index
    %86 = vector.load %arg5[%c4, %c0_64, %c0_65] : memref<6x128x128xbf16, #tpu.memory_space<vmem>>, vector<1x128x128xbf16>
    %87 = vector.shape_cast %86 : vector<1x128x128xbf16> to vector<128x128xbf16>
    %cst_66 = arith.constant dense<0.000000e+00> : vector<336x128xf32>
    %88 = tpu.matmul %85, %87, %cst_66 {dimension_numbers = #tpu.dot_dimension_numbers<[1], [0], [0], [1], [0, 0, 1, 1], [], []>} : vector<336x128xbf16>, vector<128x128xbf16>, vector<336x128xf32> -> vector<336x128xf32>
    %c4_67 = arith.constant 4 : index
    %c0_68 = arith.constant 0 : index
    %c0_69 = arith.constant 0 : index
    %89 = vector.load %arg6[%c4_67, %c0_68, %c0_69] : memref<6x1x128xf32, #tpu.memory_space<vmem>>, vector<1x1x128xf32>
    %90 = vector.shape_cast %89 : vector<1x1x128xf32> to vector<1x128xf32>
    %91 = vector.broadcast %90 : vector<1x128xf32> to vector<336x128xf32>
    %92 = arith.addf %88, %91 : vector<336x128xf32>
    %cst_70 = arith.constant 0.000000e+00 : f32
    %93 = vector.broadcast %cst_70 : f32 to vector<336x128xf32>
    %94 = arith.maximumf %92, %93 : vector<336x128xf32>
    %95 = arith.truncf %94 : vector<336x128xf32> to vector<336x128xbf16>
    %c4_71 = arith.constant 4 : index
    %c0_72 = arith.constant 0 : index
    %c0_73 = arith.constant 0 : index
    %96 = vector.load %arg7[%c4_71, %c0_72, %c0_73] : memref<6x128x128xbf16, #tpu.memory_space<vmem>>, vector<1x128x128xbf16>
    %97 = vector.shape_cast %96 : vector<1x128x128xbf16> to vector<128x128xbf16>
    %cst_74 = arith.constant dense<0.000000e+00> : vector<336x128xf32>
    %98 = tpu.matmul %95, %97, %cst_74 {dimension_numbers = #tpu.dot_dimension_numbers<[1], [0], [0], [1], [0, 0, 1, 1], [], []>} : vector<336x128xbf16>, vector<128x128xbf16>, vector<336x128xf32> -> vector<336x128xf32>
    %c4_75 = arith.constant 4 : index
    %c0_76 = arith.constant 0 : index
    %c0_77 = arith.constant 0 : index
    %99 = vector.load %arg8[%c4_75, %c0_76, %c0_77] : memref<6x1x128xf32, #tpu.memory_space<vmem>>, vector<1x1x128xf32>
    %100 = vector.shape_cast %99 : vector<1x1x128xf32> to vector<1x128xf32>
    %101 = vector.broadcast %100 : vector<1x128xf32> to vector<336x128xf32>
    %102 = arith.addf %98, %101 : vector<336x128xf32>
    %103 = arith.addf %84, %102 : vector<336x128xf32>
    %104 = arith.truncf %103 : vector<336x128xf32> to vector<336x128xbf16>
    %c5 = arith.constant 5 : index
    %c0_78 = arith.constant 0 : index
    %c0_79 = arith.constant 0 : index
    %105 = vector.load %arg5[%c5, %c0_78, %c0_79] : memref<6x128x128xbf16, #tpu.memory_space<vmem>>, vector<1x128x128xbf16>
    %106 = vector.shape_cast %105 : vector<1x128x128xbf16> to vector<128x128xbf16>
    %cst_80 = arith.constant dense<0.000000e+00> : vector<336x128xf32>
    %107 = tpu.matmul %104, %106, %cst_80 {dimension_numbers = #tpu.dot_dimension_numbers<[1], [0], [0], [1], [0, 0, 1, 1], [], []>} : vector<336x128xbf16>, vector<128x128xbf16>, vector<336x128xf32> -> vector<336x128xf32>
    %c5_81 = arith.constant 5 : index
    %c0_82 = arith.constant 0 : index
    %c0_83 = arith.constant 0 : index
    %108 = vector.load %arg6[%c5_81, %c0_82, %c0_83] : memref<6x1x128xf32, #tpu.memory_space<vmem>>, vector<1x1x128xf32>
    %109 = vector.shape_cast %108 : vector<1x1x128xf32> to vector<1x128xf32>
    %110 = vector.broadcast %109 : vector<1x128xf32> to vector<336x128xf32>
    %111 = arith.addf %107, %110 : vector<336x128xf32>
    %cst_84 = arith.constant 0.000000e+00 : f32
    %112 = vector.broadcast %cst_84 : f32 to vector<336x128xf32>
    %113 = arith.maximumf %111, %112 : vector<336x128xf32>
    %114 = arith.truncf %113 : vector<336x128xf32> to vector<336x128xbf16>
    %c5_85 = arith.constant 5 : index
    %c0_86 = arith.constant 0 : index
    %c0_87 = arith.constant 0 : index
    %115 = vector.load %arg7[%c5_85, %c0_86, %c0_87] : memref<6x128x128xbf16, #tpu.memory_space<vmem>>, vector<1x128x128xbf16>
    %116 = vector.shape_cast %115 : vector<1x128x128xbf16> to vector<128x128xbf16>
    %cst_88 = arith.constant dense<0.000000e+00> : vector<336x128xf32>
    %117 = tpu.matmul %114, %116, %cst_88 {dimension_numbers = #tpu.dot_dimension_numbers<[1], [0], [0], [1], [0, 0, 1, 1], [], []>} : vector<336x128xbf16>, vector<128x128xbf16>, vector<336x128xf32> -> vector<336x128xf32>
    %c5_89 = arith.constant 5 : index
    %c0_90 = arith.constant 0 : index
    %c0_91 = arith.constant 0 : index
    %118 = vector.load %arg8[%c5_89, %c0_90, %c0_91] : memref<6x1x128xf32, #tpu.memory_space<vmem>>, vector<1x1x128xf32>
    %119 = vector.shape_cast %118 : vector<1x1x128xf32> to vector<1x128xf32>
    %120 = vector.broadcast %119 : vector<1x128xf32> to vector<336x128xf32>
    %121 = arith.addf %117, %120 : vector<336x128xf32>
    %122 = arith.addf %103, %121 : vector<336x128xf32>
    %123 = arith.truncf %122 : vector<336x128xf32> to vector<336x128xbf16>
    %c0_92 = arith.constant 0 : index
    %c0_93 = arith.constant 0 : index
    %124 = vector.load %arg9[%c0_92, %c0_93] : memref<128x128xbf16, #tpu.memory_space<vmem>>, vector<128x128xbf16>
    %cst_94 = arith.constant dense<0.000000e+00> : vector<336x128xf32>
    %125 = tpu.matmul %123, %124, %cst_94 {dimension_numbers = #tpu.dot_dimension_numbers<[1], [0], [0], [1], [0, 0, 1, 1], [], []>} : vector<336x128xbf16>, vector<128x128xbf16>, vector<336x128xf32> -> vector<336x128xf32>
    %c0_95 = arith.constant 0 : index
    %c0_96 = arith.constant 0 : index
    %126 = vector.load %arg10[%c0_95, %c0_96] : memref<1x128xf32, #tpu.memory_space<vmem>>, vector<1x128xf32>
    %127 = vector.broadcast %126 : vector<1x128xf32> to vector<336x128xf32>
    %128 = arith.addf %125, %127 : vector<336x128xf32>
    %c0_97 = arith.constant 0 : index
    %c0_98 = arith.constant 0 : index
    %129 = vector.load %arg11[%c0_97, %c0_98] : memref<336x128xf32, #tpu.memory_space<vmem>>, vector<336x128xf32>
    tpu.vector_store %arg11[%c0_97, %c0_98], %128 {strides = array<i32>} : memref<336x128xf32, #tpu.memory_space<vmem>>, vector<336x128xf32>,
    return
  }
  func.func @transform_0(%arg0: i32) -> (i32, i32) {
    %c0_i32 = arith.constant 0 : i32
    %c0_i32_0 = arith.constant 0 : i32
    return %arg0, %c0_i32 : i32, i32
  }
  func.func @transform_1(%arg0: i32) -> (i32, i32) {
    %c0_i32 = arith.constant 0 : i32
    %c0_i32_0 = arith.constant 0 : i32
    return %arg0, %c0_i32 : i32, i32
  }
  func.func @transform_2(%arg0: i32) -> (i32, i32) {
    %c0_i32 = arith.constant 0 : i32
    %c0_i32_0 = arith.constant 0 : i32
    %c0_i32_1 = arith.constant 0 : i32
    return %c0_i32, %c0_i32_0 : i32, i32
  }
  func.func @transform_3(%arg0: i32) -> (i32, i32) {
    %c0_i32 = arith.constant 0 : i32
    %c0_i32_0 = arith.constant 0 : i32
    %c0_i32_1 = arith.constant 0 : i32
    return %c0_i32, %c0_i32_0 : i32, i32
  }
  func.func @transform_4(%arg0: i32) -> (i32, i32, i32) {
    %c0_i32 = arith.constant 0 : i32
    %c0_i32_0 = arith.constant 0 : i32
    %c0_i32_1 = arith.constant 0 : i32
    %c0_i32_2 = arith.constant 0 : i32
    return %c0_i32, %c0_i32_0, %c0_i32_1 : i32, i32, i32
  }
  func.func @transform_5(%arg0: i32) -> (i32, i32, i32) {
    %c0_i32 = arith.constant 0 : i32
    %c0_i32_0 = arith.constant 0 : i32
    %c0_i32_1 = arith.constant 0 : i32
    %c0_i32_2 = arith.constant 0 : i32
    return %c0_i32, %c0_i32_0, %c0_i32_1 : i32, i32, i32
  }
  func.func @transform_6(%arg0: i32) -> (i32, i32, i32) {
    %c0_i32 = arith.constant 0 : i32
    %c0_i32_0 = arith.constant 0 : i32
    %c0_i32_1 = arith.constant 0 : i32
    %c0_i32_2 = arith.constant 0 : i32
    return %c0_i32, %c0_i32_0, %c0_i32_1 : i32, i32, i32
  }
  func.func @transform_7(%arg0: i32) -> (i32, i32, i32) {
    %c0_i32 = arith.constant 0 : i32
    %c0_i32_0 = arith.constant 0 : i32
    %c0_i32_1 = arith.constant 0 : i32
    %c0_i32_2 = arith.constant 0 : i32
    return %c0_i32, %c0_i32_0, %c0_i32_1 : i32, i32, i32
  }
  func.func @transform_8(%arg0: i32) -> (i32, i32) {
    %c0_i32 = arith.constant 0 : i32
    %c0_i32_0 = arith.constant 0 : i32
    %c0_i32_1 = arith.constant 0 : i32
    return %c0_i32, %c0_i32_0 : i32, i32
  }
  func.func @transform_9(%arg0: i32) -> (i32, i32) {
    %c0_i32 = arith.constant 0 : i32
    %c0_i32_0 = arith.constant 0 : i32
    %c0_i32_1 = arith.constant 0 : i32
    return %c0_i32, %c0_i32_0 : i32, i32
  }
  func.func @transform_10(%arg0: i32) -> (i32, i32) {
    %c0_i32 = arith.constant 0 : i32
    %c0_i32_0 = arith.constant 0 : i32
    return %arg0, %c0_i32 : i32, i32
  }
}

</mosaic_0001>

<llo_original>
// kernel: stid_dsc_forward.1
$region0: #{stid_dsc_forward.1}
  #allocation0 [shape = 'u32[]', space=smem, size = 0x4, offset = 0x4, fixed_abs, tag = 'smem constant byte address 0x4 - core index']
  #allocation1 [shape = 'u32[144,128]{1,0:T(1,128)}', space=vmem, size = 0x12000, scoped, tag = 'internal scratch']
  %s0 = inlined_call_operand.vmem [shape: bf16[672,512], index: 0, kind: input, shape index: {}]
  %s1 = inlined_call_operand.vmem [shape: bf16[672,128], index: 1, kind: input, shape index: {}]
  %s2 = inlined_call_operand.vmem [shape: bf16[512,128], index: 2, kind: input, shape index: {}]
  %s3 = inlined_call_operand.vmem [shape: f32[1,128], index: 3, kind: input, shape index: {}]
  %s4 = inlined_call_operand.vmem [shape: bf16[6,128,128], index: 4, kind: input, shape index: {}]
  %s5 = inlined_call_operand.vmem [shape: f32[6,1,128], index: 5, kind: input, shape index: {}]
  %s6 = inlined_call_operand.vmem [shape: bf16[6,128,128], index: 6, kind: input, shape index: {}]
  %s7 = inlined_call_operand.vmem [shape: f32[6,1,128], index: 7, kind: input, shape index: {}]
  %s8 = inlined_call_operand.vmem [shape: bf16[128,128], index: 8, kind: input, shape index: {}]
  %s9 = inlined_call_operand.vmem [shape: f32[1,128], index: 9, kind: input, shape index: {}]
  %s10 = inlined_call_operand.vmem [shape: f32[672,128], index: 10, kind: output, shape index: {}]
  %s11 = sld [smem:[#allocation0]]
  $region73: #{stid_dsc_forward.1} parent=0
    _
  %s13 = ssub.s32 1, %s11
  %s14 = scalar_select 0, %s13, %s11
  loop: start=0, step=1, limit=4
  $region2: #{stid_dsc_forward.1} parent=0 // loop_pre_header
    _
  $region3: #{stid_dsc_forward.1} parent=0 // loop_header
    %s16 = sphi 0, %s20
    %p17 = scmp.ge.s32.totalorder %s16, 4
    %s26 = sphi 0, %s28
    %s29 = sphi 0, %s26
    %s30 = sphi 0, %s29
    %s46 = sphi 0, %s30
    %s52 = sphi 0, %s54
    %s55 = sphi 0, %s52
    %s56 = sphi 0, %s55
    %s72 = sphi 0, %s56
    %s76 = sphi 0, %s76
    %s78 = sphi 0, %s76
    %s79 = sphi 0, %s78
    %s93 = sphi 0, %s79
    %s97 = sphi 0, %s97
    %s99 = sphi 0, %s97
    %s100 = sphi 0, %s99
    %s114 = sphi 0, %s100
    %s118 = sphi 0, %s118
    %s120 = sphi 0, %s118
    %s121 = sphi 0, %s120
    %s135 = sphi 0, %s121
    %s139 = sphi 0, %s139
    %s141 = sphi 0, %s139
    %s142 = sphi 0, %s141
    %s156 = sphi 0, %s142
    %s160 = sphi 0, %s160
    %s162 = sphi 0, %s160
    %s163 = sphi 0, %s162
    %s177 = sphi 0, %s163
    %s181 = sphi 0, %s181
    %s183 = sphi 0, %s181
    %s184 = sphi 0, %s183
    %s198 = sphi 0, %s184
    %s202 = sphi 0, %s202
    %s204 = sphi 0, %s202
    %s205 = sphi 0, %s204
    %s219 = sphi 0, %s205
    %s223 = sphi 0, %s223
    %s225 = sphi 0, %s223
    %s226 = sphi 0, %s225
    %s240 = sphi 0, %s226
    %s246 = sphi 0, %s248
    %s249 = sphi 0, %s246
    %s250 = sphi 0, %s249
    %s266 = sphi 0, %s250
  $region4: #{stid_dsc_forward.1} parent=0 // loop_header_branch
    %19 = sbr.rel (%p17) target = $region8
  $region5: #{stid_dsc_forward.1} parent=0 // loop_body
    %s21 = ssub.s32 %s16, 1
    %s22 = ssub.s32 %s16, 2
    %s23 = sadd.s32 %s16, 1
    %s24 = ssub.s32 %s16, %s23
    %p25 = scmp.eq.s32.totalorder %s24, 0
    %s27 = sadd.s32 %s26, 1
    %s28 = scalar_select %p25, %s26, %s27
    %p31 = pneg %p25
    %p32 = scmp.eq.s32.totalorder %s16, 1
    %p33 = por %p31, %p32
    %p34 = scmp.ne.s32.totalorder %s26, %s29
    %p35 = scmp.eq.s32.totalorder %s16, 0
    %p36 = por %p34, %p35
    %p37 = scmp.ne.s32.totalorder %s26, %s29
    %p38 = scmp.eq.s32.totalorder %s21, 1
    %p39 = por %p37, %p38
    %p40 = scmp.ne.s32.totalorder %s29, %s30
    %p41 = scmp.eq.s32.totalorder %s21, 0
    %p42 = por %p40, %p41
    %p43 = scmp.ne.s32.totalorder %s29, %s30
    %p44 = scmp.eq.s32.totalorder %s22, 1
    %p45 = por %p43, %p44
    %p47 = scmp.ne.s32.totalorder %s30, %s46
    %p48 = scmp.eq.s32.totalorder %s22, 0
    %p49 = por %p47, %p48
    %s50 = ssub.s32 %s16, %s23
    %p51 = scmp.eq.s32.totalorder %s50, 0
    %s53 = sadd.s32 %s52, 1
    %s54 = scalar_select %p51, %s52, %s53
    %p57 = pneg %p51
    %p58 = scmp.eq.s32.totalorder %s16, 1
    %p59 = por %p57, %p58
    %p60 = scmp.ne.s32.totalorder %s52, %s55
    %p61 = scmp.eq.s32.totalorder %s16, 0
    %p62 = por %p60, %p61
    %p63 = scmp.ne.s32.totalorder %s52, %s55
    %p64 = scmp.eq.s32.totalorder %s21, 1
    %p65 = por %p63, %p64
    %p66 = scmp.ne.s32.totalorder %s55, %s56
    %p67 = scmp.eq.s32.totalorder %s21, 0
    %p68 = por %p66, %p67
    %p69 = scmp.ne.s32.totalorder %s55, %s56
    %p70 = scmp.eq.s32.totalorder %s22, 1
    %p71 = por %p69, %p70
    %p73 = scmp.ne.s32.totalorder %s56, %s72
    %p74 = scmp.eq.s32.totalorder %s22, 0
    %p75 = por %p73, %p74
    %s77 = sadd.s32 %s76, 1
    %p80 = scmp.eq.s32.totalorder %s16, 1
    %p81 = scmp.ne.s32.totalorder %s76, %s78
    %p82 = scmp.eq.s32.totalorder %s16, 0
    %p83 = por %p81, %p82
    %p84 = scmp.ne.s32.totalorder %s76, %s78
    %p85 = scmp.eq.s32.totalorder %s21, 1
    %p86 = por %p84, %p85
    %p87 = scmp.ne.s32.totalorder %s78, %s79
    %p88 = scmp.eq.s32.totalorder %s21, 0
    %p89 = por %p87, %p88
    %p90 = scmp.ne.s32.totalorder %s78, %s79
    %p91 = scmp.eq.s32.totalorder %s22, 1
    %p92 = por %p90, %p91
    %p94 = scmp.ne.s32.totalorder %s79, %s93
    %p95 = scmp.eq.s32.totalorder %s22, 0
    %p96 = por %p94, %p95
    %s98 = sadd.s32 %s97, 1
    %p101 = scmp.eq.s32.totalorder %s16, 1
    %p102 = scmp.ne.s32.totalorder %s97, %s99
    %p103 = scmp.eq.s32.totalorder %s16, 0
    %p104 = por %p102, %p103
    %p105 = scmp.ne.s32.totalorder %s97, %s99
    %p106 = scmp.eq.s32.totalorder %s21, 1
    %p107 = por %p105, %p106
    %p108 = scmp.ne.s32.totalorder %s99, %s100
    %p109 = scmp.eq.s32.totalorder %s21, 0
    %p110 = por %p108, %p109
    %p111 = scmp.ne.s32.totalorder %s99, %s100
    %p112 = scmp.eq.s32.totalorder %s22, 1
    %p113 = por %p111, %p112
    %p115 = scmp.ne.s32.totalorder %s100, %s114
    %p116 = scmp.eq.s32.totalorder %s22, 0
    %p117 = por %p115, %p116
    %s119 = sadd.s32 %s118, 1
    %p122 = scmp.eq.s32.totalorder %s16, 1
    %p123 = scmp.ne.s32.totalorder %s118, %s120
    %p124 = scmp.eq.s32.totalorder %s16, 0
    %p125 = por %p123, %p124
    %p126 = scmp.ne.s32.totalorder %s118, %s120
    %p127 = scmp.eq.s32.totalorder %s21, 1
    %p128 = por %p126, %p127
    %p129 = scmp.ne.s32.totalorder %s120, %s121
    %p130 = scmp.eq.s32.totalorder %s21, 0
    %p131 = por %p129, %p130
    %p132 = scmp.ne.s32.totalorder %s120, %s121
    %p133 = scmp.eq.s32.totalorder %s22, 1
    %p134 = por %p132, %p133
    %p136 = scmp.ne.s32.totalorder %s121, %s135
    %p137 = scmp.eq.s32.totalorder %s22, 0
    %p138 = por %p136, %p137
    %s140 = sadd.s32 %s139, 1
    %p143 = scmp.eq.s32.totalorder %s16, 1
    %p144 = scmp.ne.s32.totalorder %s139, %s141
    %p145 = scmp.eq.s32.totalorder %s16, 0
    %p146 = por %p144, %p145
    %p147 = scmp.ne.s32.totalorder %s139, %s141
    %p148 = scmp.eq.s32.totalorder %s21, 1
    %p149 = por %p147, %p148
    %p150 = scmp.ne.s32.totalorder %s141, %s142
    %p151 = scmp.eq.s32.totalorder %s21, 0
    %p152 = por %p150, %p151
    %p153 = scmp.ne.s32.totalorder %s141, %s142
    %p154 = scmp.eq.s32.totalorder %s22, 1
    %p155 = por %p153, %p154
    %p157 = scmp.ne.s32.totalorder %s142, %s156
    %p158 = scmp.eq.s32.totalorder %s22, 0
    %p159 = por %p157, %p158
    %s161 = sadd.s32 %s160, 1
    %p164 = scmp.eq.s32.totalorder %s16, 1
    %p165 = scmp.ne.s32.totalorder %s160, %s162
    %p166 = scmp.eq.s32.totalorder %s16, 0
    %p167 = por %p165, %p166
    %p168 = scmp.ne.s32.totalorder %s160, %s162
    %p169 = scmp.eq.s32.totalorder %s21, 1
    %p170 = por %p168, %p169
    %p171 = scmp.ne.s32.totalorder %s162, %s163
    %p172 = scmp.eq.s32.totalorder %s21, 0
    %p173 = por %p171, %p172
    %p174 = scmp.ne.s32.totalorder %s162, %s163
    %p175 = scmp.eq.s32.totalorder %s22, 1
    %p176 = por %p174, %p175
    %p178 = scmp.ne.s32.totalorder %s163, %s177
    %p179 = scmp.eq.s32.totalorder %s22, 0
    %p180 = por %p178, %p179
    %s182 = sadd.s32 %s181, 1
    %p185 = scmp.eq.s32.totalorder %s16, 1
    %p186 = scmp.ne.s32.totalorder %s181, %s183
    %p187 = scmp.eq.s32.totalorder %s16, 0
    %p188 = por %p186, %p187
    %p189 = scmp.ne.s32.totalorder %s181, %s183
    %p190 = scmp.eq.s32.totalorder %s21, 1
    %p191 = por %p189, %p190
    %p192 = scmp.ne.s32.totalorder %s183, %s184
    %p193 = scmp.eq.s32.totalorder %s21, 0
    %p194 = por %p192, %p193
    %p195 = scmp.ne.s32.totalorder %s183, %s184
    %p196 = scmp.eq.s32.totalorder %s22, 1
    %p197 = por %p195, %p196
    %p199 = scmp.ne.s32.totalorder %s184, %s198
    %p200 = scmp.eq.s32.totalorder %s22, 0
    %p201 = por %p199, %p200
    %s203 = sadd.s32 %s202, 1
    %p206 = scmp.eq.s32.totalorder %s16, 1
    %p207 = scmp.ne.s32.totalorder %s202, %s204
    %p208 = scmp.eq.s32.totalorder %s16, 0
    %p209 = por %p207, %p208
    %p210 = scmp.ne.s32.totalorder %s202, %s204
    %p211 = scmp.eq.s32.totalorder %s21, 1
    %p212 = por %p210, %p211
    %p213 = scmp.ne.s32.totalorder %s204, %s205
    %p214 = scmp.eq.s32.totalorder %s21, 0
    %p215 = por %p213, %p214
    %p216 = scmp.ne.s32.totalorder %s204, %s205
    %p217 = scmp.eq.s32.totalorder %s22, 1
    %p218 = por %p216, %p217
    %p220 = scmp.ne.s32.totalorder %s205, %s219
    %p221 = scmp.eq.s32.totalorder %s22, 0
    %p222 = por %p220, %p221
    %s224 = sadd.s32 %s223, 1
    %p227 = scmp.eq.s32.totalorder %s16, 1
    %p228 = scmp.ne.s32.totalorder %s223, %s225
    %p229 = scmp.eq.s32.totalorder %s16, 0
    %p230 = por %p228, %p229
    %p231 = scmp.ne.s32.totalorder %s223, %s225
    %p232 = scmp.eq.s32.totalorder %s21, 1
    %p233 = por %p231, %p232
    %p234 = scmp.ne.s32.totalorder %s225, %s226
    %p235 = scmp.eq.s32.totalorder %s21, 0
    %p236 = por %p234, %p235
    %p237 = scmp.ne.s32.totalorder %s225, %s226
    %p238 = scmp.eq.s32.totalorder %s22, 1
    %p239 = por %p237, %p238
    %p241 = scmp.ne.s32.totalorder %s226, %s240
    %p242 = scmp.eq.s32.totalorder %s22, 0
    %p243 = por %p241, %p242
    %s244 = ssub.s32 %s16, %s23
    %p245 = scmp.eq.s32.totalorder %s244, 0
    %s247 = sadd.s32 %s246, 1
    %s248 = scalar_select %p245, %s246, %s247
    %p251 = pneg %p245
    %p252 = scmp.eq.s32.totalorder %s16, 1
    %p253 = por %p251, %p252
    %p254 = scmp.ne.s32.totalorder %s246, %s249
    %p255 = scmp.eq.s32.totalorder %s16, 0
    %p256 = por %p254, %p255
    %p257 = scmp.ne.s32.totalorder %s246, %s249
    %p258 = scmp.eq.s32.totalorder %s21, 1
    %p259 = por %p257, %p258
    %p260 = scmp.ne.s32.totalorder %s249, %s250
    %p261 = scmp.eq.s32.totalorder %s21, 0
    %p262 = por %p260, %p261
    %p263 = scmp.ne.s32.totalorder %s249, %s250
    %p264 = scmp.eq.s32.totalorder %s22, 1
    %p265 = por %p263, %p264
    %p267 = scmp.ne.s32.totalorder %s250, %s266
    %p268 = scmp.eq.s32.totalorder %s22, 0
    %p269 = por %p267, %p268
    %p270 = scmp.le.s32.totalorder 1, %s16
    %p271 = scmp.lt.s32.totalorder %s16, 3
    %p272 = pnand %p270, %p271
    %p273 = pneg %p272
    // Predicated region
    $region9: #{stid_dsc_forward.1} parent=5 // pred_check
      _
    $region10: #{stid_dsc_forward.1} parent=5 // pred_check_branch
      %275 = sbr.rel (%p272) target = $region12
    $region11: #{stid_dsc_forward.1} parent=5 // pred_region
      %s276 = ssub.s32 %s16, 1
      // Predicated region
      $region13: #{stid_dsc_forward.1} parent=11 // pred_check
        %p277 = pneg %p89
      $region14: #{stid_dsc_forward.1} parent=11 // pred_check_branch
        %279 = sbr.rel (%p277) target = $region16
      $region15: #{stid_dsc_forward.1} parent=11 // pred_region
        _
      $region16: #{stid_dsc_forward.1} parent=11 // pred_fallthru
        _
      // Predicated region
      $region17: #{stid_dsc_forward.1} parent=11 // pred_check
        %p280 = pneg %p110
      $region18: #{stid_dsc_forward.1} parent=11 // pred_check_branch
        %282 = sbr.rel (%p280) target = $region20
      $region19: #{stid_dsc_forward.1} parent=11 // pred_region
        _
      $region20: #{stid_dsc_forward.1} parent=11 // pred_fallthru
        _
      // Predicated region
      $region21: #{stid_dsc_forward.1} parent=11 // pred_check
        %p283 = pneg %p131
      $region22: #{stid_dsc_forward.1} parent=11 // pred_check_branch
        %285 = sbr.rel (%p283) target = $region24
      $region23: #{stid_dsc_forward.1} parent=11 // pred_region
        _
      $region24: #{stid_dsc_forward.1} parent=11 // pred_fallthru
        _
      // Predicated region
      $region25: #{stid_dsc_forward.1} parent=11 // pred_check
        %p286 = pneg %p152
      $region26: #{stid_dsc_forward.1} parent=11 // pred_check_branch
        %288 = sbr.rel (%p286) target = $region28
      $region27: #{stid_dsc_forward.1} parent=11 // pred_region
        _
      $region28: #{stid_dsc_forward.1} parent=11 // pred_fallthru
        _
      // Predicated region
      $region29: #{stid_dsc_forward.1} parent=11 // pred_check
        %p289 = pneg %p173
      $region30: #{stid_dsc_forward.1} parent=11 // pred_check_branch
        %291 = sbr.rel (%p289) target = $region32
      $region31: #{stid_dsc_forward.1} parent=11 // pred_region
        _
      $region32: #{stid_dsc_forward.1} parent=11 // pred_fallthru
        _
      // Predicated region
      $region33: #{stid_dsc_forward.1} parent=11 // pred_check
        %p292 = pneg %p194
      $region34: #{stid_dsc_forward.1} parent=11 // pred_check_branch
        %294 = sbr.rel (%p292) target = $region36
      $region35: #{stid_dsc_forward.1} parent=11 // pred_region
        _
      $region36: #{stid_dsc_forward.1} parent=11 // pred_fallthru
        _
      // Predicated region
      $region37: #{stid_dsc_forward.1} parent=11 // pred_check
        %p295 = pneg %p215
      $region38: #{stid_dsc_forward.1} parent=11 // pred_check_branch
        %297 = sbr.rel (%p295) target = $region40
      $region39: #{stid_dsc_forward.1} parent=11 // pred_region
        _
      $region40: #{stid_dsc_forward.1} parent=11 // pred_fallthru
        _
      // Predicated region
      $region41: #{stid_dsc_forward.1} parent=11 // pred_check
        %p298 = pneg %p236
      $region42: #{stid_dsc_forward.1} parent=11 // pred_check_branch
        %300 = sbr.rel (%p298) target = $region44
      $region43: #{stid_dsc_forward.1} parent=11 // pred_region
        _
      $region44: #{stid_dsc_forward.1} parent=11 // pred_fallthru
        _
    $region12: #{stid_dsc_forward.1} parent=5 // pred_fallthru
      _
    %p301 = scmp.lt.s32.totalorder %s16, 2
    // Predicated region
    $region45: #{stid_dsc_forward.1} parent=5 // pred_check
      %p302 = pneg %p301
    $region46: #{stid_dsc_forward.1} parent=5 // pred_check_branch
      %304 = sbr.rel (%p302) target = $region48
    $region47: #{stid_dsc_forward.1} parent=5 // pred_region
      // Predicated region
      $region49: #{stid_dsc_forward.1} parent=47 // pred_check
        %p305 = pneg %p36
      $region50: #{stid_dsc_forward.1} parent=47 // pred_check_branch
        %307 = sbr.rel (%p305) target = $region52
      $region51: #{stid_dsc_forward.1} parent=47 // pred_region
        %s308 = smul.u32 42, %s16
        %p309 = scmp.lt.s32.totalorder %s308, 83
        %s310 = scalar_select %p309, %s308, 83
        %s311 = smul.addr %s310, 4
        %s312 = smul.addr %s311, 4
        %s313 = scalar_lea.vmem %s0, %s312
        %s314 = smul.u32 42, %s16
      $region52: #{stid_dsc_forward.1} parent=47 // pred_fallthru
        _
      // Predicated region
      $region53: #{stid_dsc_forward.1} parent=47 // pred_check
        %p315 = pneg %p62
      $region54: #{stid_dsc_forward.1} parent=47 // pred_check_branch
        %317 = sbr.rel (%p315) target = $region56
      $region55: #{stid_dsc_forward.1} parent=47 // pred_region
        %s318 = smul.u32 42, %s16
        %p319 = scmp.lt.s32.totalorder %s318, 83
        %s320 = scalar_select %p319, %s318, 83
        %s321 = smul.addr %s320, 4
        %s322 = scalar_lea.vmem %s1, %s321
        %s323 = smul.u32 42, %s16
      $region56: #{stid_dsc_forward.1} parent=47 // pred_fallthru
        _
    $region48: #{stid_dsc_forward.1} parent=5 // pred_fallthru
      _
    %p324 = scmp.le.s32.totalorder 1, %s16
    %p325 = scmp.lt.s32.totalorder %s16, 3
    %p326 = pnand %p324, %p325
    %p327 = pneg %p326
    // Predicated region
    $region57: #{stid_dsc_forward.1} parent=5 // pred_check
      _
    $region58: #{stid_dsc_forward.1} parent=5 // pred_check_branch
      %329 = sbr.rel (%p326) target = $region60
    $region59: #{stid_dsc_forward.1} parent=5 // pred_region
      %s330 = ssub.s32 %s16, 1
      %s331 = smul.u32 42, %s21
      %p332 = scmp.lt.s32.totalorder %s331, 83
      %s333 = scalar_select %p332, %s331, 83
      %s334 = smul.addr %s333, 4
      %s335 = smul.addr %s334, 4
      %s336 = scalar_lea.vmem %s0, %s335
      %p337 = pneg %p42
      %p338 = pneg %p39
      %s339 = smul.u32 42, %s21
      %p340 = scmp.lt.s32.totalorder %s339, 83
      %s341 = scalar_select %p340, %s339, 83
      %s342 = smul.addr %s341, 4
      %s343 = scalar_lea.vmem %s1, %s342
      %p344 = pneg %p68
      %p345 = pneg %p65
      %p346 = pneg %p89
      %p347 = pneg %p86
      %p348 = pneg %p110
      %p349 = pneg %p107
      %p350 = pneg %p131
      %p351 = pneg %p128
      %p352 = pneg %p152
      %p353 = pneg %p149
      %p354 = pneg %p173
      %p355 = pneg %p170
      %p356 = pneg %p194
      %p357 = pneg %p191
      %p358 = pneg %p215
      %p359 = pneg %p212
      %p360 = pneg %p236
      %p361 = pneg %p233
      %p362 = pneg %p262
      %p363 = pneg %p259
      %s364 = smul.u32 42, %s21
      %p365 = scmp.lt.s32.totalorder %s364, 83
      %s366 = scalar_select %p365, %s364, 83
      %s367 = smul.addr %s366, 8
      %s368 = scalar_lea.vmem %s10, %s367
      %s369 = smul.u32 42, %s21
      %p370 = scmp.lt.s32.totalorder %s369, 83
      %s371 = scalar_select %p370, %s369, 83
      %s372 = smul.addr %s371, 4
      %s373 = smul.addr %s372, 4
      %s374 = scalar_lea.vmem %s0, %s373
      %s375 = smul.u32 42, %s21
      %s376 = smul.u32 42, %s21
      %p377 = scmp.lt.s32.totalorder %s376, 83
      %s378 = scalar_select %p377, %s376, 83
      %s379 = smul.addr %s378, 4
      %s380 = scalar_lea.vmem %s1, %s379
      %s381 = smul.u32 42, %s21
      %s382 = smul.u32 42, %s21
      %p383 = scmp.lt.s32.totalorder %s382, 83
      %s384 = scalar_select %p383, %s382, 83
      %s385 = smul.addr %s384, 8
      %s386 = scalar_lea.vmem %s10, %s385
      %s387 = smul.u32 42, %s21
      %v389 = vld [vmem:[%s374] sm:$0xff]
      %v390 = vld [vmem:[%s374 + $0x8] sm:$0xff]
      %v391 = vld [vmem:[%s374 + $0x10] sm:$0xff]
      %v392 = vld [vmem:[%s374 + $0x18] sm:$0xff]
      %v393 = vld [vmem:[%s374 + $0x20] sm:$0xff]
      %v394 = vld [vmem:[%s374 + $0x28] sm:$0xff]
      %v395 = vld [vmem:[%s374 + $0x30] sm:$0xff]
      %v396 = vld [vmem:[%s374 + $0x38] sm:$0xff]
      %v397 = vld [vmem:[%s374 + $0x40] sm:$0xff]
      %v398 = vld [vmem:[%s374 + $0x48] sm:$0xff]
      %v399 = vld [vmem:[%s374 + $0x50] sm:$0xff]
      %v400 = vld [vmem:[%s374 + $0x58] sm:$0xff]
      %v401 = vld [vmem:[%s374 + $0x60] sm:$0xff]
      %v402 = vld [vmem:[%s374 + $0x68] sm:$0xff]
      %v403 = vld [vmem:[%s374 + $0x70] sm:$0xff]
      %v404 = vld [vmem:[%s374 + $0x78] sm:$0xff]
      %v405 = vld [vmem:[%s374 + $0x80] sm:$0xff]
      %v406 = vld [vmem:[%s374 + $0x88] sm:$0xff]
      %v407 = vld [vmem:[%s374 + $0x90] sm:$0xff]
      %v408 = vld [vmem:[%s374 + $0x98] sm:$0xff]
      %v409 = vld [vmem:[%s374 + $0xa0] sm:$0xff]
      %v410 = vld [vmem:[%s374 + $0xa8] sm:$0xff]
      %v411 = vld [vmem:[%s374 + $0xb0] sm:$0xff]
      %v412 = vld [vmem:[%s374 + $0xb8] sm:$0xff]
      %v413 = vld [vmem:[%s374 + $0xc0] sm:$0xff]
      %v414 = vld [vmem:[%s374 + $0xc8] sm:$0xff]
      %v415 = vld [vmem:[%s374 + $0xd0] sm:$0xff]
      %v416 = vld [vmem:[%s374 + $0xd8] sm:$0xff]
      %v417 = vld [vmem:[%s374 + $0xe0] sm:$0xff]
      %v418 = vld [vmem:[%s374 + $0xe8] sm:$0xff]
      %v419 = vld [vmem:[%s374 + $0xf0] sm:$0xff]
      %v420 = vld [vmem:[%s374 + $0xf8] sm:$0xff]
      %v421 = vld [vmem:[%s374 + $0x100] sm:$0xff]
      %v422 = vld [vmem:[%s374 + $0x108] sm:$0xff]
      %v423 = vld [vmem:[%s374 + $0x110] sm:$0xff]
      %v424 = vld [vmem:[%s374 + $0x118] sm:$0xff]
      %v425 = vld [vmem:[%s374 + $0x120] sm:$0xff]
      %v426 = vld [vmem:[%s374 + $0x128] sm:$0xff]
      %v427 = vld [vmem:[%s374 + $0x130] sm:$0xff]
      %v428 = vld [vmem:[%s374 + $0x138] sm:$0xff]
      %v429 = vld [vmem:[%s374 + $0x140] sm:$0xff]
      %v430 = vld [vmem:[%s374 + $0x148] sm:$0xff]
      %v431 = vld [vmem:[%s374 + $0x150] sm:$0xff]
      %v432 = vld [vmem:[%s374 + $0x158] sm:$0xff]
      %v433 = vld [vmem:[%s374 + $0x160] sm:$0xff]
      %v434 = vld [vmem:[%s374 + $0x168] sm:$0xff]
      %v435 = vld [vmem:[%s374 + $0x170] sm:$0xff]
      %v436 = vld [vmem:[%s374 + $0x178] sm:$0xff]
      %v437 = vld [vmem:[%s374 + $0x180] sm:$0xff]
      %v438 = vld [vmem:[%s374 + $0x188] sm:$0xff]
      %v439 = vld [vmem:[%s374 + $0x190] sm:$0xff]
      %v440 = vld [vmem:[%s374 + $0x198] sm:$0xff]
      %v441 = vld [vmem:[%s374 + $0x1a0] sm:$0xff]
      %v442 = vld [vmem:[%s374 + $0x1a8] sm:$0xff]
      %v443 = vld [vmem:[%s374 + $0x1b0] sm:$0xff]
      %v444 = vld [vmem:[%s374 + $0x1b8] sm:$0xff]
      %v445 = vld [vmem:[%s374 + $0x1c0] sm:$0xff]
      %v446 = vld [vmem:[%s374 + $0x1c8] sm:$0xff]
      %v447 = vld [vmem:[%s374 + $0x1d0] sm:$0xff]
      %v448 = vld [vmem:[%s374 + $0x1d8] sm:$0xff]
      %v449 = vld [vmem:[%s374 + $0x1e0] sm:$0xff]
      %v450 = vld [vmem:[%s374 + $0x1e8] sm:$0xff]
      %v451 = vld [vmem:[%s374 + $0x1f0] sm:$0xff]
      %v452 = vld [vmem:[%s374 + $0x1f8] sm:$0xff]
      %v453 = vld [vmem:[%s374 + $0x200] sm:$0xff]
      %v454 = vld [vmem:[%s374 + $0x208] sm:$0xff]
      %v455 = vld [vmem:[%s374 + $0x210] sm:$0xff]
      %v456 = vld [vmem:[%s374 + $0x218] sm:$0xff]
      %v457 = vld [vmem:[%s374 + $0x220] sm:$0xff]
      %v458 = vld [vmem:[%s374 + $0x228] sm:$0xff]
      %v459 = vld [vmem:[%s374 + $0x230] sm:$0xff]
      %v460 = vld [vmem:[%s374 + $0x238] sm:$0xff]
      %v461 = vld [vmem:[%s374 + $0x240] sm:$0xff]
      %v462 = vld [vmem:[%s374 + $0x248] sm:$0xff]
      %v463 = vld [vmem:[%s374 + $0x250] sm:$0xff]
      %v464 = vld [vmem:[%s374 + $0x258] sm:$0xff]
      %v465 = vld [vmem:[%s374 + $0x260] sm:$0xff]
      %v466 = vld [vmem:[%s374 + $0x268] sm:$0xff]
      %v467 = vld [vmem:[%s374 + $0x270] sm:$0xff]
      %v468 = vld [vmem:[%s374 + $0x278] sm:$0xff]
      %v469 = vld [vmem:[%s374 + $0x280] sm:$0xff]
      %v470 = vld [vmem:[%s374 + $0x288] sm:$0xff]
      %v471 = vld [vmem:[%s374 + $0x290] sm:$0xff]
      %v472 = vld [vmem:[%s374 + $0x298] sm:$0xff]
      %v473 = vld [vmem:[%s2] sm:$0xf]
      %v474 = vld [vmem:[%s2 + $0x4] sm:$0xf]
      %v475 = vld [vmem:[%s2 + $0x8] sm:$0xf]
      %v476 = vld [vmem:[%s2 + $0xc] sm:$0xf]
      %v477 = vld [vmem:[%s2 + $0x10] sm:$0xf]
      %v478 = vld [vmem:[%s2 + $0x14] sm:$0xf]
      %v479 = vld [vmem:[%s2 + $0x18] sm:$0xf]
      %v480 = vld [vmem:[%s2 + $0x1c] sm:$0xf]
      %v481 = vld [vmem:[%s2 + $0x20] sm:$0xf]
      %v482 = vld [vmem:[%s2 + $0x24] sm:$0xf]
      %v483 = vld [vmem:[%s2 + $0x28] sm:$0xf]
      %v484 = vld [vmem:[%s2 + $0x2c] sm:$0xf]
      %v485 = vld [vmem:[%s2 + $0x30] sm:$0xf]
      %v486 = vld [vmem:[%s2 + $0x34] sm:$0xf]
      %v487 = vld [vmem:[%s2 + $0x38] sm:$0xf]
      %v488 = vld [vmem:[%s2 + $0x3c] sm:$0xf]
      %v489 = vld [vmem:[%s2 + $0x40] sm:$0xf]
      %v490 = vld [vmem:[%s2 + $0x44] sm:$0xf]
      %v491 = vld [vmem:[%s2 + $0x48] sm:$0xf]
      %v492 = vld [vmem:[%s2 + $0x4c] sm:$0xf]
      %v493 = vld [vmem:[%s2 + $0x50] sm:$0xf]
      %v494 = vld [vmem:[%s2 + $0x54] sm:$0xf]
      %v495 = vld [vmem:[%s2 + $0x58] sm:$0xf]
      %v496 = vld [vmem:[%s2 + $0x5c] sm:$0xf]
      %v497 = vld [vmem:[%s2 + $0x60] sm:$0xf]
      %v498 = vld [vmem:[%s2 + $0x64] sm:$0xf]
      %v499 = vld [vmem:[%s2 + $0x68] sm:$0xf]
      %v500 = vld [vmem:[%s2 + $0x6c] sm:$0xf]
      %v501 = vld [vmem:[%s2 + $0x70] sm:$0xf]
      %v502 = vld [vmem:[%s2 + $0x74] sm:$0xf]
      %v503 = vld [vmem:[%s2 + $0x78] sm:$0xf]
      %v504 = vld [vmem:[%s2 + $0x7c] sm:$0xf]
      %v505 = vld [vmem:[%s2 + $0x80] sm:$0xf]
      %v506 = vld [vmem:[%s2 + $0x84] sm:$0xf]
      %v507 = vld [vmem:[%s2 + $0x88] sm:$0xf]
      %v508 = vld [vmem:[%s2 + $0x8c] sm:$0xf]
      %v509 = vld [vmem:[%s2 + $0x90] sm:$0xf]
      %v510 = vld [vmem:[%s2 + $0x94] sm:$0xf]
      %v511 = vld [vmem:[%s2 + $0x98] sm:$0xf]
      %v512 = vld [vmem:[%s2 + $0x9c] sm:$0xf]
      %v513 = vld [vmem:[%s2 + $0xa0] sm:$0xf]
      %v514 = vld [vmem:[%s2 + $0xa4] sm:$0xf]
      %v515 = vld [vmem:[%s2 + $0xa8] sm:$0xf]
      %v516 = vld [vmem:[%s2 + $0xac] sm:$0xf]
      %v517 = vld [vmem:[%s2 + $0xb0] sm:$0xf]
      %v518 = vld [vmem:[%s2 + $0xb4] sm:$0xf]
      %v519 = vld [vmem:[%s2 + $0xb8] sm:$0xf]
      %v520 = vld [vmem:[%s2 + $0xbc] sm:$0xf]
      %v521 = vld [vmem:[%s2 + $0xc0] sm:$0xf]
      %v522 = vld [vmem:[%s2 + $0xc4] sm:$0xf]
      %v523 = vld [vmem:[%s2 + $0xc8] sm:$0xf]
      %v524 = vld [vmem:[%s2 + $0xcc] sm:$0xf]
      %v525 = vld [vmem:[%s2 + $0xd0] sm:$0xf]
      %v526 = vld [vmem:[%s2 + $0xd4] sm:$0xf]
      %v527 = vld [vmem:[%s2 + $0xd8] sm:$0xf]
      %v528 = vld [vmem:[%s2 + $0xdc] sm:$0xf]
      %v529 = vld [vmem:[%s2 + $0xe0] sm:$0xf]
      %v530 = vld [vmem:[%s2 + $0xe4] sm:$0xf]
      %v531 = vld [vmem:[%s2 + $0xe8] sm:$0xf]
      %v532 = vld [vmem:[%s2 + $0xec] sm:$0xf]
      %v533 = vld [vmem:[%s2 + $0xf0] sm:$0xf]
      %v534 = vld [vmem:[%s2 + $0xf4] sm:$0xf]
      %v535 = vld [vmem:[%s2 + $0xf8] sm:$0xf]
      %v536 = vld [vmem:[%s2 + $0xfc] sm:$0xf]
      %v537 = vld [vmem:[%s380] sm:$0xf]
      %v538 = vld [vmem:[%s380 + $0x4] sm:$0xf]
      %v539 = vld [vmem:[%s380 + $0x8] sm:$0xf]
      %v540 = vld [vmem:[%s380 + $0xc] sm:$0xf]
      %v541 = vld [vmem:[%s380 + $0x10] sm:$0xf]
      %v542 = vld [vmem:[%s380 + $0x14] sm:$0xf]
      %v543 = vld [vmem:[%s380 + $0x18] sm:$0xf]
      %v544 = vld [vmem:[%s380 + $0x1c] sm:$0xf]
      %v545 = vld [vmem:[%s380 + $0x20] sm:$0xf]
      %v546 = vld [vmem:[%s380 + $0x24] sm:$0xf]
      %v547 = vld [vmem:[%s380 + $0x28] sm:$0xf]
      %v548 = vld [vmem:[%s380 + $0x2c] sm:$0xf]
      %v549 = vld [vmem:[%s380 + $0x30] sm:$0xf]
      %v550 = vld [vmem:[%s380 + $0x34] sm:$0xf]
      %v551 = vld [vmem:[%s380 + $0x38] sm:$0xf]
      %v552 = vld [vmem:[%s380 + $0x3c] sm:$0xf]
      %v553 = vld [vmem:[%s380 + $0x40] sm:$0xf]
      %v554 = vld [vmem:[%s380 + $0x44] sm:$0xf]
      %v555 = vld [vmem:[%s380 + $0x48] sm:$0xf]
      %v556 = vld [vmem:[%s380 + $0x4c] sm:$0xf]
      %v557 = vld [vmem:[%s380 + $0x50] sm:$0xf]
      %v558 = vld [vmem:[%s380 + $0x54] sm:$0xf]
      %v559 = vld [vmem:[%s380 + $0x58] sm:$0xf]
      %v560 = vld [vmem:[%s380 + $0x5c] sm:$0xf]
      %v561 = vld [vmem:[%s380 + $0x60] sm:$0xf]
      %v562 = vld [vmem:[%s380 + $0x64] sm:$0xf]
      %v563 = vld [vmem:[%s380 + $0x68] sm:$0xf]
      %v564 = vld [vmem:[%s380 + $0x6c] sm:$0xf]
      %v565 = vld [vmem:[%s380 + $0x70] sm:$0xf]
      %v566 = vld [vmem:[%s380 + $0x74] sm:$0xf]
      %v567 = vld [vmem:[%s380 + $0x78] sm:$0xf]
      %v568 = vld [vmem:[%s380 + $0x7c] sm:$0xf]
      %v569 = vld [vmem:[%s380 + $0x80] sm:$0xf]
      %v570 = vld [vmem:[%s380 + $0x84] sm:$0xf]
      %v571 = vld [vmem:[%s380 + $0x88] sm:$0xf]
      %v572 = vld [vmem:[%s380 + $0x8c] sm:$0xf]
      %v573 = vld [vmem:[%s380 + $0x90] sm:$0xf]
      %v574 = vld [vmem:[%s380 + $0x94] sm:$0xf]
      %v575 = vld [vmem:[%s380 + $0x98] sm:$0xf]
      %v576 = vld [vmem:[%s380 + $0x9c] sm:$0xf]
      %v577 = vld [vmem:[%s380 + $0xa0] sm:$0xf]
      %v578 = vld [vmem:[%s380 + $0xa4] sm:$0xf]
      %v579 = vunpack.c.l.bf16 %v537
      %v580 = vunpack.c.l.bf16 %v538
      %v581 = vunpack.c.l.bf16 %v539
      %v582 = vunpack.c.l.bf16 %v540
      %v583 = vunpack.c.l.bf16 %v541
      %v584 = vunpack.c.l.bf16 %v542
      %v585 = vunpack.c.l.bf16 %v543
      %v586 = vunpack.c.l.bf16 %v544
      %v587 = vunpack.c.l.bf16 %v545
      %v588 = vunpack.c.l.bf16 %v546
      %v589 = vunpack.c.l.bf16 %v547
      %v590 = vunpack.c.l.bf16 %v548
      %v591 = vunpack.c.l.bf16 %v549
      %v592 = vunpack.c.l.bf16 %v550
      %v593 = vunpack.c.l.bf16 %v551
      %v594 = vunpack.c.l.bf16 %v552
      %v595 = vunpack.c.l.bf16 %v553
      %v596 = vunpack.c.l.bf16 %v554
      %v597 = vunpack.c.l.bf16 %v555
      %v598 = vunpack.c.l.bf16 %v556
      %v599 = vunpack.c.l.bf16 %v557
      %v600 = vunpack.c.l.bf16 %v558
      %v601 = vunpack.c.l.bf16 %v559
      %v602 = vunpack.c.l.bf16 %v560
      %v603 = vunpack.c.l.bf16 %v561
      %v604 = vunpack.c.l.bf16 %v562
      %v605 = vunpack.c.l.bf16 %v563
      %v606 = vunpack.c.l.bf16 %v564
      %v607 = vunpack.c.l.bf16 %v565
      %v608 = vunpack.c.l.bf16 %v566
      %v609 = vunpack.c.l.bf16 %v567
      %v610 = vunpack.c.l.bf16 %v568
      %v611 = vunpack.c.l.bf16 %v569
      %v612 = vunpack.c.l.bf16 %v570
      %v613 = vunpack.c.l.bf16 %v571
      %v614 = vunpack.c.l.bf16 %v572
      %v615 = vunpack.c.l.bf16 %v573
      %v616 = vunpack.c.l.bf16 %v574
      %v617 = vunpack.c.l.bf16 %v575
      %v618 = vunpack.c.l.bf16 %v576
      %v619 = vunpack.c.l.bf16 %v577
      %v620 = vunpack.c.l.bf16 %v578
      %v705 = vunpack.c.l.b16 %v389
      %v706 = vunpack.c.h.b16 %v389
      %v707 = vunpack.c.l.b16 %v390
      %v708 = vunpack.c.h.b16 %v390
      %v709 = vunpack.c.l.b16 %v391
      %v710 = vunpack.c.h.b16 %v391
      %v711 = vunpack.c.l.b16 %v392
      %v712 = vunpack.c.h.b16 %v392
      %v713 = vunpack.c.l.b16 %v393
      %v714 = vunpack.c.h.b16 %v393
      %v715 = vunpack.c.l.b16 %v394
      %v716 = vunpack.c.h.b16 %v394
      %v717 = vunpack.c.l.b16 %v395
      %v718 = vunpack.c.h.b16 %v395
      %v719 = vunpack.c.l.b16 %v396
      %v720 = vunpack.c.h.b16 %v396
      %v721 = vunpack.c.l.b16 %v397
      %v722 = vunpack.c.h.b16 %v397
      %v723 = vunpack.c.l.b16 %v398
      %v724 = vunpack.c.h.b16 %v398
      %v725 = vunpack.c.l.b16 %v399
      %v726 = vunpack.c.h.b16 %v399
      %v727 = vunpack.c.l.b16 %v400
      %v728 = vunpack.c.h.b16 %v400
      %v729 = vunpack.c.l.b16 %v401
      %v730 = vunpack.c.h.b16 %v401
      %v731 = vunpack.c.l.b16 %v402
      %v732 = vunpack.c.h.b16 %v402
      %v733 = vunpack.c.l.b16 %v403
      %v734 = vunpack.c.h.b16 %v403
      %v735 = vunpack.c.l.b16 %v404
      %v736 = vunpack.c.h.b16 %v404
      %v737 = vunpack.c.l.b16 %v405
      %v738 = vunpack.c.h.b16 %v405
      %v739 = vunpack.c.l.b16 %v406
      %v740 = vunpack.c.h.b16 %v406
      %v741 = vunpack.c.l.b16 %v407
      %v742 = vunpack.c.h.b16 %v407
      %v743 = vunpack.c.l.b16 %v408
      %v744 = vunpack.c.h.b16 %v408
      %v745 = vunpack.c.l.b16 %v409
      %v746 = vunpack.c.h.b16 %v409
      %v747 = vunpack.c.l.b16 %v410
      %v748 = vunpack.c.h.b16 %v410
      %v749 = vunpack.c.l.b16 %v411
      %v750 = vunpack.c.h.b16 %v411
      %v751 = vunpack.c.l.b16 %v412
      %v752 = vunpack.c.h.b16 %v412
      %v753 = vunpack.c.l.b16 %v413
      %v754 = vunpack.c.h.b16 %v413
      %v755 = vunpack.c.l.b16 %v414
      %v756 = vunpack.c.h.b16 %v414
      %v757 = vunpack.c.l.b16 %v415
      %v758 = vunpack.c.h.b16 %v415
      %v759 = vunpack.c.l.b16 %v416
      %v760 = vunpack.c.h.b16 %v416
      %v761 = vunpack.c.l.b16 %v417
      %v762 = vunpack.c.h.b16 %v417
      %v763 = vunpack.c.l.b16 %v418
      %v764 = vunpack.c.h.b16 %v418
      %v765 = vunpack.c.l.b16 %v419
      %v766 = vunpack.c.h.b16 %v419
      %v767 = vunpack.c.l.b16 %v420
      %v768 = vunpack.c.h.b16 %v420
      %v769 = vunpack.c.l.b16 %v421
      %v770 = vunpack.c.h.b16 %v421
      %v771 = vunpack.c.l.b16 %v422
      %v772 = vunpack.c.h.b16 %v422
      %v773 = vunpack.c.l.b16 %v423
      %v774 = vunpack.c.h.b16 %v423
      %v775 = vunpack.c.l.b16 %v424
      %v776 = vunpack.c.h.b16 %v424
      %v777 = vunpack.c.l.b16 %v425
      %v778 = vunpack.c.h.b16 %v425
      %v779 = vunpack.c.l.b16 %v426
      %v780 = vunpack.c.h.b16 %v426
      %v781 = vunpack.c.l.b16 %v427
      %v782 = vunpack.c.h.b16 %v427
      %v783 = vunpack.c.l.b16 %v428
      %v784 = vunpack.c.h.b16 %v428
      %v785 = vunpack.c.l.b16 %v429
      %v786 = vunpack.c.h.b16 %v429
      %v787 = vunpack.c.l.b16 %v430
      %v788 = vunpack.c.h.b16 %v430
      %v789 = vunpack.c.l.b16 %v431
      %v790 = vunpack.c.h.b16 %v431
      %v791 = vunpack.c.l.b16 %v432
      %v792 = vunpack.c.h.b16 %v432
      %v793 = vunpack.c.l.b16 %v433
      %v794 = vunpack.c.h.b16 %v433
      %v795 = vunpack.c.l.b16 %v434
      %v796 = vunpack.c.h.b16 %v434
      %v797 = vunpack.c.l.b16 %v435
      %v798 = vunpack.c.h.b16 %v435
      %v799 = vunpack.c.l.b16 %v436
      %v800 = vunpack.c.h.b16 %v436
      %v801 = vunpack.c.l.b16 %v437
      %v802 = vunpack.c.h.b16 %v437
      %v803 = vunpack.c.l.b16 %v438
      %v804 = vunpack.c.h.b16 %v438
      %v805 = vunpack.c.l.b16 %v439
      %v806 = vunpack.c.h.b16 %v439
      %v807 = vunpack.c.l.b16 %v440
      %v808 = vunpack.c.h.b16 %v440
      %v809 = vunpack.c.l.b16 %v441
      %v810 = vunpack.c.h.b16 %v441
      %v811 = vunpack.c.l.b16 %v442
      %v812 = vunpack.c.h.b16 %v442
      %v813 = vunpack.c.l.b16 %v443
      %v814 = vunpack.c.h.b16 %v443
      %v815 = vunpack.c.l.b16 %v444
      %v816 = vunpack.c.h.b16 %v444
      %v817 = vunpack.c.l.b16 %v445
      %v818 = vunpack.c.h.b16 %v445
      %v819 = vunpack.c.l.b16 %v446
      %v820 = vunpack.c.h.b16 %v446
      %v821 = vunpack.c.l.b16 %v447
      %v822 = vunpack.c.h.b16 %v447
      %v823 = vunpack.c.l.b16 %v448
      %v824 = vunpack.c.h.b16 %v448
      %v825 = vunpack.c.l.b16 %v449
      %v826 = vunpack.c.h.b16 %v449
      %v827 = vunpack.c.l.b16 %v450
      %v828 = vunpack.c.h.b16 %v450
      %v829 = vunpack.c.l.b16 %v451
      %v830 = vunpack.c.h.b16 %v451
      %v831 = vunpack.c.l.b16 %v452
      %v832 = vunpack.c.h.b16 %v452
      %v833 = vunpack.c.l.b16 %v453
      %v834 = vunpack.c.h.b16 %v453
      %v835 = vunpack.c.l.b16 %v454
      %v836 = vunpack.c.h.b16 %v454
      %v837 = vunpack.c.l.b16 %v455
      %v838 = vunpack.c.h.b16 %v455
      %v839 = vunpack.c.l.b16 %v456
      %v840 = vunpack.c.h.b16 %v456
      %v841 = vunpack.c.l.b16 %v457
      %v842 = vunpack.c.h.b16 %v457
      %v843 = vunpack.c.l.b16 %v458
      %v844 = vunpack.c.h.b16 %v458
      %v845 = vunpack.c.l.b16 %v459
      %v846 = vunpack.c.h.b16 %v459
      %v847 = vunpack.c.l.b16 %v460
      %v848 = vunpack.c.h.b16 %v460
      %v849 = vunpack.c.l.b16 %v461
      %v850 = vunpack.c.h.b16 %v461
      %v851 = vunpack.c.l.b16 %v462
      %v852 = vunpack.c.h.b16 %v462
      %v853 = vunpack.c.l.b16 %v463
      %v854 = vunpack.c.h.b16 %v463
      %v855 = vunpack.c.l.b16 %v464
      %v856 = vunpack.c.h.b16 %v464
      %v857 = vunpack.c.l.b16 %v465
      %v858 = vunpack.c.h.b16 %v465
      %v859 = vunpack.c.l.b16 %v466
      %v860 = vunpack.c.h.b16 %v466
      %v861 = vunpack.c.l.b16 %v467
      %v862 = vunpack.c.h.b16 %v467
      %v863 = vunpack.c.l.b16 %v468
      %v864 = vunpack.c.h.b16 %v468
      %v865 = vunpack.c.l.b16 %v469
      %v866 = vunpack.c.h.b16 %v469
      %v867 = vunpack.c.l.b16 %v470
      %v868 = vunpack.c.h.b16 %v470
      %v869 = vunpack.c.l.b16 %v471
      %v870 = vunpack.c.h.b16 %v471
      %v871 = vunpack.c.l.b16 %v472
      %v872 = vunpack.c.h.b16 %v472
      %v873 = vpack.c.b16 %v709, %v705
      %v874 = vpack.c.b16 %v710, %v706
      %v875 = vpack.c.b16 %v711, %v707
      %v876 = vpack.c.b16 %v712, %v708
      %v877 = vpack.c.b16 %v717, %v713
      %v878 = vpack.c.b16 %v718, %v714
      %v879 = vpack.c.b16 %v719, %v715
      %v880 = vpack.c.b16 %v720, %v716
      %v881 = vpack.c.b16 %v725, %v721
      %v882 = vpack.c.b16 %v726, %v722
      %v883 = vpack.c.b16 %v727, %v723
      %v884 = vpack.c.b16 %v728, %v724
      %v885 = vpack.c.b16 %v733, %v729
      %v886 = vpack.c.b16 %v734, %v730
      %v887 = vpack.c.b16 %v735, %v731
      %v888 = vpack.c.b16 %v736, %v732
      %v889 = vpack.c.b16 %v741, %v737
      %v890 = vpack.c.b16 %v742, %v738
      %v891 = vpack.c.b16 %v743, %v739
      %v892 = vpack.c.b16 %v744, %v740
      %v893 = vpack.c.b16 %v749, %v745
      %v894 = vpack.c.b16 %v750, %v746
      %v895 = vpack.c.b16 %v751, %v747
      %v896 = vpack.c.b16 %v752, %v748
      %v897 = vpack.c.b16 %v757, %v753
      %v898 = vpack.c.b16 %v758, %v754
      %v899 = vpack.c.b16 %v759, %v755
      %v900 = vpack.c.b16 %v760, %v756
      %v901 = vpack.c.b16 %v765, %v761
      %v902 = vpack.c.b16 %v766, %v762
      %v903 = vpack.c.b16 %v767, %v763
      %v904 = vpack.c.b16 %v768, %v764
      %v905 = vpack.c.b16 %v773, %v769
      %v906 = vpack.c.b16 %v774, %v770
      %v907 = vpack.c.b16 %v775, %v771
      %v908 = vpack.c.b16 %v776, %v772
      %v909 = vpack.c.b16 %v781, %v777
      %v910 = vpack.c.b16 %v782, %v778
      %v911 = vpack.c.b16 %v783, %v779
      %v912 = vpack.c.b16 %v784, %v780
      %v913 = vpack.c.b16 %v789, %v785
      %v914 = vpack.c.b16 %v790, %v786
      %v915 = vpack.c.b16 %v791, %v787
      %v916 = vpack.c.b16 %v792, %v788
      %v917 = vpack.c.b16 %v797, %v793
      %v918 = vpack.c.b16 %v798, %v794
      %v919 = vpack.c.b16 %v799, %v795
      %v920 = vpack.c.b16 %v800, %v796
      %v921 = vpack.c.b16 %v805, %v801
      %v922 = vpack.c.b16 %v806, %v802
      %v923 = vpack.c.b16 %v807, %v803
      %v924 = vpack.c.b16 %v808, %v804
      %v925 = vpack.c.b16 %v813, %v809
      %v926 = vpack.c.b16 %v814, %v810
      %v927 = vpack.c.b16 %v815, %v811
      %v928 = vpack.c.b16 %v816, %v812
      %v929 = vpack.c.b16 %v821, %v817
      %v930 = vpack.c.b16 %v822, %v818
      %v931 = vpack.c.b16 %v823, %v819
      %v932 = vpack.c.b16 %v824, %v820
      %v933 = vpack.c.b16 %v829, %v825
      %v934 = vpack.c.b16 %v830, %v826
      %v935 = vpack.c.b16 %v831, %v827
      %v936 = vpack.c.b16 %v832, %v828
      %v937 = vpack.c.b16 %v837, %v833
      %v938 = vpack.c.b16 %v838, %v834
      %v939 = vpack.c.b16 %v839, %v835
      %v940 = vpack.c.b16 %v840, %v836
      %v941 = vpack.c.b16 %v845, %v841
      %v942 = vpack.c.b16 %v846, %v842
      %v943 = vpack.c.b16 %v847, %v843
      %v944 = vpack.c.b16 %v848, %v844
      %v945 = vpack.c.b16 %v853, %v849
      %v946 = vpack.c.b16 %v854, %v850
      %v947 = vpack.c.b16 %v855, %v851
      %v948 = vpack.c.b16 %v856, %v852
      %v949 = vpack.c.b16 %v861, %v857
      %v950 = vpack.c.b16 %v862, %v858
      %v951 = vpack.c.b16 %v863, %v859
      %v952 = vpack.c.b16 %v864, %v860
      %v953 = vpack.c.b16 %v869, %v865
      %v954 = vpack.c.b16 %v870, %v866
      %v955 = vpack.c.b16 %v871, %v867
      %v956 = vpack.c.b16 %v872, %v868
      %v1105 = vunpack.c.l.b16 %v473
      %v1106 = vunpack.c.l.b16 %v474
      %v1107 = vunpack.c.l.b16 %v475
      %v1108 = vunpack.c.l.b16 %v476
      %v1109 = vunpack.c.l.b16 %v477
      %v1110 = vunpack.c.l.b16 %v478
      %v1111 = vunpack.c.l.b16 %v479
      %v1112 = vunpack.c.l.b16 %v480
      %v1113 = vunpack.c.l.b16 %v481
      %v1114 = vunpack.c.l.b16 %v482
      %v1115 = vunpack.c.l.b16 %v483
      %v1116 = vunpack.c.l.b16 %v484
      %v1117 = vunpack.c.l.b16 %v485
      %v1118 = vunpack.c.l.b16 %v486
      %v1119 = vunpack.c.l.b16 %v487
      %v1120 = vunpack.c.l.b16 %v488
      %v1121 = vunpack.c.l.b16 %v489
      %v1122 = vunpack.c.l.b16 %v490
      %v1123 = vunpack.c.l.b16 %v491
      %v1124 = vunpack.c.l.b16 %v492
      %v1125 = vunpack.c.l.b16 %v493
      %v1126 = vunpack.c.l.b16 %v494
      %v1127 = vunpack.c.l.b16 %v495
      %v1128 = vunpack.c.l.b16 %v496
      %v1129 = vunpack.c.l.b16 %v497
      %v1130 = vunpack.c.l.b16 %v498
      %v1131 = vunpack.c.l.b16 %v499
      %v1132 = vunpack.c.l.b16 %v500
      %v1133 = vunpack.c.l.b16 %v501
      %v1134 = vunpack.c.l.b16 %v502
      %v1135 = vunpack.c.l.b16 %v503
      %v1136 = vunpack.c.l.b16 %v504
      %v1137 = vunpack.c.l.b16 %v505
      %v1138 = vunpack.c.l.b16 %v506
      %v1139 = vunpack.c.l.b16 %v507
      %v1140 = vunpack.c.l.b16 %v508
      %v1141 = vunpack.c.l.b16 %v509
      %v1142 = vunpack.c.l.b16 %v510
      %v1143 = vunpack.c.l.b16 %v511
      %v1144 = vunpack.c.l.b16 %v512
      %v1145 = vunpack.c.l.b16 %v513
      %v1146 = vunpack.c.l.b16 %v514
      %v1147 = vunpack.c.l.b16 %v515
      %v1148 = vunpack.c.l.b16 %v516
      %v1149 = vunpack.c.l.b16 %v517
      %v1150 = vunpack.c.l.b16 %v518
      %v1151 = vunpack.c.l.b16 %v519
      %v1152 = vunpack.c.l.b16 %v520
      %v1153 = vunpack.c.l.b16 %v521
      %v1154 = vunpack.c.l.b16 %v522
      %v1155 = vunpack.c.l.b16 %v523
      %v1156 = vunpack.c.l.b16 %v524
      %v1157 = vunpack.c.l.b16 %v525
      %v1158 = vunpack.c.l.b16 %v526
      %v1159 = vunpack.c.l.b16 %v527
      %v1160 = vunpack.c.l.b16 %v528
      %v1161 = vunpack.c.l.b16 %v529
      %v1162 = vunpack.c.l.b16 %v530
      %v1163 = vunpack.c.l.b16 %v531
      %v1164 = vunpack.c.l.b16 %v532
      %v1165 = vunpack.c.l.b16 %v533
      %v1166 = vunpack.c.l.b16 %v534
      %v1167 = vunpack.c.l.b16 %v535
      %v1168 = vunpack.c.l.b16 %v536
      %v1169 = vpack.c.b16 %v1106, %v1105
      %v1170 = vpack.c.b16 %v1108, %v1107
      %v1171 = vpack.c.b16 %v1110, %v1109
      %v1172 = vpack.c.b16 %v1112, %v1111
      %v1173 = vpack.c.b16 %v1114, %v1113
      %v1174 = vpack.c.b16 %v1116, %v1115
      %v1175 = vpack.c.b16 %v1118, %v1117
      %v1176 = vpack.c.b16 %v1120, %v1119
      %v1177 = vpack.c.b16 %v1122, %v1121
      %v1178 = vpack.c.b16 %v1124, %v1123
      %v1179 = vpack.c.b16 %v1126, %v1125
      %v1180 = vpack.c.b16 %v1128, %v1127
      %v1181 = vpack.c.b16 %v1130, %v1129
      %v1182 = vpack.c.b16 %v1132, %v1131
      %v1183 = vpack.c.b16 %v1134, %v1133
      %v1184 = vpack.c.b16 %v1136, %v1135
      %v1185 = vpack.c.b16 %v1138, %v1137
      %v1186 = vpack.c.b16 %v1140, %v1139
      %v1187 = vpack.c.b16 %v1142, %v1141
      %v1188 = vpack.c.b16 %v1144, %v1143
      %v1189 = vpack.c.b16 %v1146, %v1145
      %v1190 = vpack.c.b16 %v1148, %v1147
      %v1191 = vpack.c.b16 %v1150, %v1149
      %v1192 = vpack.c.b16 %v1152, %v1151
      %v1193 = vpack.c.b16 %v1154, %v1153
      %v1194 = vpack.c.b16 %v1156, %v1155
      %v1195 = vpack.c.b16 %v1158, %v1157
      %v1196 = vpack.c.b16 %v1160, %v1159
      %v1197 = vpack.c.b16 %v1162, %v1161
      %v1198 = vpack.c.b16 %v1164, %v1163
      %v1199 = vpack.c.b16 %v1166, %v1165
      %v1200 = vpack.c.b16 %v1168, %v1167
      %1233 = vmatprep.subr.bf16.mxu0 0
      %1234 = vmatpush1.bf16.msra.mxu0 %v1169
      %1235 = vmatprep.subr.bf16.mxu0 0
      %1236 = vmatpush1.bf16.msra.mxu0 %v1170
      %1237 = vmatprep.subr.bf16.mxu0 0
      %1238 = vmatpush1.bf16.msra.mxu0 %v1171
      %1239 = vmatprep.subr.bf16.mxu0 0
      %1240 = vmatpush1.bf16.msra.mxu0 %v1172
      %1241 = vmatprep.subr.bf16.mxu0 0
      %1242 = vmatpush1.bf16.msra.mxu0 %v1173
      %1243 = vmatprep.subr.bf16.mxu0 0
      %1244 = vmatpush1.bf16.msra.mxu0 %v1174
      %1245 = vmatprep.subr.bf16.mxu0 0
      %1246 = vmatpush1.bf16.msra.mxu0 %v1175
      %1247 = vmatprep.subr.bf16.mxu0 0
      %1248 = vmatpush1.bf16.msra.mxu0 %v1176
      %1249 = vmatprep.subr.bf16.mxu0 0
      %1250 = vmatpush1.bf16.msra.mxu0 %v1177
      %1251 = vmatprep.subr.bf16.mxu0 0
      %1252 = vmatpush1.bf16.msra.mxu0 %v1178
      %1253 = vmatprep.subr.bf16.mxu0 0
      %1254 = vmatpush1.bf16.msra.mxu0 %v1179
      %1255 = vmatprep.subr.bf16.mxu0 0
      %1256 = vmatpush1.bf16.msra.mxu0 %v1180
      %1257 = vmatprep.subr.bf16.mxu0 0
      %1258 = vmatpush1.bf16.msra.mxu0 %v1181
      %1259 = vmatprep.subr.bf16.mxu0 0
      %1260 = vmatpush1.bf16.msra.mxu0 %v1182
      %1261 = vmatprep.subr.bf16.mxu0 0
      %1262 = vmatpush1.bf16.msra.mxu0 %v1183
      %1263 = vmatprep.subr.bf16.mxu0 0
      %1264 = vmatpush1.bf16.msra.mxu0 %v1184
      %1265 = vmatprep.mubr.bf16.mxu0 %v874
      %1266 = vmatmul.mubr.bf16.gmra.mrb[0].mxu0 %v873
      %v1267 = vpop.f32.mrb[0].mxu0
      %v1268 = vadd.f32 %v579, %v1267
      %v1269 = vpop.f32.mrb[0].mxu0
      %v1270 = vpop.f32.mrb[0].mxu0
      %v1271 = vadd.f32 %v580, %v1270
      %v1272 = vpop.f32.mrb[0].mxu0
      %1273 = vmatprep.mubr.bf16.mxu0 %v878
      %1274 = vmatmul.mubr.bf16.gmra.mrb[0].mxu0 %v877
      %v1275 = vpop.f32.mrb[0].mxu0
      %v1276 = vadd.f32 %v581, %v1275
      %v1277 = vpop.f32.mrb[0].mxu0
      %v1278 = vpop.f32.mrb[0].mxu0
      %v1279 = vadd.f32 %v582, %v1278
      %v1280 = vpop.f32.mrb[0].mxu0
      %1281 = vmatprep.mubr.bf16.mxu0 %v882
      %1282 = vmatmul.mubr.bf16.gmra.mrb[0].mxu0 %v881
      %v1283 = vpop.f32.mrb[0].mxu0
      %v1284 = vadd.f32 %v583, %v1283
      %v1285 = vpop.f32.mrb[0].mxu0
      %v1286 = vpop.f32.mrb[0].mxu0
      %v1287 = vadd.f32 %v584, %v1286
      %v1288 = vpop.f32.mrb[0].mxu0
      %1289 = vmatprep.mubr.bf16.mxu0 %v886
      %1290 = vmatmul.mubr.bf16.gmra.mrb[0].mxu0 %v885
      %v1291 = vpop.f32.mrb[0].mxu0
      %v1292 = vadd.f32 %v585, %v1291
      %v1293 = vpop.f32.mrb[0].mxu0
      %v1294 = vpop.f32.mrb[0].mxu0
      %v1295 = vadd.f32 %v586, %v1294
      %v1296 = vpop.f32.mrb[0].mxu0
      %1297 = vmatprep.mubr.bf16.mxu0 %v890
      %1298 = vmatmul.mubr.bf16.gmra.mrb[0].mxu0 %v889
      %v1299 = vpop.f32.mrb[0].mxu0
      %v1300 = vadd.f32 %v587, %v1299
      %v1301 = vpop.f32.mrb[0].mxu0
      %v1302 = vpop.f32.mrb[0].mxu0
      %v1303 = vadd.f32 %v588, %v1302
      %v1304 = vpop.f32.mrb[0].mxu0
      %1305 = vmatprep.mubr.bf16.mxu0 %v894
      %1306 = vmatmul.mubr.bf16.gmra.mrb[0].mxu0 %v893
      %v1307 = vpop.f32.mrb[0].mxu0
      %v1308 = vadd.f32 %v589, %v1307
      %v1309 = vpop.f32.mrb[0].mxu0
      %v1310 = vpop.f32.mrb[0].mxu0
      %v1311 = vadd.f32 %v590, %v1310
      %v1312 = vpop.f32.mrb[0].mxu0
      %1313 = vmatprep.mubr.bf16.mxu0 %v898
      %1314 = vmatmul.mubr.bf16.gmra.mrb[0].mxu0 %v897
      %v1315 = vpop.f32.mrb[0].mxu0
      %v1316 = vadd.f32 %v591, %v1315
      %v1317 = vpop.f32.mrb[0].mxu0
      %v1318 = vpop.f32.mrb[0].mxu0
      %v1319 = vadd.f32 %v592, %v1318
      %v1320 = vpop.f32.mrb[0].mxu0
      %1321 = vmatprep.mubr.bf16.mxu0 %v902
      %1322 = vmatmul.mubr.bf16.gmra.mrb[0].mxu0 %v901
      %v1323 = vpop.f32.mrb[0].mxu0
      %v1324 = vadd.f32 %v593, %v1323
      %v1325 = vpop.f32.mrb[0].mxu0
      %v1326 = vpop.f32.mrb[0].mxu0
      %v1327 = vadd.f32 %v594, %v1326
      %v1328 = vpop.f32.mrb[0].mxu0
      %1329 = vmatprep.mubr.bf16.mxu0 %v906
      %1330 = vmatmul.mubr.bf16.gmra.mrb[0].mxu0 %v905
      %v1331 = vpop.f32.mrb[0].mxu0
      %v1332 = vadd.f32 %v595, %v1331
      %v1333 = vpop.f32.mrb[0].mxu0
      %v1334 = vpop.f32.mrb[0].mxu0
      %v1335 = vadd.f32 %v596, %v1334
      %v1336 = vpop.f32.mrb[0].mxu0
      %1337 = vmatprep.mubr.bf16.mxu0 %v910
      %1338 = vmatmul.mubr.bf16.gmra.mrb[0].mxu0 %v909
      %v1339 = vpop.f32.mrb[0].mxu0
      %v1340 = vadd.f32 %v597, %v1339
      %v1341 = vpop.f32.mrb[0].mxu0
      %v1342 = vpop.f32.mrb[0].mxu0
      %v1343 = vadd.f32 %v598, %v1342
      %v1344 = vpop.f32.mrb[0].mxu0
      %1345 = vmatprep.mubr.bf16.mxu0 %v914
      %1346 = vmatmul.mubr.bf16.gmra.mrb[0].mxu0 %v913
      %v1347 = vpop.f32.mrb[0].mxu0
      %v1348 = vadd.f32 %v599, %v1347
      %v1349 = vpop.f32.mrb[0].mxu0
      %v1350 = vpop.f32.mrb[0].mxu0
      %v1351 = vadd.f32 %v600, %v1350
      %v1352 = vpop.f32.mrb[0].mxu0
      %1353 = vmatprep.mubr.bf16.mxu0 %v918
      %1354 = vmatmul.mubr.bf16.gmra.mrb[0].mxu0 %v917
      %v1355 = vpop.f32.mrb[0].mxu0
      %v1356 = vadd.f32 %v601, %v1355
      %v1357 = vpop.f32.mrb[0].mxu0
      %v1358 = vpop.f32.mrb[0].mxu0
      %v1359 = vadd.f32 %v602, %v1358
      %v1360 = vpop.f32.mrb[0].mxu0
      %1361 = vmatprep.mubr.bf16.mxu0 %v922
      %1362 = vmatmul.mubr.bf16.gmra.mrb[0].mxu0 %v921
      %v1363 = vpop.f32.mrb[0].mxu0
      %v1364 = vadd.f32 %v603, %v1363
      %v1365 = vpop.f32.mrb[0].mxu0
      %v1366 = vpop.f32.mrb[0].mxu0
      %v1367 = vadd.f32 %v604, %v1366
      %v1368 = vpop.f32.mrb[0].mxu0
      %1369 = vmatprep.mubr.bf16.mxu0 %v926
      %1370 = vmatmul.mubr.bf16.gmra.mrb[0].mxu0 %v925
      %v1371 = vpop.f32.mrb[0].mxu0
      %v1372 = vadd.f32 %v605, %v1371
      %v1373 = vpop.f32.mrb[0].mxu0
      %v1374 = vpop.f32.mrb[0].mxu0
      %v1375 = vadd.f32 %v606, %v1374
      %v1376 = vpop.f32.mrb[0].mxu0
      %1377 = vmatprep.mubr.bf16.mxu0 %v930
      %1378 = vmatmul.mubr.bf16.gmra.mrb[0].mxu0 %v929
      %v1379 = vpop.f32.mrb[0].mxu0
      %v1380 = vadd.f32 %v607, %v1379
      %v1381 = vpop.f32.mrb[0].mxu0
      %v1382 = vpop.f32.mrb[0].mxu0
      %v1383 = vadd.f32 %v608, %v1382
      %v1384 = vpop.f32.mrb[0].mxu0
      %1385 = vmatprep.mubr.bf16.mxu0 %v934
      %1386 = vmatmul.mubr.bf16.gmra.mrb[0].mxu0 %v933
      %v1387 = vpop.f32.mrb[0].mxu0
      %v1388 = vadd.f32 %v609, %v1387
      %v1389 = vpop.f32.mrb[0].mxu0
      %v1390 = vpop.f32.mrb[0].mxu0
      %v1391 = vadd.f32 %v610, %v1390
      %v1392 = vpop.f32.mrb[0].mxu0
      %1393 = vmatprep.mubr.bf16.mxu0 %v938
      %1394 = vmatmul.mubr.bf16.gmra.mrb[0].mxu0 %v937
      %v1395 = vpop.f32.mrb[0].mxu0
      %v1396 = vadd.f32 %v611, %v1395
      %v1397 = vpop.f32.mrb[0].mxu0
      %v1398 = vpop.f32.mrb[0].mxu0
      %v1399 = vadd.f32 %v612, %v1398
      %v1400 = vpop.f32.mrb[0].mxu0
      %1401 = vmatprep.mubr.bf16.mxu0 %v942
      %1402 = vmatmul.mubr.bf16.gmra.mrb[0].mxu0 %v941
      %v1403 = vpop.f32.mrb[0].mxu0
      %v1404 = vadd.f32 %v613, %v1403
      %v1405 = vpop.f32.mrb[0].mxu0
      %v1406 = vpop.f32.mrb[0].mxu0
      %v1407 = vadd.f32 %v614, %v1406
      %v1408 = vpop.f32.mrb[0].mxu0
      %1409 = vmatprep.mubr.bf16.mxu0 %v946
      %1410 = vmatmul.mubr.bf16.gmra.mrb[0].mxu0 %v945
      %v1411 = vpop.f32.mrb[0].mxu0
      %v1412 = vadd.f32 %v615, %v1411
      %v1413 = vpop.f32.mrb[0].mxu0
      %v1414 = vpop.f32.mrb[0].mxu0
      %v1415 = vadd.f32 %v616, %v1414
      %v1416 = vpop.f32.mrb[0].mxu0
      %1417 = vmatprep.mubr.bf16.mxu0 %v950
      %1418 = vmatmul.mubr.bf16.gmra.mrb[0].mxu0 %v949
      %v1419 = vpop.f32.mrb[0].mxu0
      %v1420 = vadd.f32 %v617, %v1419
      %v1421 = vpop.f32.mrb[0].mxu0
      %v1422 = vpop.f32.mrb[0].mxu0
      %v1423 = vadd.f32 %v618, %v1422
      %v1424 = vpop.f32.mrb[0].mxu0
      %1425 = vmatprep.mubr.bf16.mxu0 %v954
      %1426 = vmatmul.mubr.bf16.gmra.mrb[0].mxu0 %v953
      %v1427 = vpop.f32.mrb[0].mxu0
      %v1428 = vadd.f32 %v619, %v1427
      %v1429 = vpop.f32.mrb[0].mxu0
      %v1430 = vpop.f32.mrb[0].mxu0
      %v1431 = vadd.f32 %v620, %v1430
      %v1432 = vpop.f32.mrb[0].mxu0
      %1433 = vdwg.mxu0
      %1434 = vmatprep.subr.bf16.mxu0 0
      %1435 = vmatpush1.bf16.msra.mxu0 %v1185
      %1436 = vmatprep.subr.bf16.mxu0 0
      %1437 = vmatpush1.bf16.msra.mxu0 %v1186
      %1438 = vmatprep.subr.bf16.mxu0 0
      %1439 = vmatpush1.bf16.msra.mxu0 %v1187
      %1440 = vmatprep.subr.bf16.mxu0 0
      %1441 = vmatpush1.bf16.msra.mxu0 %v1188
      %1442 = vmatprep.subr.bf16.mxu0 0
      %1443 = vmatpush1.bf16.msra.mxu0 %v1189
      %1444 = vmatprep.subr.bf16.mxu0 0
      %1445 = vmatpush1.bf16.msra.mxu0 %v1190
      %1446 = vmatprep.subr.bf16.mxu0 0
      %1447 = vmatpush1.bf16.msra.mxu0 %v1191
      %1448 = vmatprep.subr.bf16.mxu0 0
      %1449 = vmatpush1.bf16.msra.mxu0 %v1192
      %1450 = vmatprep.subr.bf16.mxu0 0
      %1451 = vmatpush1.bf16.msra.mxu0 %v1193
      %1452 = vmatprep.subr.bf16.mxu0 0
      %1453 = vmatpush1.bf16.msra.mxu0 %v1194
      %1454 = vmatprep.subr.bf16.mxu0 0
      %1455 = vmatpush1.bf16.msra.mxu0 %v1195
      %1456 = vmatprep.subr.bf16.mxu0 0
      %1457 = vmatpush1.bf16.msra.mxu0 %v1196
      %1458 = vmatprep.subr.bf16.mxu0 0
      %1459 = vmatpush1.bf16.msra.mxu0 %v1197
      %1460 = vmatprep.subr.bf16.mxu0 0
      %1461 = vmatpush1.bf16.msra.mxu0 %v1198
      %1462 = vmatprep.subr.bf16.mxu0 0
      %1463 = vmatpush1.bf16.msra.mxu0 %v1199
      %1464 = vmatprep.subr.bf16.mxu0 0
      %1465 = vmatpush1.bf16.msra.mxu0 %v1200
      %1466 = vmatprep.mubr.bf16.mxu0 %v876
      %1467 = vmatmul.mubr.bf16.gmra.mrb[0].mxu0 %v875
      %v1468 = vpop.f32.mrb[0].mxu0
      %v1469 = vadd.f32 %v1268, %v1468
      %v1470 = vpop.f32.mrb[0].mxu0
      %v1471 = vpop.f32.mrb[0].mxu0
      %v1472 = vadd.f32 %v1271, %v1471
      %v1473 = vpop.f32.mrb[0].mxu0
      %1474 = vmatprep.mubr.bf16.mxu0 %v880
      %1475 = vmatmul.mubr.bf16.gmra.mrb[0].mxu0 %v879
      %v1476 = vpop.f32.mrb[0].mxu0
      %v1477 = vadd.f32 %v1276, %v1476
      %v1478 = vpop.f32.mrb[0].mxu0
      %v1479 = vpop.f32.mrb[0].mxu0
      %v1480 = vadd.f32 %v1279, %v1479
      %v1481 = vpop.f32.mrb[0].mxu0
      %1482 = vmatprep.mubr.bf16.mxu0 %v884
      %1483 = vmatmul.mubr.bf16.gmra.mrb[0].mxu0 %v883
      %v1484 = vpop.f32.mrb[0].mxu0
      %v1485 = vadd.f32 %v1284, %v1484
      %v1486 = vpop.f32.mrb[0].mxu0
      %v1487 = vpop.f32.mrb[0].mxu0
      %v1488 = vadd.f32 %v1287, %v1487
      %v1489 = vpop.f32.mrb[0].mxu0
      %1490 = vmatprep.mubr.bf16.mxu0 %v888
      %1491 = vmatmul.mubr.bf16.gmra.mrb[0].mxu0 %v887
      %v1492 = vpop.f32.mrb[0].mxu0
      %v1493 = vadd.f32 %v1292, %v1492
      %v1494 = vpop.f32.mrb[0].mxu0
      %v1495 = vpop.f32.mrb[0].mxu0
      %v1496 = vadd.f32 %v1295, %v1495
      %v1497 = vpop.f32.mrb[0].mxu0
      %1498 = vmatprep.mubr.bf16.mxu0 %v892
      %1499 = vmatmul.mubr.bf16.gmra.mrb[0].mxu0 %v891
      %v1500 = vpop.f32.mrb[0].mxu0
      %v1501 = vadd.f32 %v1300, %v1500
      %v1502 = vpop.f32.mrb[0].mxu0
      %v1503 = vpop.f32.mrb[0].mxu0
      %v1504 = vadd.f32 %v1303, %v1503
      %v1505 = vpop.f32.mrb[0].mxu0
      %1506 = vmatprep.mubr.bf16.mxu0 %v896
      %1507 = vmatmul.mubr.bf16.gmra.mrb[0].mxu0 %v895
      %v1508 = vpop.f32.mrb[0].mxu0
      %v1509 = vadd.f32 %v1308, %v1508
      %v1510 = vpop.f32.mrb[0].mxu0
      %v1511 = vpop.f32.mrb[0].mxu0
      %v1512 = vadd.f32 %v1311, %v1511
      %v1513 = vpop.f32.mrb[0].mxu0
      %1514 = vmatprep.mubr.bf16.mxu0 %v900
      %1515 = vmatmul.mubr.bf16.gmra.mrb[0].mxu0 %v899
      %v1516 = vpop.f32.mrb[0].mxu0
      %v1517 = vadd.f32 %v1316, %v1516
      %v1518 = vpop.f32.mrb[0].mxu0
      %v1519 = vpop.f32.mrb[0].mxu0
      %v1520 = vadd.f32 %v1319, %v1519
      %v1521 = vpop.f32.mrb[0].mxu0
      %1522 = vmatprep.mubr.bf16.mxu0 %v904
      %1523 = vmatmul.mubr.bf16.gmra.mrb[0].mxu0 %v903
      %v1524 = vpop.f32.mrb[0].mxu0
      %v1525 = vadd.f32 %v1324, %v1524
      %v1526 = vpop.f32.mrb[0].mxu0
      %v1527 = vpop.f32.mrb[0].mxu0
      %v1528 = vadd.f32 %v1327, %v1527
      %v1529 = vpop.f32.mrb[0].mxu0
      %1530 = vmatprep.mubr.bf16.mxu0 %v908
      %1531 = vmatmul.mubr.bf16.gmra.mrb[0].mxu0 %v907
      %v1532 = vpop.f32.mrb[0].mxu0
      %v1533 = vadd.f32 %v1332, %v1532
      %v1534 = vpop.f32.mrb[0].mxu0
      %v1535 = vpop.f32.mrb[0].mxu0
      %v1536 = vadd.f32 %v1335, %v1535
      %v1537 = vpop.f32.mrb[0].mxu0
      %1538 = vmatprep.mubr.bf16.mxu0 %v912
      %1539 = vmatmul.mubr.bf16.gmra.mrb[0].mxu0 %v911
      %v1540 = vpop.f32.mrb[0].mxu0
      %v1541 = vadd.f32 %v1340, %v1540
      %v1542 = vpop.f32.mrb[0].mxu0
      %v1543 = vpop.f32.mrb[0].mxu0
      %v1544 = vadd.f32 %v1343, %v1543
      %v1545 = vpop.f32.mrb[0].mxu0
      %1546 = vmatprep.mubr.bf16.mxu0 %v916
      %1547 = vmatmul.mubr.bf16.gmra.mrb[0].mxu0 %v915
      %v1548 = vpop.f32.mrb[0].mxu0
      %v1549 = vadd.f32 %v1348, %v1548
      %v1550 = vpop.f32.mrb[0].mxu0
      %v1551 = vpop.f32.mrb[0].mxu0
      %v1552 = vadd.f32 %v1351, %v1551
      %v1553 = vpop.f32.mrb[0].mxu0
      %1554 = vmatprep.mubr.bf16.mxu0 %v920
      %1555 = vmatmul.mubr.bf16.gmra.mrb[0].mxu0 %v919
      %v1556 = vpop.f32.mrb[0].mxu0
      %v1557 = vadd.f32 %v1356, %v1556
      %v1558 = vpop.f32.mrb[0].mxu0
      %v1559 = vpop.f32.mrb[0].mxu0
      %v1560 = vadd.f32 %v1359, %v1559
      %v1561 = vpop.f32.mrb[0].mxu0
      %1562 = vmatprep.mubr.bf16.mxu0 %v924
      %1563 = vmatmul.mubr.bf16.gmra.mrb[0].mxu0 %v923
      %v1564 = vpop.f32.mrb[0].mxu0
      %v1565 = vadd.f32 %v1364, %v1564
      %v1566 = vpop.f32.mrb[0].mxu0
      %v1567 = vpop.f32.mrb[0].mxu0
      %v1568 = vadd.f32 %v1367, %v1567
      %v1569 = vpop.f32.mrb[0].mxu0
      %1570 = vmatprep.mubr.bf16.mxu0 %v928
      %1571 = vmatmul.mubr.bf16.gmra.mrb[0].mxu0 %v927
      %v1572 = vpop.f32.mrb[0].mxu0
      %v1573 = vadd.f32 %v1372, %v1572
      %v1574 = vpop.f32.mrb[0].mxu0
      %v1575 = vpop.f32.mrb[0].mxu0
      %v1576 = vadd.f32 %v1375, %v1575
      %v1577 = vpop.f32.mrb[0].mxu0
      %1578 = vmatprep.mubr.bf16.mxu0 %v932
      %1579 = vmatmul.mubr.bf16.gmra.mrb[0].mxu0 %v931
      %v1580 = vpop.f32.mrb[0].mxu0
      %v1581 = vadd.f32 %v1380, %v1580
      %v1582 = vpop.f32.mrb[0].mxu0
      %v1583 = vpop.f32.mrb[0].mxu0
      %v1584 = vadd.f32 %v1383, %v1583
      %v1585 = vpop.f32.mrb[0].mxu0
      %1586 = vmatprep.mubr.bf16.mxu0 %v936
      %1587 = vmatmul.mubr.bf16.gmra.mrb[0].mxu0 %v935
      %v1588 = vpop.f32.mrb[0].mxu0
      %v1589 = vadd.f32 %v1388, %v1588
      %v1590 = vpop.f32.mrb[0].mxu0
      %v1591 = vpop.f32.mrb[0].mxu0
      %v1592 = vadd.f32 %v1391, %v1591
      %v1593 = vpop.f32.mrb[0].mxu0
      %1594 = vmatprep.mubr.bf16.mxu0 %v940
      %1595 = vmatmul.mubr.bf16.gmra.mrb[0].mxu0 %v939
      %v1596 = vpop.f32.mrb[0].mxu0
      %v1597 = vadd.f32 %v1396, %v1596
      %v1598 = vpop.f32.mrb[0].mxu0
      %v1599 = vpop.f32.mrb[0].mxu0
      %v1600 = vadd.f32 %v1399, %v1599
      %v1601 = vpop.f32.mrb[0].mxu0
      %1602 = vmatprep.mubr.bf16.mxu0 %v944
      %1603 = vmatmul.mubr.bf16.gmra.mrb[0].mxu0 %v943
      %v1604 = vpop.f32.mrb[0].mxu0
      %v1605 = vadd.f32 %v1404, %v1604
      %v1606 = vpop.f32.mrb[0].mxu0
      %v1607 = vpop.f32.mrb[0].mxu0
      %v1608 = vadd.f32 %v1407, %v1607
      %v1609 = vpop.f32.mrb[0].mxu0
      %1610 = vmatprep.mubr.bf16.mxu0 %v948
      %1611 = vmatmul.mubr.bf16.gmra.mrb[0].mxu0 %v947
      %v1612 = vpop.f32.mrb[0].mxu0
      %v1613 = vadd.f32 %v1412, %v1612
      %v1614 = vpop.f32.mrb[0].mxu0
      %v1615 = vpop.f32.mrb[0].mxu0
      %v1616 = vadd.f32 %v1415, %v1615
      %v1617 = vpop.f32.mrb[0].mxu0
      %1618 = vmatprep.mubr.bf16.mxu0 %v952
      %1619 = vmatmul.mubr.bf16.gmra.mrb[0].mxu0 %v951
      %v1620 = vpop.f32.mrb[0].mxu0
      %v1621 = vadd.f32 %v1420, %v1620
      %v1622 = vpop.f32.mrb[0].mxu0
      %v1623 = vpop.f32.mrb[0].mxu0
      %v1624 = vadd.f32 %v1423, %v1623
      %v1625 = vpop.f32.mrb[0].mxu0
      %1626 = vmatprep.mubr.bf16.mxu0 %v956
      %1627 = vmatmul.mubr.bf16.gmra.mrb[0].mxu0 %v955
      %v1628 = vpop.f32.mrb[0].mxu0
      %v1629 = vadd.f32 %v1428, %v1628
      %v1630 = vpop.f32.mrb[0].mxu0
      %v1631 = vpop.f32.mrb[0].mxu0
      %v1632 = vadd.f32 %v1431, %v1631
      %v1633 = vpop.f32.mrb[0].mxu0
      %1634 = vdwg.mxu0
      %v1635 = vld [vmem:[%s3] sm:$0x1]
      %v1637 = vlaneseq
      %v1638 = vshrl.u32 %v1637, 7
      %v1639 = vsub.s32 0, %v1638
      %v1640 = vrot.slane %v1635, %v1639
      %v1642 = vadd.f32 %v1469, %v1640
      %v1643 = vadd.f32 %v1472, %v1640
      %v1644 = vadd.f32 %v1477, %v1640
      %v1645 = vadd.f32 %v1480, %v1640
      %v1646 = vadd.f32 %v1485, %v1640
      %v1647 = vadd.f32 %v1488, %v1640
      %v1648 = vadd.f32 %v1493, %v1640
      %v1649 = vadd.f32 %v1496, %v1640
      %v1650 = vadd.f32 %v1501, %v1640
      %v1651 = vadd.f32 %v1504, %v1640
      %v1652 = vadd.f32 %v1509, %v1640
      %v1653 = vadd.f32 %v1512, %v1640
      %v1654 = vadd.f32 %v1517, %v1640
      %v1655 = vadd.f32 %v1520, %v1640
      %v1656 = vadd.f32 %v1525, %v1640
      %v1657 = vadd.f32 %v1528, %v1640
      %v1658 = vadd.f32 %v1533, %v1640
      %v1659 = vadd.f32 %v1536, %v1640
      %v1660 = vadd.f32 %v1541, %v1640
      %v1661 = vadd.f32 %v1544, %v1640
      %v1662 = vadd.f32 %v1549, %v1640
      %v1663 = vadd.f32 %v1552, %v1640
      %v1664 = vadd.f32 %v1557, %v1640
      %v1665 = vadd.f32 %v1560, %v1640
      %v1666 = vadd.f32 %v1565, %v1640
      %v1667 = vadd.f32 %v1568, %v1640
      %v1668 = vadd.f32 %v1573, %v1640
      %v1669 = vadd.f32 %v1576, %v1640
      %v1670 = vadd.f32 %v1581, %v1640
      %v1671 = vadd.f32 %v1584, %v1640
      %v1672 = vadd.f32 %v1589, %v1640
      %v1673 = vadd.f32 %v1592, %v1640
      %v1674 = vadd.f32 %v1597, %v1640
      %v1675 = vadd.f32 %v1600, %v1640
      %v1676 = vadd.f32 %v1605, %v1640
      %v1677 = vadd.f32 %v1608, %v1640
      %v1678 = vadd.f32 %v1613, %v1640
      %v1679 = vadd.f32 %v1616, %v1640
      %v1680 = vadd.f32 %v1621, %v1640
      %v1681 = vadd.f32 %v1624, %v1640
      %v1682 = vadd.f32 %v1629, %v1640
      %v1683 = vadd.f32 %v1632, %v1640
      %v1684 = vpack.c.bf16 %v1643, %v1642
      %v1685 = vpack.c.bf16 %v1645, %v1644
      %v1686 = vpack.c.bf16 %v1647, %v1646
      %v1687 = vpack.c.bf16 %v1649, %v1648
      %v1688 = vpack.c.bf16 %v1651, %v1650
      %v1689 = vpack.c.bf16 %v1653, %v1652
      %v1690 = vpack.c.bf16 %v1655, %v1654
      %v1691 = vpack.c.bf16 %v1657, %v1656
      %v1692 = vpack.c.bf16 %v1659, %v1658
      %v1693 = vpack.c.bf16 %v1661, %v1660
      %v1694 = vpack.c.bf16 %v1663, %v1662
      %v1695 = vpack.c.bf16 %v1665, %v1664
      %v1696 = vpack.c.bf16 %v1667, %v1666
      %v1697 = vpack.c.bf16 %v1669, %v1668
      %v1698 = vpack.c.bf16 %v1671, %v1670
      %v1699 = vpack.c.bf16 %v1673, %v1672
      %v1700 = vpack.c.bf16 %v1675, %v1674
      %v1701 = vpack.c.bf16 %v1677, %v1676
      %v1702 = vpack.c.bf16 %v1679, %v1678
      %v1703 = vpack.c.bf16 %v1681, %v1680
      %v1704 = vpack.c.bf16 %v1683, %v1682
      %v1705 = vld [vmem:[%s4] sm:$0xf]
      %v1706 = vld [vmem:[%s4 + $0x4] sm:$0xf]
      %v1707 = vld [vmem:[%s4 + $0x8] sm:$0xf]
      %v1708 = vld [vmem:[%s4 + $0xc] sm:$0xf]
      %v1709 = vld [vmem:[%s4 + $0x10] sm:$0xf]
      %v1710 = vld [vmem:[%s4 + $0x14] sm:$0xf]
      %v1711 = vld [vmem:[%s4 + $0x18] sm:$0xf]
      %v1712 = vld [vmem:[%s4 + $0x1c] sm:$0xf]
      %v1713 = vld [vmem:[%s4 + $0x20] sm:$0xf]
      %v1714 = vld [vmem:[%s4 + $0x24] sm:$0xf]
      %v1715 = vld [vmem:[%s4 + $0x28] sm:$0xf]
      %v1716 = vld [vmem:[%s4 + $0x2c] sm:$0xf]
      %v1717 = vld [vmem:[%s4 + $0x30] sm:$0xf]
      %v1718 = vld [vmem:[%s4 + $0x34] sm:$0xf]
      %v1719 = vld [vmem:[%s4 + $0x38] sm:$0xf]
      %v1720 = vld [vmem:[%s4 + $0x3c] sm:$0xf]
      %v1721 = vld [vmem:[%s5] sm:$0x1]
      %v1723 = vlaneseq
      %v1724 = vshrl.u32 %v1723, 7
      %v1725 = vsub.s32 0, %v1724
      %v1726 = vrot.slane %v1721, %v1725
      %v1744 = vunpack.c.l.b16 %v1705
      %v1745 = vunpack.c.l.b16 %v1706
      %v1746 = vunpack.c.l.b16 %v1707
      %v1747 = vunpack.c.l.b16 %v1708
      %v1748 = vunpack.c.l.b16 %v1709
      %v1749 = vunpack.c.l.b16 %v1710
      %v1750 = vunpack.c.l.b16 %v1711
      %v1751 = vunpack.c.l.b16 %v1712
      %v1752 = vunpack.c.l.b16 %v1713
      %v1753 = vunpack.c.l.b16 %v1714
      %v1754 = vunpack.c.l.b16 %v1715
      %v1755 = vunpack.c.l.b16 %v1716
      %v1756 = vunpack.c.l.b16 %v1717
      %v1757 = vunpack.c.l.b16 %v1718
      %v1758 = vunpack.c.l.b16 %v1719
      %v1759 = vunpack.c.l.b16 %v1720
      %v1760 = vpack.c.b16 %v1745, %v1744
      %v1761 = vpack.c.b16 %v1747, %v1746
      %v1762 = vpack.c.b16 %v1749, %v1748
      %v1763 = vpack.c.b16 %v1751, %v1750
      %v1764 = vpack.c.b16 %v1753, %v1752
      %v1765 = vpack.c.b16 %v1755, %v1754
      %v1766 = vpack.c.b16 %v1757, %v1756
      %v1767 = vpack.c.b16 %v1759, %v1758
      %1776 = vmatprep.subr.bf16.mxu0 0
      %1777 = vmatpush1.bf16.msra.mxu0 %v1760
      %1778 = vmatprep.subr.bf16.mxu0 0
      %1779 = vmatpush1.bf16.msra.mxu0 %v1761
      %1780 = vmatprep.subr.bf16.mxu0 0
      %1781 = vmatpush1.bf16.msra.mxu0 %v1762
      %1782 = vmatprep.subr.bf16.mxu0 0
      %1783 = vmatpush1.bf16.msra.mxu0 %v1763
      %1784 = vmatprep.subr.bf16.mxu0 0
      %1785 = vmatpush1.bf16.msra.mxu0 %v1764
      %1786 = vmatprep.subr.bf16.mxu0 0
      %1787 = vmatpush1.bf16.msra.mxu0 %v1765
      %1788 = vmatprep.subr.bf16.mxu0 0
      %1789 = vmatpush1.bf16.msra.mxu0 %v1766
      %1790 = vmatprep.subr.bf16.mxu0 0
      %1791 = vmatpush1.bf16.msra.mxu0 %v1767
      %1792 = vmatprep.subr.bf16.mxu0 0
      %1793 = vmatpush1.bf16.msra.mxu0 0
      %1794 = vmatprep.subr.bf16.mxu0 0
      %1795 = vmatpush1.bf16.msra.mxu0 0
      %1796 = vmatprep.subr.bf16.mxu0 0
      %1797 = vmatpush1.bf16.msra.mxu0 0
      %1798 = vmatprep.subr.bf16.mxu0 0
      %1799 = vmatpush1.bf16.msra.mxu0 0
      %1800 = vmatprep.subr.bf16.mxu0 0
      %1801 = vmatpush1.bf16.msra.mxu0 0
      %1802 = vmatprep.subr.bf16.mxu0 0
      %1803 = vmatpush1.bf16.msra.mxu0 0
      %1804 = vmatprep.subr.bf16.mxu0 0
      %1805 = vmatpush1.bf16.msra.mxu0 0
      %1806 = vmatprep.subr.bf16.mxu0 0
      %1807 = vmatpush1.bf16.msra.mxu0 0
      %1808 = vmatprep.mubr.bf16.mxu0 0
      %1809 = vmatmul.mubr.bf16.gmra.mrb[0].mxu0 %v1684
      %v1810 = vpop.f32.mrb[0].mxu0
      %v1811 = vadd.f32 %v1726, %v1810
      %v1812 = vpop.f32.mrb[0].mxu0
      %v1813 = vpop.f32.mrb[0].mxu0
      %v1814 = vadd.f32 %v1726, %v1813
      %v1815 = vpop.f32.mrb[0].mxu0
      %1816 = vmatprep.mubr.bf16.mxu0 0
      %1817 = vmatmul.mubr.bf16.gmra.mrb[0].mxu0 %v1685
      %v1818 = vpop.f32.mrb[0].mxu0
      %v1819 = vadd.f32 %v1726, %v1818
      %v1820 = vpop.f32.mrb[0].mxu0
      %v1821 = vpop.f32.mrb[0].mxu0
      %v1822 = vadd.f32 %v1726, %v1821
      %v1823 = vpop.f32.mrb[0].mxu0
      %1824 = vmatprep.mubr.bf16.mxu0 0
      %1825 = vmatmul.mubr.bf16.gmra.mrb[0].mxu0 %v1686
      %v1826 = vpop.f32.mrb[0].mxu0
      %v1827 = vadd.f32 %v1726, %v1826
      %v1828 = vpop.f32.mrb[0].mxu0
      %v1829 = vpop.f32.mrb[0].mxu0
      %v1830 = vadd.f32 %v1726, %v1829
      %v1831 = vpop.f32.mrb[0].mxu0
      %1832 = vmatprep.mubr.bf16.mxu0 0
      %1833 = vmatmul.mubr.bf16.gmra.mrb[0].mxu0 %v1687
      %v1834 = vpop.f32.mrb[0].mxu0
      %v1835 = vadd.f32 %v1726, %v1834
      %v1836 = vpop.f32.mrb[0].mxu0
      %v1837 = vpop.f32.mrb[0].mxu0
      %v1838 = vadd.f32 %v1726, %v1837
      %v1839 = vpop.f32.mrb[0].mxu0
      %1840 = vmatprep.mubr.bf16.mxu0 0
      %1841 = vmatmul.mubr.bf16.gmra.mrb[0].mxu0 %v1688
      %v1842 = vpop.f32.mrb[0].mxu0
      %v1843 = vadd.f32 %v1726, %v1842
      %v1844 = vpop.f32.mrb[0].mxu0
      %v1845 = vpop.f32.mrb[0].mxu0
      %v1846 = vadd.f32 %v1726, %v1845
      %v1847 = vpop.f32.mrb[0].mxu0
      %1848 = vmatprep.mubr.bf16.mxu0 0
      %1849 = vmatmul.mubr.bf16.gmra.mrb[0].mxu0 %v1689
      %v1850 = vpop.f32.mrb[0].mxu0
      %v1851 = vadd.f32 %v1726, %v1850
      %v1852 = vpop.f32.mrb[0].mxu0
      %v1853 = vpop.f32.mrb[0].mxu0
      %v1854 = vadd.f32 %v1726, %v1853
      %v1855 = vpop.f32.mrb[0].mxu0
      %1856 = vmatprep.mubr.bf16.mxu0 0
      %1857 = vmatmul.mubr.bf16.gmra.mrb[0].mxu0 %v1690
      %v1858 = vpop.f32.mrb[0].mxu0
      %v1859 = vadd.f32 %v1726, %v1858
      %v1860 = vpop.f32.mrb[0].mxu0
      %v1861 = vpop.f32.mrb[0].mxu0
      %v1862 = vadd.f32 %v1726, %v1861
      %v1863 = vpop.f32.mrb[0].mxu0
      %1864 = vmatprep.mubr.bf16.mxu0 0
      %1865 = vmatmul.mubr.bf16.gmra.mrb[0].mxu0 %v1691
      %v1866 = vpop.f32.mrb[0].mxu0
      %v1867 = vadd.f32 %v1726, %v1866
      %v1868 = vpop.f32.mrb[0].mxu0
      %v1869 = vpop.f32.mrb[0].mxu0
      %v1870 = vadd.f32 %v1726, %v1869
      %v1871 = vpop.f32.mrb[0].mxu0
      %1872 = vmatprep.mubr.bf16.mxu0 0
      %1873 = vmatmul.mubr.bf16.gmra.mrb[0].mxu0 %v1692
      %v1874 = vpop.f32.mrb[0].mxu0
      %v1875 = vadd.f32 %v1726, %v1874
      %v1876 = vpop.f32.mrb[0].mxu0
      %v1877 = vpop.f32.mrb[0].mxu0
      %v1878 = vadd.f32 %v1726, %v1877
      %v1879 = vpop.f32.mrb[0].mxu0
      %1880 = vmatprep.mubr.bf16.mxu0 0
      %1881 = vmatmul.mubr.bf16.gmra.mrb[0].mxu0 %v1693
      %v1882 = vpop.f32.mrb[0].mxu0
      %v1883 = vadd.f32 %v1726, %v1882
      %v1884 = vpop.f32.mrb[0].mxu0
      %v1885 = vpop.f32.mrb[0].mxu0
      %v1886 = vadd.f32 %v1726, %v1885
      %v1887 = vpop.f32.mrb[0].mxu0
      %1888 = vmatprep.mubr.bf16.mxu0 0
      %1889 = vmatmul.mubr.bf16.gmra.mrb[0].mxu0 %v1694
      %v1890 = vpop.f32.mrb[0].mxu0
      %v1891 = vadd.f32 %v1726, %v1890
      %v1892 = vpop.f32.mrb[0].mxu0
      %v1893 = vpop.f32.mrb[0].mxu0
      %v1894 = vadd.f32 %v1726, %v1893
      %v1895 = vpop.f32.mrb[0].mxu0
      %1896 = vmatprep.mubr.bf16.mxu0 0
      %1897 = vmatmul.mubr.bf16.gmra.mrb[0].mxu0 %v1695
      %v1898 = vpop.f32.mrb[0].mxu0
      %v1899 = vadd.f32 %v1726, %v1898
      %v1900 = vpop.f32.mrb[0].mxu0
      %v1901 = vpop.f32.mrb[0].mxu0
      %v1902 = vadd.f32 %v1726, %v1901
      %v1903 = vpop.f32.mrb[0].mxu0
      %1904 = vmatprep.mubr.bf16.mxu0 0
      %1905 = vmatmul.mubr.bf16.gmra.mrb[0].mxu0 %v1696
      %v1906 = vpop.f32.mrb[0].mxu0
      %v1907 = vadd.f32 %v1726, %v1906
      %v1908 = vpop.f32.mrb[0].mxu0
      %v1909 = vpop.f32.mrb[0].mxu0
      %v1910 = vadd.f32 %v1726, %v1909
      %v1911 = vpop.f32.mrb[0].mxu0
      %1912 = vmatprep.mubr.bf16.mxu0 0
      %1913 = vmatmul.mubr.bf16.gmra.mrb[0].mxu0 %v1697
      %v1914 = vpop.f32.mrb[0].mxu0
      %v1915 = vadd.f32 %v1726, %v1914
      %v1916 = vpop.f32.mrb[0].mxu0
      %v1917 = vpop.f32.mrb[0].mxu0
      %v1918 = vadd.f32 %v1726, %v1917
      %v1919 = vpop.f32.mrb[0].mxu0
      %1920 = vmatprep.mubr.bf16.mxu0 0
      %1921 = vmatmul.mubr.bf16.gmra.mrb[0].mxu0 %v1698
      %v1922 = vpop.f32.mrb[0].mxu0
      %v1923 = vadd.f32 %v1726, %v1922
      %v1924 = vpop.f32.mrb[0].mxu0
      %v1925 = vpop.f32.mrb[0].mxu0
      %v1926 = vadd.f32 %v1726, %v1925
      %v1927 = vpop.f32.mrb[0].mxu0
      %1928 = vmatprep.mubr.bf16.mxu0 0
      %1929 = vmatmul.mubr.bf16.gmra.mrb[0].mxu0 %v1699
      %v1930 = vpop.f32.mrb[0].mxu0
      %v1931 = vadd.f32 %v1726, %v1930
      %v1932 = vpop.f32.mrb[0].mxu0
      %v1933 = vpop.f32.mrb[0].mxu0
      %v1934 = vadd.f32 %v1726, %v1933
      %v1935 = vpop.f32.mrb[0].mxu0
      %1936 = vmatprep.mubr.bf16.mxu0 0
      %1937 = vmatmul.mubr.bf16.gmra.mrb[0].mxu0 %v1700
      %v1938 = vpop.f32.mrb[0].mxu0
      %v1939 = vadd.f32 %v1726, %v1938
      %v1940 = vpop.f32.mrb[0].mxu0
      %v1941 = vpop.f32.mrb[0].mxu0
      %v1942 = vadd.f32 %v1726, %v1941
      %v1943 = vpop.f32.mrb[0].mxu0
      %1944 = vmatprep.mubr.bf16.mxu0 0
      %1945 = vmatmul.mubr.bf16.gmra.mrb[0].mxu0 %v1701
      %v1946 = vpop.f32.mrb[0].mxu0
      %v1947 = vadd.f32 %v1726, %v1946
      %v1948 = vpop.f32.mrb[0].mxu0
      %v1949 = vpop.f32.mrb[0].mxu0
      %v1950 = vadd.f32 %v1726, %v1949
      %v1951 = vpop.f32.mrb[0].mxu0
      %1952 = vmatprep.mubr.bf16.mxu0 0
      %1953 = vmatmul.mubr.bf16.gmra.mrb[0].mxu0 %v1702
      %v1954 = vpop.f32.mrb[0].mxu0
      %v1955 = vadd.f32 %v1726, %v1954
      %v1956 = vpop.f32.mrb[0].mxu0
      %v1957 = vpop.f32.mrb[0].mxu0
      %v1958 = vadd.f32 %v1726, %v1957
      %v1959 = vpop.f32.mrb[0].mxu0
      %1960 = vmatprep.mubr.bf16.mxu0 0
      %1961 = vmatmul.mubr.bf16.gmra.mrb[0].mxu0 %v1703
      %v1962 = vpop.f32.mrb[0].mxu0
      %v1963 = vadd.f32 %v1726, %v1962
      %v1964 = vpop.f32.mrb[0].mxu0
      %v1965 = vpop.f32.mrb[0].mxu0
      %v1966 = vadd.f32 %v1726, %v1965
      %v1967 = vpop.f32.mrb[0].mxu0
      %1968 = vmatprep.mubr.bf16.mxu0 0
      %1969 = vmatmul.mubr.bf16.gmra.mrb[0].mxu0 %v1704
      %v1970 = vpop.f32.mrb[0].mxu0
      %v1971 = vadd.f32 %v1726, %v1970
      %v1972 = vpop.f32.mrb[0].mxu0
      %v1973 = vpop.f32.mrb[0].mxu0
      %v1974 = vadd.f32 %v1726, %v1973
      %v1975 = vpop.f32.mrb[0].mxu0
      %1976 = vdwg.mxu0
      %v1977 = vmax.f32 %v1811, 0.0
      %v1978 = vmax.f32 %v1814, 0.0
      %v1979 = vmax.f32 %v1819, 0.0
      %v1980 = vmax.f32 %v1822, 0.0
      %v1981 = vmax.f32 %v1827, 0.0
      %v1982 = vmax.f32 %v1830, 0.0
      %v1983 = vmax.f32 %v1835, 0.0
      %v1984 = vmax.f32 %v1838, 0.0
      %v1985 = vmax.f32 %v1843, 0.0
      %v1986 = vmax.f32 %v1846, 0.0
      %v1987 = vmax.f32 %v1851, 0.0
      %v1988 = vmax.f32 %v1854, 0.0
      %v1989 = vmax.f32 %v1859, 0.0
      %v1990 = vmax.f32 %v1862, 0.0
      %v1991 = vmax.f32 %v1867, 0.0
      %v1992 = vmax.f32 %v1870, 0.0
      %v1993 = vmax.f32 %v1875, 0.0
      %v1994 = vmax.f32 %v1878, 0.0
      %v1995 = vmax.f32 %v1883, 0.0
      %v1996 = vmax.f32 %v1886, 0.0
      %v1997 = vmax.f32 %v1891, 0.0
      %v1998 = vmax.f32 %v1894, 0.0
      %v1999 = vmax.f32 %v1899, 0.0
      %v2000 = vmax.f32 %v1902, 0.0
      %v2001 = vmax.f32 %v1907, 0.0
      %v2002 = vmax.f32 %v1910, 0.0
      %v2003 = vmax.f32 %v1915, 0.0
      %v2004 = vmax.f32 %v1918, 0.0
      %v2005 = vmax.f32 %v1923, 0.0
      %v2006 = vmax.f32 %v1926, 0.0
      %v2007 = vmax.f32 %v1931, 0.0
      %v2008 = vmax.f32 %v1934, 0.0
      %v2009 = vmax.f32 %v1939, 0.0
      %v2010 = vmax.f32 %v1942, 0.0
      %v2011 = vmax.f32 %v1947, 0.0
      %v2012 = vmax.f32 %v1950, 0.0
      %v2013 = vmax.f32 %v1955, 0.0
      %v2014 = vmax.f32 %v1958, 0.0
      %v2015 = vmax.f32 %v1963, 0.0
      %v2016 = vmax.f32 %v1966, 0.0
      %v2017 = vmax.f32 %v1971, 0.0
      %v2018 = vmax.f32 %v1974, 0.0
      %v2019 = vpack.c.bf16 %v1978, %v1977
      %v2020 = vpack.c.bf16 %v1980, %v1979
      %v2021 = vpack.c.bf16 %v1982, %v1981
      %v2022 = vpack.c.bf16 %v1984, %v1983
      %v2023 = vpack.c.bf16 %v1986, %v1985
      %v2024 = vpack.c.bf16 %v1988, %v1987
      %v2025 = vpack.c.bf16 %v1990, %v1989
      %v2026 = vpack.c.bf16 %v1992, %v1991
      %v2027 = vpack.c.bf16 %v1994, %v1993
      %v2028 = vpack.c.bf16 %v1996, %v1995
      %v2029 = vpack.c.bf16 %v1998, %v1997
      %v2030 = vpack.c.bf16 %v2000, %v1999
      %v2031 = vpack.c.bf16 %v2002, %v2001
      %v2032 = vpack.c.bf16 %v2004, %v2003
      %v2033 = vpack.c.bf16 %v2006, %v2005
      %v2034 = vpack.c.bf16 %v2008, %v2007
      %v2035 = vpack.c.bf16 %v2010, %v2009
      %v2036 = vpack.c.bf16 %v2012, %v2011
      %v2037 = vpack.c.bf16 %v2014, %v2013
      %v2038 = vpack.c.bf16 %v2016, %v2015
      %v2039 = vpack.c.bf16 %v2018, %v2017
      %v2040 = vld [vmem:[%s6] sm:$0xf]
      %v2041 = vld [vmem:[%s6 + $0x4] sm:$0xf]
      %v2042 = vld [vmem:[%s6 + $0x8] sm:$0xf]
      %v2043 = vld [vmem:[%s6 + $0xc] sm:$0xf]
      %v2044 = vld [vmem:[%s6 + $0x10] sm:$0xf]
      %v2045 = vld [vmem:[%s6 + $0x14] sm:$0xf]
      %v2046 = vld [vmem:[%s6 + $0x18] sm:$0xf]
      %v2047 = vld [vmem:[%s6 + $0x1c] sm:$0xf]
      %v2048 = vld [vmem:[%s6 + $0x20] sm:$0xf]
      %v2049 = vld [vmem:[%s6 + $0x24] sm:$0xf]
      %v2050 = vld [vmem:[%s6 + $0x28] sm:$0xf]
      %v2051 = vld [vmem:[%s6 + $0x2c] sm:$0xf]
      %v2052 = vld [vmem:[%s6 + $0x30] sm:$0xf]
      %v2053 = vld [vmem:[%s6 + $0x34] sm:$0xf]
      %v2054 = vld [vmem:[%s6 + $0x38] sm:$0xf]
      %v2055 = vld [vmem:[%s6 + $0x3c] sm:$0xf]
      %v2056 = vld [vmem:[%s7] sm:$0x1]
      %v2058 = vlaneseq
      %v2059 = vshrl.u32 %v2058, 7
      %v2060 = vsub.s32 0, %v2059
      %v2061 = vrot.slane %v2056, %v2060
      %v2079 = vunpack.c.l.b16 %v2040
      %v2080 = vunpack.c.l.b16 %v2041
      %v2081 = vunpack.c.l.b16 %v2042
      %v2082 = vunpack.c.l.b16 %v2043
      %v2083 = vunpack.c.l.b16 %v2044
      %v2084 = vunpack.c.l.b16 %v2045
      %v2085 = vunpack.c.l.b16 %v2046
      %v2086 = vunpack.c.l.b16 %v2047
      %v2087 = vunpack.c.l.b16 %v2048
      %v2088 = vunpack.c.l.b16 %v2049
      %v2089 = vunpack.c.l.b16 %v2050
      %v2090 = vunpack.c.l.b16 %v2051
      %v2091 = vunpack.c.l.b16 %v2052
      %v2092 = vunpack.c.l.b16 %v2053
      %v2093 = vunpack.c.l.b16 %v2054
      %v2094 = vunpack.c.l.b16 %v2055
      %v2095 = vpack.c.b16 %v2080, %v2079
      %v2096 = vpack.c.b16 %v2082, %v2081
      %v2097 = vpack.c.b16 %v2084, %v2083
      %v2098 = vpack.c.b16 %v2086, %v2085
      %v2099 = vpack.c.b16 %v2088, %v2087
      %v2100 = vpack.c.b16 %v2090, %v2089
      %v2101 = vpack.c.b16 %v2092, %v2091
      %v2102 = vpack.c.b16 %v2094, %v2093
      %2111 = vmatprep.subr.bf16.mxu0 0
      %2112 = vmatpush1.bf16.msra.mxu0 %v2095
      %2113 = vmatprep.subr.bf16.mxu0 0
      %2114 = vmatpush1.bf16.msra.mxu0 %v2096
      %2115 = vmatprep.subr.bf16.mxu0 0
      %2116 = vmatpush1.bf16.msra.mxu0 %v2097
      %2117 = vmatprep.subr.bf16.mxu0 0
      %2118 = vmatpush1.bf16.msra.mxu0 %v2098
      %2119 = vmatprep.subr.bf16.mxu0 0
      %2120 = vmatpush1.bf16.msra.mxu0 %v2099
      %2121 = vmatprep.subr.bf16.mxu0 0
      %2122 = vmatpush1.bf16.msra.mxu0 %v2100
      %2123 = vmatprep.subr.bf16.mxu0 0
      %2124 = vmatpush1.bf16.msra.mxu0 %v2101
      %2125 = vmatprep.subr.bf16.mxu0 0
      %2126 = vmatpush1.bf16.msra.mxu0 %v2102
      %2127 = vmatprep.subr.bf16.mxu0 0
      %2128 = vmatpush1.bf16.msra.mxu0 0
      %2129 = vmatprep.subr.bf16.mxu0 0
      %2130 = vmatpush1.bf16.msra.mxu0 0
      %2131 = vmatprep.subr.bf16.mxu0 0
      %2132 = vmatpush1.bf16.msra.mxu0 0
      %2133 = vmatprep.subr.bf16.mxu0 0
      %2134 = vmatpush1.bf16.msra.mxu0 0
      %2135 = vmatprep.subr.bf16.mxu0 0
      %2136 = vmatpush1.bf16.msra.mxu0 0
      %2137 = vmatprep.subr.bf16.mxu0 0
      %2138 = vmatpush1.bf16.msra.mxu0 0
      %2139 = vmatprep.subr.bf16.mxu0 0
      %2140 = vmatpush1.bf16.msra.mxu0 0
      %2141 = vmatprep.subr.bf16.mxu0 0
      %2142 = vmatpush1.bf16.msra.mxu0 0
      %2143 = vmatprep.mubr.bf16.mxu0 0
      %2144 = vmatmul.mubr.bf16.gmra.mrb[0].mxu0 %v2019
      %v2145 = vpop.f32.mrb[0].mxu0
      %v2146 = vadd.f32 %v2061, %v2145
      %v2147 = vpop.f32.mrb[0].mxu0
      %v2148 = vpop.f32.mrb[0].mxu0
      %v2149 = vadd.f32 %v2061, %v2148
      %v2150 = vpop.f32.mrb[0].mxu0
      %2151 = vmatprep.mubr.bf16.mxu0 0
      %2152 = vmatmul.mubr.bf16.gmra.mrb[0].mxu0 %v2020
      %v2153 = vpop.f32.mrb[0].mxu0
      %v2154 = vadd.f32 %v2061, %v2153
      %v2155 = vpop.f32.mrb[0].mxu0
      %v2156 = vpop.f32.mrb[0].mxu0
      %v2157 = vadd.f32 %v2061, %v2156
      %v2158 = vpop.f32.mrb[0].mxu0
      %2159 = vmatprep.mubr.bf16.mxu0 0
      %2160 = vmatmul.mubr.bf16.gmra.mrb[0].mxu0 %v2021
      %v2161 = vpop.f32.mrb[0].mxu0
      %v2162 = vadd.f32 %v2061, %v2161
      %v2163 = vpop.f32.mrb[0].mxu0
      %v2164 = vpop.f32.mrb[0].mxu0
      %v2165 = vadd.f32 %v2061, %v2164
      %v2166 = vpop.f32.mrb[0].mxu0
      %2167 = vmatprep.mubr.bf16.mxu0 0
      %2168 = vmatmul.mubr.bf16.gmra.mrb[0].mxu0 %v2022
      %v2169 = vpop.f32.mrb[0].mxu0
      %v2170 = vadd.f32 %v2061, %v2169
      %v2171 = vpop.f32.mrb[0].mxu0
      %v2172 = vpop.f32.mrb[0].mxu0
      %v2173 = vadd.f32 %v2061, %v2172
      %v2174 = vpop.f32.mrb[0].mxu0
      %2175 = vmatprep.mubr.bf16.mxu0 0
      %2176 = vmatmul.mubr.bf16.gmra.mrb[0].mxu0 %v2023
      %v2177 = vpop.f32.mrb[0].mxu0
      %v2178 = vadd.f32 %v2061, %v2177
      %v2179 = vpop.f32.mrb[0].mxu0
      %v2180 = vpop.f32.mrb[0].mxu0
      %v2181 = vadd.f32 %v2061, %v2180
      %v2182 = vpop.f32.mrb[0].mxu0
      %2183 = vmatprep.mubr.bf16.mxu0 0
      %2184 = vmatmul.mubr.bf16.gmra.mrb[0].mxu0 %v2024
      %v2185 = vpop.f32.mrb[0].mxu0
      %v2186 = vadd.f32 %v2061, %v2185
      %v2187 = vpop.f32.mrb[0].mxu0
      %v2188 = vpop.f32.mrb[0].mxu0
      %v2189 = vadd.f32 %v2061, %v2188
      %v2190 = vpop.f32.mrb[0].mxu0
      %2191 = vmatprep.mubr.bf16.mxu0 0
      %2192 = vmatmul.mubr.bf16.gmra.mrb[0].mxu0 %v2025
      %v2193 = vpop.f32.mrb[0].mxu0
      %v2194 = vadd.f32 %v2061, %v2193
      %v2195 = vpop.f32.mrb[0].mxu0
      %v2196 = vpop.f32.mrb[0].mxu0
      %v2197 = vadd.f32 %v2061, %v2196
      %v2198 = vpop.f32.mrb[0].mxu0
      %2199 = vmatprep.mubr.bf16.mxu0 0
      %2200 = vmatmul.mubr.bf16.gmra.mrb[0].mxu0 %v2026
      %v2201 = vpop.f32.mrb[0].mxu0
      %v2202 = vadd.f32 %v2061, %v2201
      %v2203 = vpop.f32.mrb[0].mxu0
      %v2204 = vpop.f32.mrb[0].mxu0
      %v2205 = vadd.f32 %v2061, %v2204
      %v2206 = vpop.f32.mrb[0].mxu0
      %2207 = vmatprep.mubr.bf16.mxu0 0
      %2208 = vmatmul.mubr.bf16.gmra.mrb[0].mxu0 %v2027
      %v2209 = vpop.f32.mrb[0].mxu0
      %v2210 = vadd.f32 %v2061, %v2209
      %v2211 = vpop.f32.mrb[0].mxu0
      %v2212 = vpop.f32.mrb[0].mxu0
      %v2213 = vadd.f32 %v2061, %v2212
      %v2214 = vpop.f32.mrb[0].mxu0
      %2215 = vmatprep.mubr.bf16.mxu0 0
      %2216 = vmatmul.mubr.bf16.gmra.mrb[0].mxu0 %v2028
      %v2217 = vpop.f32.mrb[0].mxu0
      %v2218 = vadd.f32 %v2061, %v2217
      %v2219 = vpop.f32.mrb[0].mxu0
      %v2220 = vpop.f32.mrb[0].mxu0
      %v2221 = vadd.f32 %v2061, %v2220
      %v2222 = vpop.f32.mrb[0].mxu0
      %2223 = vmatprep.mubr.bf16.mxu0 0
      %2224 = vmatmul.mubr.bf16.gmra.mrb[0].mxu0 %v2029
      %v2225 = vpop.f32.mrb[0].mxu0
      %v2226 = vadd.f32 %v2061, %v2225
      %v2227 = vpop.f32.mrb[0].mxu0
      %v2228 = vpop.f32.mrb[0].mxu0
      %v2229 = vadd.f32 %v2061, %v2228
      %v2230 = vpop.f32.mrb[0].mxu0
      %2231 = vmatprep.mubr.bf16.mxu0 0
      %2232 = vmatmul.mubr.bf16.gmra.mrb[0].mxu0 %v2030
      %v2233 = vpop.f32.mrb[0].mxu0
      %v2234 = vadd.f32 %v2061, %v2233
      %v2235 = vpop.f32.mrb[0].mxu0
      %v2236 = vpop.f32.mrb[0].mxu0
      %v2237 = vadd.f32 %v2061, %v2236
      %v2238 = vpop.f32.mrb[0].mxu0
      %2239 = vmatprep.mubr.bf16.mxu0 0
      %2240 = vmatmul.mubr.bf16.gmra.mrb[0].mxu0 %v2031
      %v2241 = vpop.f32.mrb[0].mxu0
      %v2242 = vadd.f32 %v2061, %v2241
      %v2243 = vpop.f32.mrb[0].mxu0
      %v2244 = vpop.f32.mrb[0].mxu0
      %v2245 = vadd.f32 %v2061, %v2244
      %v2246 = vpop.f32.mrb[0].mxu0
      %2247 = vmatprep.mubr.bf16.mxu0 0
      %2248 = vmatmul.mubr.bf16.gmra.mrb[0].mxu0 %v2032
      %v2249 = vpop.f32.mrb[0].mxu0
      %v2250 = vadd.f32 %v2061, %v2249
      %v2251 = vpop.f32.mrb[0].mxu0
      %v2252 = vpop.f32.mrb[0].mxu0
      %v2253 = vadd.f32 %v2061, %v2252
      %v2254 = vpop.f32.mrb[0].mxu0
      %2255 = vmatprep.mubr.bf16.mxu0 0
      %2256 = vmatmul.mubr.bf16.gmra.mrb[0].mxu0 %v2033
      %v2257 = vpop.f32.mrb[0].mxu0
      %v2258 = vadd.f32 %v2061, %v2257
      %v2259 = vpop.f32.mrb[0].mxu0
      %v2260 = vpop.f32.mrb[0].mxu0
      %v2261 = vadd.f32 %v2061, %v2260
      %v2262 = vpop.f32.mrb[0].mxu0
      %2263 = vmatprep.mubr.bf16.mxu0 0
      %2264 = vmatmul.mubr.bf16.gmra.mrb[0].mxu0 %v2034
      %v2265 = vpop.f32.mrb[0].mxu0
      %v2266 = vadd.f32 %v2061, %v2265
      %v2267 = vpop.f32.mrb[0].mxu0
      %v2268 = vpop.f32.mrb[0].mxu0
      %v2269 = vadd.f32 %v2061, %v2268
      %v2270 = vpop.f32.mrb[0].mxu0
      %2271 = vmatprep.mubr.bf16.mxu0 0
      %2272 = vmatmul.mubr.bf16.gmra.mrb[0].mxu0 %v2035
      %v2273 = vpop.f32.mrb[0].mxu0
      %v2274 = vadd.f32 %v2061, %v2273
      %v2275 = vpop.f32.mrb[0].mxu0
      %v2276 = vpop.f32.mrb[0].mxu0
      %v2277 = vadd.f32 %v2061, %v2276
      %v2278 = vpop.f32.mrb[0].mxu0
      %2279 = vmatprep.mubr.bf16.mxu0 0
      %2280 = vmatmul.mubr.bf16.gmra.mrb[0].mxu0 %v2036
      %v2281 = vpop.f32.mrb[0].mxu0
      %v2282 = vadd.f32 %v2061, %v2281
      %v2283 = vpop.f32.mrb[0].mxu0
      %v2284 = vpop.f32.mrb[0].mxu0
      %v2285 = vadd.f32 %v2061, %v2284
      %v2286 = vpop.f32.mrb[0].mxu0
      %2287 = vmatprep.mubr.bf16.mxu0 0
      %2288 = vmatmul.mubr.bf16.gmra.mrb[0].mxu0 %v2037
      %v2289 = vpop.f32.mrb[0].mxu0
      %v2290 = vadd.f32 %v2061, %v2289
      %v2291 = vpop.f32.mrb[0].mxu0
      %v2292 = vpop.f32.mrb[0].mxu0
      %v2293 = vadd.f32 %v2061, %v2292
      %v2294 = vpop.f32.mrb[0].mxu0
      %2295 = vmatprep.mubr.bf16.mxu0 0
      %2296 = vmatmul.mubr.bf16.gmra.mrb[0].mxu0 %v2038
      %v2297 = vpop.f32.mrb[0].mxu0
      %v2298 = vadd.f32 %v2061, %v2297
      %v2299 = vpop.f32.mrb[0].mxu0
      %v2300 = vpop.f32.mrb[0].mxu0
      %v2301 = vadd.f32 %v2061, %v2300
      %v2302 = vpop.f32.mrb[0].mxu0
      %2303 = vmatprep.mubr.bf16.mxu0 0
      %2304 = vmatmul.mubr.bf16.gmra.mrb[0].mxu0 %v2039
      %v2305 = vpop.f32.mrb[0].mxu0
      %v2306 = vadd.f32 %v2061, %v2305
      %v2307 = vpop.f32.mrb[0].mxu0
      %v2308 = vpop.f32.mrb[0].mxu0
      %v2309 = vadd.f32 %v2061, %v2308
      %v2310 = vpop.f32.mrb[0].mxu0
      %2311 = vdwg.mxu0
      %v2312 = vadd.f32 %v1642, %v2146
      %v2313 = vadd.f32 %v1643, %v2149
      %v2314 = vadd.f32 %v1644, %v2154
      %v2315 = vadd.f32 %v1645, %v2157
      %v2316 = vadd.f32 %v1646, %v2162
      %v2317 = vadd.f32 %v1647, %v2165
      %v2318 = vadd.f32 %v1648, %v2170
      %v2319 = vadd.f32 %v1649, %v2173
      %v2320 = vadd.f32 %v1650, %v2178
      %v2321 = vadd.f32 %v1651, %v2181
      %v2322 = vadd.f32 %v1652, %v2186
      %v2323 = vadd.f32 %v1653, %v2189
      %v2324 = vadd.f32 %v1654, %v2194
      %v2325 = vadd.f32 %v1655, %v2197
      %v2326 = vadd.f32 %v1656, %v2202
      %v2327 = vadd.f32 %v1657, %v2205
      %v2328 = vadd.f32 %v1658, %v2210
      %v2329 = vadd.f32 %v1659, %v2213
      %v2330 = vadd.f32 %v1660, %v2218
      %v2331 = vadd.f32 %v1661, %v2221
      %v2332 = vadd.f32 %v1662, %v2226
      %v2333 = vadd.f32 %v1663, %v2229
      %v2334 = vadd.f32 %v1664, %v2234
      %v2335 = vadd.f32 %v1665, %v2237
      %v2336 = vadd.f32 %v1666, %v2242
      %v2337 = vadd.f32 %v1667, %v2245
      %v2338 = vadd.f32 %v1668, %v2250
      %v2339 = vadd.f32 %v1669, %v2253
      %v2340 = vadd.f32 %v1670, %v2258
      %v2341 = vadd.f32 %v1671, %v2261
      %v2342 = vadd.f32 %v1672, %v2266
      %v2343 = vadd.f32 %v1673, %v2269
      %v2344 = vadd.f32 %v1674, %v2274
      %v2345 = vadd.f32 %v1675, %v2277
      %v2346 = vadd.f32 %v1676, %v2282
      %v2347 = vadd.f32 %v1677, %v2285
      %v2348 = vadd.f32 %v1678, %v2290
      %v2349 = vadd.f32 %v1679, %v2293
      %v2350 = vadd.f32 %v1680, %v2298
      %v2351 = vadd.f32 %v1681, %v2301
      %v2352 = vadd.f32 %v1682, %v2306
      %v2353 = vadd.f32 %v1683, %v2309
      %v2354 = vpack.c.bf16 %v2313, %v2312
      %v2355 = vpack.c.bf16 %v2315, %v2314
      %v2356 = vpack.c.bf16 %v2317, %v2316
      %v2357 = vpack.c.bf16 %v2319, %v2318
      %v2358 = vpack.c.bf16 %v2321, %v2320
      %v2359 = vpack.c.bf16 %v2323, %v2322
      %v2360 = vpack.c.bf16 %v2325, %v2324
      %v2361 = vpack.c.bf16 %v2327, %v2326
      %v2362 = vpack.c.bf16 %v2329, %v2328
      %v2363 = vpack.c.bf16 %v2331, %v2330
      %v2364 = vpack.c.bf16 %v2333, %v2332
      %v2365 = vpack.c.bf16 %v2335, %v2334
      %v2366 = vpack.c.bf16 %v2337, %v2336
      %v2367 = vpack.c.bf16 %v2339, %v2338
      %v2368 = vpack.c.bf16 %v2341, %v2340
      %v2369 = vpack.c.bf16 %v2343, %v2342
      %v2370 = vpack.c.bf16 %v2345, %v2344
      %v2371 = vpack.c.bf16 %v2347, %v2346
      %v2372 = vpack.c.bf16 %v2349, %v2348
      %v2373 = vpack.c.bf16 %v2351, %v2350
      %v2374 = vpack.c.bf16 %v2353, %v2352
      %s2375 = scalar_lea.vmem %s4, 64
      %v2376 = vld [vmem:[%s2375] sm:$0xf]
      %v2377 = vld [vmem:[%s2375 + $0x4] sm:$0xf]
      %v2378 = vld [vmem:[%s2375 + $0x8] sm:$0xf]
      %v2379 = vld [vmem:[%s2375 + $0xc] sm:$0xf]
      %v2380 = vld [vmem:[%s2375 + $0x10] sm:$0xf]
      %v2381 = vld [vmem:[%s2375 + $0x14] sm:$0xf]
      %v2382 = vld [vmem:[%s2375 + $0x18] sm:$0xf]
      %v2383 = vld [vmem:[%s2375 + $0x1c] sm:$0xf]
      %v2384 = vld [vmem:[%s2375 + $0x20] sm:$0xf]
      %v2385 = vld [vmem:[%s2375 + $0x24] sm:$0xf]
      %v2386 = vld [vmem:[%s2375 + $0x28] sm:$0xf]
      %v2387 = vld [vmem:[%s2375 + $0x2c] sm:$0xf]
      %v2388 = vld [vmem:[%s2375 + $0x30] sm:$0xf]
      %v2389 = vld [vmem:[%s2375 + $0x34] sm:$0xf]
      %v2390 = vld [vmem:[%s2375 + $0x38] sm:$0xf]
      %v2391 = vld [vmem:[%s2375 + $0x3c] sm:$0xf]
      %s2392 = scalar_lea.vmem %s5, 1
      %v2393 = vld [vmem:[%s2392] sm:$0x1]
      %v2395 = vlaneseq
      %v2396 = vshrl.u32 %v2395, 7
      %v2397 = vsub.s32 0, %v2396
      %v2398 = vrot.slane %v2393, %v2397
      %v2416 = vunpack.c.l.b16 %v2376
      %v2417 = vunpack.c.l.b16 %v2377
      %v2418 = vunpack.c.l.b16 %v2378
      %v2419 = vunpack.c.l.b16 %v2379
      %v2420 = vunpack.c.l.b16 %v2380
      %v2421 = vunpack.c.l.b16 %v2381
      %v2422 = vunpack.c.l.b16 %v2382
      %v2423 = vunpack.c.l.b16 %v2383
      %v2424 = vunpack.c.l.b16 %v2384
      %v2425 = vunpack.c.l.b16 %v2385
      %v2426 = vunpack.c.l.b16 %v2386
      %v2427 = vunpack.c.l.b16 %v2387
      %v2428 = vunpack.c.l.b16 %v2388
      %v2429 = vunpack.c.l.b16 %v2389
      %v2430 = vunpack.c.l.b16 %v2390
      %v2431 = vunpack.c.l.b16 %v2391
      %v2432 = vpack.c.b16 %v2417, %v2416
      %v2433 = vpack.c.b16 %v2419, %v2418
      %v2434 = vpack.c.b16 %v2421, %v2420
      %v2435 = vpack.c.b16 %v2423, %v2422
      %v2436 = vpack.c.b16 %v2425, %v2424
      %v2437 = vpack.c.b16 %v2427, %v2426
      %v2438 = vpack.c.b16 %v2429, %v2428
      %v2439 = vpack.c.b16 %v2431, %v2430
      %2448 = vmatprep.subr.bf16.mxu0 0
      %2449 = vmatpush1.bf16.msra.mxu0 %v2432
      %2450 = vmatprep.subr.bf16.mxu0 0
      %2451 = vmatpush1.bf16.msra.mxu0 %v2433
      %2452 = vmatprep.subr.bf16.mxu0 0
      %2453 = vmatpush1.bf16.msra.mxu0 %v2434
      %2454 = vmatprep.subr.bf16.mxu0 0
      %2455 = vmatpush1.bf16.msra.mxu0 %v2435
      %2456 = vmatprep.subr.bf16.mxu0 0
      %2457 = vmatpush1.bf16.msra.mxu0 %v2436
      %2458 = vmatprep.subr.bf16.mxu0 0
      %2459 = vmatpush1.bf16.msra.mxu0 %v2437
      %2460 = vmatprep.subr.bf16.mxu0 0
      %2461 = vmatpush1.bf16.msra.mxu0 %v2438
      %2462 = vmatprep.subr.bf16.mxu0 0
      %2463 = vmatpush1.bf16.msra.mxu0 %v2439
      %2464 = vmatprep.subr.bf16.mxu0 0
      %2465 = vmatpush1.bf16.msra.mxu0 0
      %2466 = vmatprep.subr.bf16.mxu0 0
      %2467 = vmatpush1.bf16.msra.mxu0 0
      %2468 = vmatprep.subr.bf16.mxu0 0
      %2469 = vmatpush1.bf16.msra.mxu0 0
      %2470 = vmatprep.subr.bf16.mxu0 0
      %2471 = vmatpush1.bf16.msra.mxu0 0
      %2472 = vmatprep.subr.bf16.mxu0 0
      %2473 = vmatpush1.bf16.msra.mxu0 0
      %2474 = vmatprep.subr.bf16.mxu0 0
      %2475 = vmatpush1.bf16.msra.mxu0 0
      %2476 = vmatprep.subr.bf16.mxu0 0
      %2477 = vmatpush1.bf16.msra.mxu0 0
      %2478 = vmatprep.subr.bf16.mxu0 0
      %2479 = vmatpush1.bf16.msra.mxu0 0
      %2480 = vmatprep.mubr.bf16.mxu0 0
      %2481 = vmatmul.mubr.bf16.gmra.mrb[0].mxu0 %v2354
      %v2482 = vpop.f32.mrb[0].mxu0
      %v2483 = vadd.f32 %v2398, %v2482
      %v2484 = vpop.f32.mrb[0].mxu0
      %v2485 = vpop.f32.mrb[0].mxu0
      %v2486 = vadd.f32 %v2398, %v2485
      %v2487 = vpop.f32.mrb[0].mxu0
      %2488 = vmatprep.mubr.bf16.mxu0 0
      %2489 = vmatmul.mubr.bf16.gmra.mrb[0].mxu0 %v2355
      %v2490 = vpop.f32.mrb[0].mxu0
      %v2491 = vadd.f32 %v2398, %v2490
      %v2492 = vpop.f32.mrb[0].mxu0
      %v2493 = vpop.f32.mrb[0].mxu0
      %v2494 = vadd.f32 %v2398, %v2493
      %v2495 = vpop.f32.mrb[0].mxu0
      %2496 = vmatprep.mubr.bf16.mxu0 0
      %2497 = vmatmul.mubr.bf16.gmra.mrb[0].mxu0 %v2356
      %v2498 = vpop.f32.mrb[0].mxu0
      %v2499 = vadd.f32 %v2398, %v2498
      %v2500 = vpop.f32.mrb[0].mxu0
      %v2501 = vpop.f32.mrb[0].mxu0
      %v2502 = vadd.f32 %v2398, %v2501
      %v2503 = vpop.f32.mrb[0].mxu0
      %2504 = vmatprep.mubr.bf16.mxu0 0
      %2505 = vmatmul.mubr.bf16.gmra.mrb[0].mxu0 %v2357
      %v2506 = vpop.f32.mrb[0].mxu0
      %v2507 = vadd.f32 %v2398, %v2506
      %v2508 = vpop.f32.mrb[0].mxu0
      %v2509 = vpop.f32.mrb[0].mxu0
      %v2510 = vadd.f32 %v2398, %v2509
      %v2511 = vpop.f32.mrb[0].mxu0
      %2512 = vmatprep.mubr.bf16.mxu0 0
      %2513 = vmatmul.mubr.bf16.gmra.mrb[0].mxu0 %v2358
      %v2514 = vpop.f32.mrb[0].mxu0
      %v2515 = vadd.f32 %v2398, %v2514
      %v2516 = vpop.f32.mrb[0].mxu0
      %v2517 = vpop.f32.mrb[0].mxu0
      %v2518 = vadd.f32 %v2398, %v2517
      %v2519 = vpop.f32.mrb[0].mxu0
      %2520 = vmatprep.mubr.bf16.mxu0 0
      %2521 = vmatmul.mubr.bf16.gmra.mrb[0].mxu0 %v2359
      %v2522 = vpop.f32.mrb[0].mxu0
      %v2523 = vadd.f32 %v2398, %v2522
      %v2524 = vpop.f32.mrb[0].mxu0
      %v2525 = vpop.f32.mrb[0].mxu0
      %v2526 = vadd.f32 %v2398, %v2525
      %v2527 = vpop.f32.mrb[0].mxu0
      %2528 = vmatprep.mubr.bf16.mxu0 0
      %2529 = vmatmul.mubr.bf16.gmra.mrb[0].mxu0 %v2360
      %v2530 = vpop.f32.mrb[0].mxu0
      %v2531 = vadd.f32 %v2398, %v2530
      %v2532 = vpop.f32.mrb[0].mxu0
      %v2533 = vpop.f32.mrb[0].mxu0
      %v2534 = vadd.f32 %v2398, %v2533
      %v2535 = vpop.f32.mrb[0].mxu0
      %2536 = vmatprep.mubr.bf16.mxu0 0
      %2537 = vmatmul.mubr.bf16.gmra.mrb[0].mxu0 %v2361
      %v2538 = vpop.f32.mrb[0].mxu0
      %v2539 = vadd.f32 %v2398, %v2538
      %v2540 = vpop.f32.mrb[0].mxu0
      %v2541 = vpop.f32.mrb[0].mxu0
      %v2542 = vadd.f32 %v2398, %v2541
      %v2543 = vpop.f32.mrb[0].mxu0
      %2544 = vmatprep.mubr.bf16.mxu0 0
      %2545 = vmatmul.mubr.bf16.gmra.mrb[0].mxu0 %v2362
      %v2546 = vpop.f32.mrb[0].mxu0
      %v2547 = vadd.f32 %v2398, %v2546
      %v2548 = vpop.f32.mrb[0].mxu0
      %v2549 = vpop.f32.mrb[0].mxu0
      %v2550 = vadd.f32 %v2398, %v2549
      %v2551 = vpop.f32.mrb[0].mxu0
      %2552 = vmatprep.mubr.bf16.mxu0 0
      %2553 = vmatmul.mubr.bf16.gmra.mrb[0].mxu0 %v2363
      %v2554 = vpop.f32.mrb[0].mxu0
      %v2555 = vadd.f32 %v2398, %v2554
      %v2556 = vpop.f32.mrb[0].mxu0
      %v2557 = vpop.f32.mrb[0].mxu0
      %v2558 = vadd.f32 %v2398, %v2557
      %v2559 = vpop.f32.mrb[0].mxu0
      %2560 = vmatprep.mubr.bf16.mxu0 0
      %2561 = vmatmul.mubr.bf16.gmra.mrb[0].mxu0 %v2364
      %v2562 = vpop.f32.mrb[0].mxu0
      %v2563 = vadd.f32 %v2398, %v2562
      %v2564 = vpop.f32.mrb[0].mxu0
      %v2565 = vpop.f32.mrb[0].mxu0
      %v2566 = vadd.f32 %v2398, %v2565
      %v2567 = vpop.f32.mrb[0].mxu0
      %2568 = vmatprep.mubr.bf16.mxu0 0
      %2569 = vmatmul.mubr.bf16.gmra.mrb[0].mxu0 %v2365
      %v2570 = vpop.f32.mrb[0].mxu0
      %v2571 = vadd.f32 %v2398, %v2570
      %v2572 = vpop.f32.mrb[0].mxu0
      %v2573 = vpop.f32.mrb[0].mxu0
      %v2574 = vadd.f32 %v2398, %v2573
      %v2575 = vpop.f32.mrb[0].mxu0
      %2576 = vmatprep.mubr.bf16.mxu0 0
      %2577 = vmatmul.mubr.bf16.gmra.mrb[0].mxu0 %v2366
      %v2578 = vpop.f32.mrb[0].mxu0
      %v2579 = vadd.f32 %v2398, %v2578
      %v2580 = vpop.f32.mrb[0].mxu0
      %v2581 = vpop.f32.mrb[0].mxu0
      %v2582 = vadd.f32 %v2398, %v2581
      %v2583 = vpop.f32.mrb[0].mxu0
      %2584 = vmatprep.mubr.bf16.mxu0 0
      %2585 = vmatmul.mubr.bf16.gmra.mrb[0].mxu0 %v2367
      %v2586 = vpop.f32.mrb[0].mxu0
      %v2587 = vadd.f32 %v2398, %v2586
      %v2588 = vpop.f32.mrb[0].mxu0
      %v2589 = vpop.f32.mrb[0].mxu0
      %v2590 = vadd.f32 %v2398, %v2589
      %v2591 = vpop.f32.mrb[0].mxu0
      %2592 = vmatprep.mubr.bf16.mxu0 0
      %2593 = vmatmul.mubr.bf16.gmra.mrb[0].mxu0 %v2368
      %v2594 = vpop.f32.mrb[0].mxu0
      %v2595 = vadd.f32 %v2398, %v2594
      %v2596 = vpop.f32.mrb[0].mxu0
      %v2597 = vpop.f32.mrb[0].mxu0
      %v2598 = vadd.f32 %v2398, %v2597
      %v2599 = vpop.f32.mrb[0].mxu0
      %2600 = vmatprep.mubr.bf16.mxu0 0
      %2601 = vmatmul.mubr.bf16.gmra.mrb[0].mxu0 %v2369
      %v2602 = vpop.f32.mrb[0].mxu0
      %v2603 = vadd.f32 %v2398, %v2602
      %v2604 = vpop.f32.mrb[0].mxu0
      %v2605 = vpop.f32.mrb[0].mxu0
      %v2606 = vadd.f32 %v2398, %v2605
      %v2607 = vpop.f32.mrb[0].mxu0
      %2608 = vmatprep.mubr.bf16.mxu0 0
      %2609 = vmatmul.mubr.bf16.gmra.mrb[0].mxu0 %v2370
      %v2610 = vpop.f32.mrb[0].mxu0
      %v2611 = vadd.f32 %v2398, %v2610
      %v2612 = vpop.f32.mrb[0].mxu0
      %v2613 = vpop.f32.mrb[0].mxu0
      %v2614 = vadd.f32 %v2398, %v2613
      %v2615 = vpop.f32.mrb[0].mxu0
      %2616 = vmatprep.mubr.bf16.mxu0 0
      %2617 = vmatmul.mubr.bf16.gmra.mrb[0].mxu0 %v2371
      %v2618 = vpop.f32.mrb[0].mxu0
      %v2619 = vadd.f32 %v2398, %v2618
      %v2620 = vpop.f32.mrb[0].mxu0
      %v2621 = vpop.f32.mrb[0].mxu0
      %v2622 = vadd.f32 %v2398, %v2621
      %v2623 = vpop.f32.mrb[0].mxu0
      %2624 = vmatprep.mubr.bf16.mxu0 0
      %2625 = vmatmul.mubr.bf16.gmra.mrb[0].mxu0 %v2372
      %v2626 = vpop.f32.mrb[0].mxu0
      %v2627 = vadd.f32 %v2398, %v2626
      %v2628 = vpop.f32.mrb[0].mxu0
      %v2629 = vpop.f32.mrb[0].mxu0
      %v2630 = vadd.f32 %v2398, %v2629
      %v2631 = vpop.f32.mrb[0].mxu0
      %2632 = vmatprep.mubr.bf16.mxu0 0
      %2633 = vmatmul.mubr.bf16.gmra.mrb[0].mxu0 %v2373
      %v2634 = vpop.f32.mrb[0].mxu0
      %v2635 = vadd.f32 %v2398, %v2634
      %v2636 = vpop.f32.mrb[0].mxu0
      %v2637 = vpop.f32.mrb[0].mxu0
      %v2638 = vadd.f32 %v2398, %v2637
      %v2639 = vpop.f32.mrb[0].mxu0
      %2640 = vmatprep.mubr.bf16.mxu0 0
      %2641 = vmatmul.mubr.bf16.gmra.mrb[0].mxu0 %v2374
      %v2642 = vpop.f32.mrb[0].mxu0
      %v2643 = vadd.f32 %v2398, %v2642
      %v2644 = vpop.f32.mrb[0].mxu0
      %v2645 = vpop.f32.mrb[0].mxu0
      %v2646 = vadd.f32 %v2398, %v2645
      %v2647 = vpop.f32.mrb[0].mxu0
      %2648 = vdwg.mxu0
      %v2649 = vmax.f32 %v2483, 0.0
      %v2650 = vmax.f32 %v2486, 0.0
      %v2651 = vmax.f32 %v2491, 0.0
      %v2652 = vmax.f32 %v2494, 0.0
      %v2653 = vmax.f32 %v2499, 0.0
      %v2654 = vmax.f32 %v2502, 0.0
      %v2655 = vmax.f32 %v2507, 0.0
      %v2656 = vmax.f32 %v2510, 0.0
      %v2657 = vmax.f32 %v2515, 0.0
      %v2658 = vmax.f32 %v2518, 0.0
      %v2659 = vmax.f32 %v2523, 0.0
      %v2660 = vmax.f32 %v2526, 0.0
      %v2661 = vmax.f32 %v2531, 0.0
      %v2662 = vmax.f32 %v2534, 0.0
      %v2663 = vmax.f32 %v2539, 0.0
      %v2664 = vmax.f32 %v2542, 0.0
      %v2665 = vmax.f32 %v2547, 0.0
      %v2666 = vmax.f32 %v2550, 0.0
      %v2667 = vmax.f32 %v2555, 0.0
      %v2668 = vmax.f32 %v2558, 0.0
      %v2669 = vmax.f32 %v2563, 0.0
      %v2670 = vmax.f32 %v2566, 0.0
      %v2671 = vmax.f32 %v2571, 0.0
      %v2672 = vmax.f32 %v2574, 0.0
      %v2673 = vmax.f32 %v2579, 0.0
      %v2674 = vmax.f32 %v2582, 0.0
      %v2675 = vmax.f32 %v2587, 0.0
      %v2676 = vmax.f32 %v2590, 0.0
      %v2677 = vmax.f32 %v2595, 0.0
      %v2678 = vmax.f32 %v2598, 0.0
      %v2679 = vmax.f32 %v2603, 0.0
      %v2680 = vmax.f32 %v2606, 0.0
      %v2681 = vmax.f32 %v2611, 0.0
      %v2682 = vmax.f32 %v2614, 0.0
      %v2683 = vmax.f32 %v2619, 0.0
      %v2684 = vmax.f32 %v2622, 0.0
      %v2685 = vmax.f32 %v2627, 0.0
      %v2686 = vmax.f32 %v2630, 0.0
      %v2687 = vmax.f32 %v2635, 0.0
      %v2688 = vmax.f32 %v2638, 0.0
      %v2689 = vmax.f32 %v2643, 0.0
      %v2690 = vmax.f32 %v2646, 0.0
      %v2691 = vpack.c.bf16 %v2650, %v2649
      %v2692 = vpack.c.bf16 %v2652, %v2651
      %v2693 = vpack.c.bf16 %v2654, %v2653
      %v2694 = vpack.c.bf16 %v2656, %v2655
      %v2695 = vpack.c.bf16 %v2658, %v2657
      %v2696 = vpack.c.bf16 %v2660, %v2659
      %v2697 = vpack.c.bf16 %v2662, %v2661
      %v2698 = vpack.c.bf16 %v2664, %v2663
      %v2699 = vpack.c.bf16 %v2666, %v2665
      %v2700 = vpack.c.bf16 %v2668, %v2667
      %v2701 = vpack.c.bf16 %v2670, %v2669
      %v2702 = vpack.c.bf16 %v2672, %v2671
      %v2703 = vpack.c.bf16 %v2674, %v2673
      %v2704 = vpack.c.bf16 %v2676, %v2675
      %v2705 = vpack.c.bf16 %v2678, %v2677
      %v2706 = vpack.c.bf16 %v2680, %v2679
      %v2707 = vpack.c.bf16 %v2682, %v2681
      %v2708 = vpack.c.bf16 %v2684, %v2683
      %v2709 = vpack.c.bf16 %v2686, %v2685
      %v2710 = vpack.c.bf16 %v2688, %v2687
      %v2711 = vpack.c.bf16 %v2690, %v2689
      %s2712 = scalar_lea.vmem %s6, 64
      %v2713 = vld [vmem:[%s2712] sm:$0xf]
      %v2714 = vld [vmem:[%s2712 + $0x4] sm:$0xf]
      %v2715 = vld [vmem:[%s2712 + $0x8] sm:$0xf]
      %v2716 = vld [vmem:[%s2712 + $0xc] sm:$0xf]
      %v2717 = vld [vmem:[%s2712 + $0x10] sm:$0xf]
      %v2718 = vld [vmem:[%s2712 + $0x14] sm:$0xf]
      %v2719 = vld [vmem:[%s2712 + $0x18] sm:$0xf]
      %v2720 = vld [vmem:[%s2712 + $0x1c] sm:$0xf]
      %v2721 = vld [vmem:[%s2712 + $0x20] sm:$0xf]
      %v2722 = vld [vmem:[%s2712 + $0x24] sm:$0xf]
      %v2723 = vld [vmem:[%s2712 + $0x28] sm:$0xf]
      %v2724 = vld [vmem:[%s2712 + $0x2c] sm:$0xf]
      %v2725 = vld [vmem:[%s2712 + $0x30] sm:$0xf]
      %v2726 = vld [vmem:[%s2712 + $0x34] sm:$0xf]
      %v2727 = vld [vmem:[%s2712 + $0x38] sm:$0xf]
      %v2728 = vld [vmem:[%s2712 + $0x3c] sm:$0xf]
      %s2729 = scalar_lea.vmem %s7, 1
      %v2730 = vld [vmem:[%s2729] sm:$0x1]
      %v2732 = vlaneseq
      %v2733 = vshrl.u32 %v2732, 7
      %v2734 = vsub.s32 0, %v2733
      %v2735 = vrot.slane %v2730, %v2734
      %v2753 = vunpack.c.l.b16 %v2713
      %v2754 = vunpack.c.l.b16 %v2714
      %v2755 = vunpack.c.l.b16 %v2715
      %v2756 = vunpack.c.l.b16 %v2716
      %v2757 = vunpack.c.l.b16 %v2717
      %v2758 = vunpack.c.l.b16 %v2718
      %v2759 = vunpack.c.l.b16 %v2719
      %v2760 = vunpack.c.l.b16 %v2720
      %v2761 = vunpack.c.l.b16 %v2721
      %v2762 = vunpack.c.l.b16 %v2722
      %v2763 = vunpack.c.l.b16 %v2723
      %v2764 = vunpack.c.l.b16 %v2724
      %v2765 = vunpack.c.l.b16 %v2725
      %v2766 = vunpack.c.l.b16 %v2726
      %v2767 = vunpack.c.l.b16 %v2727
      %v2768 = vunpack.c.l.b16 %v2728
      %v2769 = vpack.c.b16 %v2754, %v2753
      %v2770 = vpack.c.b16 %v2756, %v2755
      %v2771 = vpack.c.b16 %v2758, %v2757
      %v2772 = vpack.c.b16 %v2760, %v2759
      %v2773 = vpack.c.b16 %v2762, %v2761
      %v2774 = vpack.c.b16 %v2764, %v2763
      %v2775 = vpack.c.b16 %v2766, %v2765
      %v2776 = vpack.c.b16 %v2768, %v2767
      %2785 = vmatprep.subr.bf16.mxu0 0
      %2786 = vmatpush1.bf16.msra.mxu0 %v2769
      %2787 = vmatprep.subr.bf16.mxu0 0
      %2788 = vmatpush1.bf16.msra.mxu0 %v2770
      %2789 = vmatprep.subr.bf16.mxu0 0
      %2790 = vmatpush1.bf16.msra.mxu0 %v2771
      %2791 = vmatprep.subr.bf16.mxu0 0
      %2792 = vmatpush1.bf16.msra.mxu0 %v2772
      %2793 = vmatprep.subr.bf16.mxu0 0
      %2794 = vmatpush1.bf16.msra.mxu0 %v2773
      %2795 = vmatprep.subr.bf16.mxu0 0
      %2796 = vmatpush1.bf16.msra.mxu0 %v2774
      %2797 = vmatprep.subr.bf16.mxu0 0
      %2798 = vmatpush1.bf16.msra.mxu0 %v2775
      %2799 = vmatprep.subr.bf16.mxu0 0
      %2800 = vmatpush1.bf16.msra.mxu0 %v2776
      %2801 = vmatprep.subr.bf16.mxu0 0
      %2802 = vmatpush1.bf16.msra.mxu0 0
      %2803 = vmatprep.subr.bf16.mxu0 0
      %2804 = vmatpush1.bf16.msra.mxu0 0
      %2805 = vmatprep.subr.bf16.mxu0 0
      %2806 = vmatpush1.bf16.msra.mxu0 0
      %2807 = vmatprep.subr.bf16.mxu0 0
      %2808 = vmatpush1.bf16.msra.mxu0 0
      %2809 = vmatprep.subr.bf16.mxu0 0
      %2810 = vmatpush1.bf16.msra.mxu0 0
      %2811 = vmatprep.subr.bf16.mxu0 0
      %2812 = vmatpush1.bf16.msra.mxu0 0
      %2813 = vmatprep.subr.bf16.mxu0 0
      %2814 = vmatpush1.bf16.msra.mxu0 0
      %2815 = vmatprep.subr.bf16.mxu0 0
      %2816 = vmatpush1.bf16.msra.mxu0 0
      %2817 = vmatprep.mubr.bf16.mxu0 0
      %2818 = vmatmul.mubr.bf16.gmra.mrb[0].mxu0 %v2691
      %v2819 = vpop.f32.mrb[0].mxu0
      %v2820 = vadd.f32 %v2735, %v2819
      %v2821 = vpop.f32.mrb[0].mxu0
      %v2822 = vpop.f32.mrb[0].mxu0
      %v2823 = vadd.f32 %v2735, %v2822
      %v2824 = vpop.f32.mrb[0].mxu0
      %2825 = vmatprep.mubr.bf16.mxu0 0
      %2826 = vmatmul.mubr.bf16.gmra.mrb[0].mxu0 %v2692
      %v2827 = vpop.f32.mrb[0].mxu0
      %v2828 = vadd.f32 %v2735, %v2827
      %v2829 = vpop.f32.mrb[0].mxu0
      %v2830 = vpop.f32.mrb[0].mxu0
      %v2831 = vadd.f32 %v2735, %v2830
      %v2832 = vpop.f32.mrb[0].mxu0
      %2833 = vmatprep.mubr.bf16.mxu0 0
      %2834 = vmatmul.mubr.bf16.gmra.mrb[0].mxu0 %v2693
      %v2835 = vpop.f32.mrb[0].mxu0
      %v2836 = vadd.f32 %v2735, %v2835
      %v2837 = vpop.f32.mrb[0].mxu0
      %v2838 = vpop.f32.mrb[0].mxu0
      %v2839 = vadd.f32 %v2735, %v2838
      %v2840 = vpop.f32.mrb[0].mxu0
      %2841 = vmatprep.mubr.bf16.mxu0 0
      %2842 = vmatmul.mubr.bf16.gmra.mrb[0].mxu0 %v2694
      %v2843 = vpop.f32.mrb[0].mxu0
      %v2844 = vadd.f32 %v2735, %v2843
      %v2845 = vpop.f32.mrb[0].mxu0
      %v2846 = vpop.f32.mrb[0].mxu0
      %v2847 = vadd.f32 %v2735, %v2846
      %v2848 = vpop.f32.mrb[0].mxu0
      %2849 = vmatprep.mubr.bf16.mxu0 0
      %2850 = vmatmul.mubr.bf16.gmra.mrb[0].mxu0 %v2695
      %v2851 = vpop.f32.mrb[0].mxu0
      %v2852 = vadd.f32 %v2735, %v2851
      %v2853 = vpop.f32.mrb[0].mxu0
      %v2854 = vpop.f32.mrb[0].mxu0
      %v2855 = vadd.f32 %v2735, %v2854
      %v2856 = vpop.f32.mrb[0].mxu0
      %2857 = vmatprep.mubr.bf16.mxu0 0
      %2858 = vmatmul.mubr.bf16.gmra.mrb[0].mxu0 %v2696
      %v2859 = vpop.f32.mrb[0].mxu0
      %v2860 = vadd.f32 %v2735, %v2859
      %v2861 = vpop.f32.mrb[0].mxu0
      %v2862 = vpop.f32.mrb[0].mxu0
      %v2863 = vadd.f32 %v2735, %v2862
      %v2864 = vpop.f32.mrb[0].mxu0
      %2865 = vmatprep.mubr.bf16.mxu0 0
      %2866 = vmatmul.mubr.bf16.gmra.mrb[0].mxu0 %v2697
      %v2867 = vpop.f32.mrb[0].mxu0
      %v2868 = vadd.f32 %v2735, %v2867
      %v2869 = vpop.f32.mrb[0].mxu0
      %v2870 = vpop.f32.mrb[0].mxu0
      %v2871 = vadd.f32 %v2735, %v2870
      %v2872 = vpop.f32.mrb[0].mxu0
      %2873 = vmatprep.mubr.bf16.mxu0 0
      %2874 = vmatmul.mubr.bf16.gmra.mrb[0].mxu0 %v2698
      %v2875 = vpop.f32.mrb[0].mxu0
      %v2876 = vadd.f32 %v2735, %v2875
      %v2877 = vpop.f32.mrb[0].mxu0
      %v2878 = vpop.f32.mrb[0].mxu0
      %v2879 = vadd.f32 %v2735, %v2878
      %v2880 = vpop.f32.mrb[0].mxu0
      %2881 = vmatprep.mubr.bf16.mxu0 0
      %2882 = vmatmul.mubr.bf16.gmra.mrb[0].mxu0 %v2699
      %v2883 = vpop.f32.mrb[0].mxu0
      %v2884 = vadd.f32 %v2735, %v2883
      %v2885 = vpop.f32.mrb[0].mxu0
      %v2886 = vpop.f32.mrb[0].mxu0
      %v2887 = vadd.f32 %v2735, %v2886
      %v2888 = vpop.f32.mrb[0].mxu0
      %2889 = vmatprep.mubr.bf16.mxu0 0
      %2890 = vmatmul.mubr.bf16.gmra.mrb[0].mxu0 %v2700
      %v2891 = vpop.f32.mrb[0].mxu0
      %v2892 = vadd.f32 %v2735, %v2891
      %v2893 = vpop.f32.mrb[0].mxu0
      %v2894 = vpop.f32.mrb[0].mxu0
      %v2895 = vadd.f32 %v2735, %v2894
      %v2896 = vpop.f32.mrb[0].mxu0
      %2897 = vmatprep.mubr.bf16.mxu0 0
      %2898 = vmatmul.mubr.bf16.gmra.mrb[0].mxu0 %v2701
      %v2899 = vpop.f32.mrb[0].mxu0
      %v2900 = vadd.f32 %v2735, %v2899
      %v2901 = vpop.f32.mrb[0].mxu0
      %v2902 = vpop.f32.mrb[0].mxu0
      %v2903 = vadd.f32 %v2735, %v2902
      %v2904 = vpop.f32.mrb[0].mxu0
      %2905 = vmatprep.mubr.bf16.mxu0 0
      %2906 = vmatmul.mubr.bf16.gmra.mrb[0].mxu0 %v2702
      %v2907 = vpop.f32.mrb[0].mxu0
      %v2908 = vadd.f32 %v2735, %v2907
      %v2909 = vpop.f32.mrb[0].mxu0
      %v2910 = vpop.f32.mrb[0].mxu0
      %v2911 = vadd.f32 %v2735, %v2910
      %v2912 = vpop.f32.mrb[0].mxu0
      %2913 = vmatprep.mubr.bf16.mxu0 0
      %2914 = vmatmul.mubr.bf16.gmra.mrb[0].mxu0 %v2703
      %v2915 = vpop.f32.mrb[0].mxu0
      %v2916 = vadd.f32 %v2735, %v2915
      %v2917 = vpop.f32.mrb[0].mxu0
      %v2918 = vpop.f32.mrb[0].mxu0
      %v2919 = vadd.f32 %v2735, %v2918
      %v2920 = vpop.f32.mrb[0].mxu0
      %2921 = vmatprep.mubr.bf16.mxu0 0
      %2922 = vmatmul.mubr.bf16.gmra.mrb[0].mxu0 %v2704
      %v2923 = vpop.f32.mrb[0].mxu0
      %v2924 = vadd.f32 %v2735, %v2923
      %v2925 = vpop.f32.mrb[0].mxu0
      %v2926 = vpop.f32.mrb[0].mxu0
      %v2927 = vadd.f32 %v2735, %v2926
      %v2928 = vpop.f32.mrb[0].mxu0
      %2929 = vmatprep.mubr.bf16.mxu0 0
      %2930 = vmatmul.mubr.bf16.gmra.mrb[0].mxu0 %v2705
      %v2931 = vpop.f32.mrb[0].mxu0
      %v2932 = vadd.f32 %v2735, %v2931
      %v2933 = vpop.f32.mrb[0].mxu0
      %v2934 = vpop.f32.mrb[0].mxu0
      %v2935 = vadd.f32 %v2735, %v2934
      %v2936 = vpop.f32.mrb[0].mxu0
      %2937 = vmatprep.mubr.bf16.mxu0 0
      %2938 = vmatmul.mubr.bf16.gmra.mrb[0].mxu0 %v2706
      %v2939 = vpop.f32.mrb[0].mxu0
      %v2940 = vadd.f32 %v2735, %v2939
      %v2941 = vpop.f32.mrb[0].mxu0
      %v2942 = vpop.f32.mrb[0].mxu0
      %v2943 = vadd.f32 %v2735, %v2942
      %v2944 = vpop.f32.mrb[0].mxu0
      %2945 = vmatprep.mubr.bf16.mxu0 0
      %2946 = vmatmul.mubr.bf16.gmra.mrb[0].mxu0 %v2707
      %v2947 = vpop.f32.mrb[0].mxu0
      %v2948 = vadd.f32 %v2735, %v2947
      %v2949 = vpop.f32.mrb[0].mxu0
      %v2950 = vpop.f32.mrb[0].mxu0
      %v2951 = vadd.f32 %v2735, %v2950
      %v2952 = vpop.f32.mrb[0].mxu0
      %2953 = vmatprep.mubr.bf16.mxu0 0
      %2954 = vmatmul.mubr.bf16.gmra.mrb[0].mxu0 %v2708
      %v2955 = vpop.f32.mrb[0].mxu0
      %v2956 = vadd.f32 %v2735, %v2955
      %v2957 = vpop.f32.mrb[0].mxu0
      %v2958 = vpop.f32.mrb[0].mxu0
      %v2959 = vadd.f32 %v2735, %v2958
      %v2960 = vpop.f32.mrb[0].mxu0
      %2961 = vmatprep.mubr.bf16.mxu0 0
      %2962 = vmatmul.mubr.bf16.gmra.mrb[0].mxu0 %v2709
      %v2963 = vpop.f32.mrb[0].mxu0
      %v2964 = vadd.f32 %v2735, %v2963
      %v2965 = vpop.f32.mrb[0].mxu0
      %v2966 = vpop.f32.mrb[0].mxu0
      %v2967 = vadd.f32 %v2735, %v2966
      %v2968 = vpop.f32.mrb[0].mxu0
      %2969 = vmatprep.mubr.bf16.mxu0 0
      %2970 = vmatmul.mubr.bf16.gmra.mrb[0].mxu0 %v2710
      %v2971 = vpop.f32.mrb[0].mxu0
      %v2972 = vadd.f32 %v2735, %v2971
      %v2973 = vpop.f32.mrb[0].mxu0
      %v2974 = vpop.f32.mrb[0].mxu0
      %v2975 = vadd.f32 %v2735, %v2974
      %v2976 = vpop.f32.mrb[0].mxu0
      %2977 = vmatprep.mubr.bf16.mxu0 0
      %2978 = vmatmul.mubr.bf16.gmra.mrb[0].mxu0 %v2711
      %v2979 = vpop.f32.mrb[0].mxu0
      %v2980 = vadd.f32 %v2735, %v2979
      %v2981 = vpop.f32.mrb[0].mxu0
      %v2982 = vpop.f32.mrb[0].mxu0
      %v2983 = vadd.f32 %v2735, %v2982
      %v2984 = vpop.f32.mrb[0].mxu0
      %2985 = vdwg.mxu0
      %v2986 = vadd.f32 %v2312, %v2820
      %v2987 = vadd.f32 %v2313, %v2823
      %v2988 = vadd.f32 %v2314, %v2828
      %v2989 = vadd.f32 %v2315, %v2831
      %v2990 = vadd.f32 %v2316, %v2836
      %v2991 = vadd.f32 %v2317, %v2839
      %v2992 = vadd.f32 %v2318, %v2844
      %v2993 = vadd.f32 %v2319, %v2847
      %v2994 = vadd.f32 %v2320, %v2852
      %v2995 = vadd.f32 %v2321, %v2855
      %v2996 = vadd.f32 %v2322, %v2860
      %v2997 = vadd.f32 %v2323, %v2863
      %v2998 = vadd.f32 %v2324, %v2868
      %v2999 = vadd.f32 %v2325, %v2871
      %v3000 = vadd.f32 %v2326, %v2876
      %v3001 = vadd.f32 %v2327, %v2879
      %v3002 = vadd.f32 %v2328, %v2884
      %v3003 = vadd.f32 %v2329, %v2887
      %v3004 = vadd.f32 %v2330, %v2892
      %v3005 = vadd.f32 %v2331, %v2895
      %v3006 = vadd.f32 %v2332, %v2900
      %v3007 = vadd.f32 %v2333, %v2903
      %v3008 = vadd.f32 %v2334, %v2908
      %v3009 = vadd.f32 %v2335, %v2911
      %v3010 = vadd.f32 %v2336, %v2916
      %v3011 = vadd.f32 %v2337, %v2919
      %v3012 = vadd.f32 %v2338, %v2924
      %v3013 = vadd.f32 %v2339, %v2927
      %v3014 = vadd.f32 %v2340, %v2932
      %v3015 = vadd.f32 %v2341, %v2935
      %v3016 = vadd.f32 %v2342, %v2940
      %v3017 = vadd.f32 %v2343, %v2943
      %v3018 = vadd.f32 %v2344, %v2948
      %v3019 = vadd.f32 %v2345, %v2951
      %v3020 = vadd.f32 %v2346, %v2956
      %v3021 = vadd.f32 %v2347, %v2959
      %v3022 = vadd.f32 %v2348, %v2964
      %v3023 = vadd.f32 %v2349, %v2967
      %v3024 = vadd.f32 %v2350, %v2972
      %v3025 = vadd.f32 %v2351, %v2975
      %v3026 = vadd.f32 %v2352, %v2980
      %v3027 = vadd.f32 %v2353, %v2983
      %v3028 = vpack.c.bf16 %v2987, %v2986
      %v3029 = vpack.c.bf16 %v2989, %v2988
      %v3030 = vpack.c.bf16 %v2991, %v2990
      %v3031 = vpack.c.bf16 %v2993, %v2992
      %v3032 = vpack.c.bf16 %v2995, %v2994
      %v3033 = vpack.c.bf16 %v2997, %v2996
      %v3034 = vpack.c.bf16 %v2999, %v2998
      %v3035 = vpack.c.bf16 %v3001, %v3000
      %v3036 = vpack.c.bf16 %v3003, %v3002
      %v3037 = vpack.c.bf16 %v3005, %v3004
      %v3038 = vpack.c.bf16 %v3007, %v3006
      %v3039 = vpack.c.bf16 %v3009, %v3008
      %v3040 = vpack.c.bf16 %v3011, %v3010
      %v3041 = vpack.c.bf16 %v3013, %v3012
      %v3042 = vpack.c.bf16 %v3015, %v3014
      %v3043 = vpack.c.bf16 %v3017, %v3016
      %v3044 = vpack.c.bf16 %v3019, %v3018
      %v3045 = vpack.c.bf16 %v3021, %v3020
      %v3046 = vpack.c.bf16 %v3023, %v3022
      %v3047 = vpack.c.bf16 %v3025, %v3024
      %v3048 = vpack.c.bf16 %v3027, %v3026
      %s3049 = scalar_lea.vmem %s4, 128
      %v3050 = vld [vmem:[%s3049] sm:$0xf]
      %v3051 = vld [vmem:[%s3049 + $0x4] sm:$0xf]
      %v3052 = vld [vmem:[%s3049 + $0x8] sm:$0xf]
      %v3053 = vld [vmem:[%s3049 + $0xc] sm:$0xf]
      %v3054 = vld [vmem:[%s3049 + $0x10] sm:$0xf]
      %v3055 = vld [vmem:[%s3049 + $0x14] sm:$0xf]
      %v3056 = vld [vmem:[%s3049 + $0x18] sm:$0xf]
      %v3057 = vld [vmem:[%s3049 + $0x1c] sm:$0xf]
      %v3058 = vld [vmem:[%s3049 + $0x20] sm:$0xf]
      %v3059 = vld [vmem:[%s3049 + $0x24] sm:$0xf]
      %v3060 = vld [vmem:[%s3049 + $0x28] sm:$0xf]
      %v3061 = vld [vmem:[%s3049 + $0x2c] sm:$0xf]
      %v3062 = vld [vmem:[%s3049 + $0x30] sm:$0xf]
      %v3063 = vld [vmem:[%s3049 + $0x34] sm:$0xf]
      %v3064 = vld [vmem:[%s3049 + $0x38] sm:$0xf]
      %v3065 = vld [vmem:[%s3049 + $0x3c] sm:$0xf]
      %s3066 = scalar_lea.vmem %s5, 2
      %v3067 = vld [vmem:[%s3066] sm:$0x1]
      %v3069 = vlaneseq
      %v3070 = vshrl.u32 %v3069, 7
      %v3071 = vsub.s32 0, %v3070
      %v3072 = vrot.slane %v3067, %v3071
      %v3090 = vunpack.c.l.b16 %v3050
      %v3091 = vunpack.c.l.b16 %v3051
      %v3092 = vunpack.c.l.b16 %v3052
      %v3093 = vunpack.c.l.b16 %v3053
      %v3094 = vunpack.c.l.b16 %v3054
      %v3095 = vunpack.c.l.b16 %v3055
      %v3096 = vunpack.c.l.b16 %v3056
      %v3097 = vunpack.c.l.b16 %v3057
      %v3098 = vunpack.c.l.b16 %v3058
      %v3099 = vunpack.c.l.b16 %v3059
      %v3100 = vunpack.c.l.b16 %v3060
      %v3101 = vunpack.c.l.b16 %v3061
      %v3102 = vunpack.c.l.b16 %v3062
      %v3103 = vunpack.c.l.b16 %v3063
      %v3104 = vunpack.c.l.b16 %v3064
      %v3105 = vunpack.c.l.b16 %v3065
      %v3106 = vpack.c.b16 %v3091, %v3090
      %v3107 = vpack.c.b16 %v3093, %v3092
      %v3108 = vpack.c.b16 %v3095, %v3094
      %v3109 = vpack.c.b16 %v3097, %v3096
      %v3110 = vpack.c.b16 %v3099, %v3098
      %v3111 = vpack.c.b16 %v3101, %v3100
      %v3112 = vpack.c.b16 %v3103, %v3102
      %v3113 = vpack.c.b16 %v3105, %v3104
      %3122 = vmatprep.subr.bf16.mxu0 0
      %3123 = vmatpush1.bf16.msra.mxu0 %v3106
      %3124 = vmatprep.subr.bf16.mxu0 0
      %3125 = vmatpush1.bf16.msra.mxu0 %v3107
      %3126 = vmatprep.subr.bf16.mxu0 0
      %3127 = vmatpush1.bf16.msra.mxu0 %v3108
      %3128 = vmatprep.subr.bf16.mxu0 0
      %3129 = vmatpush1.bf16.msra.mxu0 %v3109
      %3130 = vmatprep.subr.bf16.mxu0 0
      %3131 = vmatpush1.bf16.msra.mxu0 %v3110
      %3132 = vmatprep.subr.bf16.mxu0 0
      %3133 = vmatpush1.bf16.msra.mxu0 %v3111
      %3134 = vmatprep.subr.bf16.mxu0 0
      %3135 = vmatpush1.bf16.msra.mxu0 %v3112
      %3136 = vmatprep.subr.bf16.mxu0 0
      %3137 = vmatpush1.bf16.msra.mxu0 %v3113
      %3138 = vmatprep.subr.bf16.mxu0 0
      %3139 = vmatpush1.bf16.msra.mxu0 0
      %3140 = vmatprep.subr.bf16.mxu0 0
      %3141 = vmatpush1.bf16.msra.mxu0 0
      %3142 = vmatprep.subr.bf16.mxu0 0
      %3143 = vmatpush1.bf16.msra.mxu0 0
      %3144 = vmatprep.subr.bf16.mxu0 0
      %3145 = vmatpush1.bf16.msra.mxu0 0
      %3146 = vmatprep.subr.bf16.mxu0 0
      %3147 = vmatpush1.bf16.msra.mxu0 0
      %3148 = vmatprep.subr.bf16.mxu0 0
      %3149 = vmatpush1.bf16.msra.mxu0 0
      %3150 = vmatprep.subr.bf16.mxu0 0
      %3151 = vmatpush1.bf16.msra.mxu0 0
      %3152 = vmatprep.subr.bf16.mxu0 0
      %3153 = vmatpush1.bf16.msra.mxu0 0
      %3154 = vmatprep.mubr.bf16.mxu0 0
      %3155 = vmatmul.mubr.bf16.gmra.mrb[0].mxu0 %v3028
      %v3156 = vpop.f32.mrb[0].mxu0
      %v3157 = vadd.f32 %v3072, %v3156
      %v3158 = vpop.f32.mrb[0].mxu0
      %v3159 = vpop.f32.mrb[0].mxu0
      %v3160 = vadd.f32 %v3072, %v3159
      %v3161 = vpop.f32.mrb[0].mxu0
      %3162 = vmatprep.mubr.bf16.mxu0 0
      %3163 = vmatmul.mubr.bf16.gmra.mrb[0].mxu0 %v3029
      %v3164 = vpop.f32.mrb[0].mxu0
      %v3165 = vadd.f32 %v3072, %v3164
      %v3166 = vpop.f32.mrb[0].mxu0
      %v3167 = vpop.f32.mrb[0].mxu0
      %v3168 = vadd.f32 %v3072, %v3167
      %v3169 = vpop.f32.mrb[0].mxu0
      %3170 = vmatprep.mubr.bf16.mxu0 0
      %3171 = vmatmul.mubr.bf16.gmra.mrb[0].mxu0 %v3030
      %v3172 = vpop.f32.mrb[0].mxu0
      %v3173 = vadd.f32 %v3072, %v3172
      %v3174 = vpop.f32.mrb[0].mxu0
      %v3175 = vpop.f32.mrb[0].mxu0
      %v3176 = vadd.f32 %v3072, %v3175
      %v3177 = vpop.f32.mrb[0].mxu0
      %3178 = vmatprep.mubr.bf16.mxu0 0
      %3179 = vmatmul.mubr.bf16.gmra.mrb[0].mxu0 %v3031
      %v3180 = vpop.f32.mrb[0].mxu0
      %v3181 = vadd.f32 %v3072, %v3180
      %v3182 = vpop.f32.mrb[0].mxu0
      %v3183 = vpop.f32.mrb[0].mxu0
      %v3184 = vadd.f32 %v3072, %v3183
      %v3185 = vpop.f32.mrb[0].mxu0
      %3186 = vmatprep.mubr.bf16.mxu0 0
      %3187 = vmatmul.mubr.bf16.gmra.mrb[0].mxu0 %v3032
      %v3188 = vpop.f32.mrb[0].mxu0
      %v3189 = vadd.f32 %v3072, %v3188
      %v3190 = vpop.f32.mrb[0].mxu0
      %v3191 = vpop.f32.mrb[0].mxu0
      %v3192 = vadd.f32 %v3072, %v3191
      %v3193 = vpop.f32.mrb[0].mxu0
      %3194 = vmatprep.mubr.bf16.mxu0 0
      %3195 = vmatmul.mubr.bf16.gmra.mrb[0].mxu0 %v3033
      %v3196 = vpop.f32.mrb[0].mxu0
      %v3197 = vadd.f32 %v3072, %v3196
      %v3198 = vpop.f32.mrb[0].mxu0
      %v3199 = vpop.f32.mrb[0].mxu0
      %v3200 = vadd.f32 %v3072, %v3199
      %v3201 = vpop.f32.mrb[0].mxu0
      %3202 = vmatprep.mubr.bf16.mxu0 0
      %3203 = vmatmul.mubr.bf16.gmra.mrb[0].mxu0 %v3034
      %v3204 = vpop.f32.mrb[0].mxu0
      %v3205 = vadd.f32 %v3072, %v3204
      %v3206 = vpop.f32.mrb[0].mxu0
      %v3207 = vpop.f32.mrb[0].mxu0
      %v3208 = vadd.f32 %v3072, %v3207
      %v3209 = vpop.f32.mrb[0].mxu0
      %3210 = vmatprep.mubr.bf16.mxu0 0
      %3211 = vmatmul.mubr.bf16.gmra.mrb[0].mxu0 %v3035
      %v3212 = vpop.f32.mrb[0].mxu0
      %v3213 = vadd.f32 %v3072, %v3212
      %v3214 = vpop.f32.mrb[0].mxu0
      %v3215 = vpop.f32.mrb[0].mxu0
      %v3216 = vadd.f32 %v3072, %v3215
      %v3217 = vpop.f32.mrb[0].mxu0
      %3218 = vmatprep.mubr.bf16.mxu0 0
      %3219 = vmatmul.mubr.bf16.gmra.mrb[0].mxu0 %v3036
      %v3220 = vpop.f32.mrb[0].mxu0
      %v3221 = vadd.f32 %v3072, %v3220
      %v3222 = vpop.f32.mrb[0].mxu0
      %v3223 = vpop.f32.mrb[0].mxu0
      %v3224 = vadd.f32 %v3072, %v3223
      %v3225 = vpop.f32.mrb[0].mxu0
      %3226 = vmatprep.mubr.bf16.mxu0 0
      %3227 = vmatmul.mubr.bf16.gmra.mrb[0].mxu0 %v3037
      %v3228 = vpop.f32.mrb[0].mxu0
      %v3229 = vadd.f32 %v3072, %v3228
      %v3230 = vpop.f32.mrb[0].mxu0
      %v3231 = vpop.f32.mrb[0].mxu0
      %v3232 = vadd.f32 %v3072, %v3231
      %v3233 = vpop.f32.mrb[0].mxu0
      %3234 = vmatprep.mubr.bf16.mxu0 0
      %3235 = vmatmul.mubr.bf16.gmra.mrb[0].mxu0 %v3038
      %v3236 = vpop.f32.mrb[0].mxu0
      %v3237 = vadd.f32 %v3072, %v3236
      %v3238 = vpop.f32.mrb[0].mxu0
      %v3239 = vpop.f32.mrb[0].mxu0
      %v3240 = vadd.f32 %v3072, %v3239
      %v3241 = vpop.f32.mrb[0].mxu0
      %3242 = vmatprep.mubr.bf16.mxu0 0
      %3243 = vmatmul.mubr.bf16.gmra.mrb[0].mxu0 %v3039
      %v3244 = vpop.f32.mrb[0].mxu0
      %v3245 = vadd.f32 %v3072, %v3244
      %v3246 = vpop.f32.mrb[0].mxu0
      %v3247 = vpop.f32.mrb[0].mxu0
      %v3248 = vadd.f32 %v3072, %v3247
      %v3249 = vpop.f32.mrb[0].mxu0
      %3250 = vmatprep.mubr.bf16.mxu0 0
      %3251 = vmatmul.mubr.bf16.gmra.mrb[0].mxu0 %v3040
      %v3252 = vpop.f32.mrb[0].mxu0
      %v3253 = vadd.f32 %v3072, %v3252
      %v3254 = vpop.f32.mrb[0].mxu0
      %v3255 = vpop.f32.mrb[0].mxu0
      %v3256 = vadd.f32 %v3072, %v3255
      %v3257 = vpop.f32.mrb[0].mxu0
      %3258 = vmatprep.mubr.bf16.mxu0 0
      %3259 = vmatmul.mubr.bf16.gmra.mrb[0].mxu0 %v3041
      %v3260 = vpop.f32.mrb[0].mxu0
      %v3261 = vadd.f32 %v3072, %v3260
      %v3262 = vpop.f32.mrb[0].mxu0
      %v3263 = vpop.f32.mrb[0].mxu0
      %v3264 = vadd.f32 %v3072, %v3263
      %v3265 = vpop.f32.mrb[0].mxu0
      %3266 = vmatprep.mubr.bf16.mxu0 0
      %3267 = vmatmul.mubr.bf16.gmra.mrb[0].mxu0 %v3042
      %v3268 = vpop.f32.mrb[0].mxu0
      %v3269 = vadd.f32 %v3072, %v3268
      %v3270 = vpop.f32.mrb[0].mxu0
      %v3271 = vpop.f32.mrb[0].mxu0
      %v3272 = vadd.f32 %v3072, %v3271
      %v3273 = vpop.f32.mrb[0].mxu0
      %3274 = vmatprep.mubr.bf16.mxu0 0
      %3275 = vmatmul.mubr.bf16.gmra.mrb[0].mxu0 %v3043
      %v3276 = vpop.f32.mrb[0].mxu0
      %v3277 = vadd.f32 %v3072, %v3276
      %v3278 = vpop.f32.mrb[0].mxu0
      %v3279 = vpop.f32.mrb[0].mxu0
      %v3280 = vadd.f32 %v3072, %v3279
      %v3281 = vpop.f32.mrb[0].mxu0
      %3282 = vmatprep.mubr.bf16.mxu0 0
      %3283 = vmatmul.mubr.bf16.gmra.mrb[0].mxu0 %v3044
      %v3284 = vpop.f32.mrb[0].mxu0
      %v3285 = vadd.f32 %v3072, %v3284
      %v3286 = vpop.f32.mrb[0].mxu0
      %v3287 = vpop.f32.mrb[0].mxu0
      %v3288 = vadd.f32 %v3072, %v3287
      %v3289 = vpop.f32.mrb[0].mxu0
      %3290 = vmatprep.mubr.bf16.mxu0 0
      %3291 = vmatmul.mubr.bf16.gmra.mrb[0].mxu0 %v3045
      %v3292 = vpop.f32.mrb[0].mxu0
      %v3293 = vadd.f32 %v3072, %v3292
      %v3294 = vpop.f32.mrb[0].mxu0
      %v3295 = vpop.f32.mrb[0].mxu0
      %v3296 = vadd.f32 %v3072, %v3295
      %v3297 = vpop.f32.mrb[0].mxu0
      %3298 = vmatprep.mubr.bf16.mxu0 0
      %3299 = vmatmul.mubr.bf16.gmra.mrb[0].mxu0 %v3046
      %v3300 = vpop.f32.mrb[0].mxu0
      %v3301 = vadd.f32 %v3072, %v3300
      %v3302 = vpop.f32.mrb[0].mxu0
      %v3303 = vpop.f32.mrb[0].mxu0
      %v3304 = vadd.f32 %v3072, %v3303
      %v3305 = vpop.f32.mrb[0].mxu0
      %3306 = vmatprep.mubr.bf16.mxu0 0
      %3307 = vmatmul.mubr.bf16.gmra.mrb[0].mxu0 %v3047
      %v3308 = vpop.f32.mrb[0].mxu0
      %v3309 = vadd.f32 %v3072, %v3308
      %v3310 = vpop.f32.mrb[0].mxu0
      %v3311 = vpop.f32.mrb[0].mxu0
      %v3312 = vadd.f32 %v3072, %v3311
      %v3313 = vpop.f32.mrb[0].mxu0
      %3314 = vmatprep.mubr.bf16.mxu0 0
      %3315 = vmatmul.mubr.bf16.gmra.mrb[0].mxu0 %v3048
      %v3316 = vpop.f32.mrb[0].mxu0
      %v3317 = vadd.f32 %v3072, %v3316
      %v3318 = vpop.f32.mrb[0].mxu0
      %v3319 = vpop.f32.mrb[0].mxu0
      %v3320 = vadd.f32 %v3072, %v3319
      %v3321 = vpop.f32.mrb[0].mxu0
      %3322 = vdwg.mxu0
      %v3323 = vmax.f32 %v3157, 0.0
      %v3324 = vmax.f32 %v3160, 0.0
      %v3325 = vmax.f32 %v3165, 0.0
      %v3326 = vmax.f32 %v3168, 0.0
      %v3327 = vmax.f32 %v3173, 0.0
      %v3328 = vmax.f32 %v3176, 0.0
      %v3329 = vmax.f32 %v3181, 0.0
      %v3330 = vmax.f32 %v3184, 0.0
      %v3331 = vmax.f32 %v3189, 0.0
      %v3332 = vmax.f32 %v3192, 0.0
      %v3333 = vmax.f32 %v3197, 0.0
      %v3334 = vmax.f32 %v3200, 0.0
      %v3335 = vmax.f32 %v3205, 0.0
      %v3336 = vmax.f32 %v3208, 0.0
      %v3337 = vmax.f32 %v3213, 0.0
      %v3338 = vmax.f32 %v3216, 0.0
      %v3339 = vmax.f32 %v3221, 0.0
      %v3340 = vmax.f32 %v3224, 0.0
      %v3341 = vmax.f32 %v3229, 0.0
      %v3342 = vmax.f32 %v3232, 0.0
      %v3343 = vmax.f32 %v3237, 0.0
      %v3344 = vmax.f32 %v3240, 0.0
      %v3345 = vmax.f32 %v3245, 0.0
      %v3346 = vmax.f32 %v3248, 0.0
      %v3347 = vmax.f32 %v3253, 0.0
      %v3348 = vmax.f32 %v3256, 0.0
      %v3349 = vmax.f32 %v3261, 0.0
      %v3350 = vmax.f32 %v3264, 0.0
      %v3351 = vmax.f32 %v3269, 0.0
      %v3352 = vmax.f32 %v3272, 0.0
      %v3353 = vmax.f32 %v3277, 0.0
      %v3354 = vmax.f32 %v3280, 0.0
      %v3355 = vmax.f32 %v3285, 0.0
      %v3356 = vmax.f32 %v3288, 0.0
      %v3357 = vmax.f32 %v3293, 0.0
      %v3358 = vmax.f32 %v3296, 0.0
      %v3359 = vmax.f32 %v3301, 0.0
      %v3360 = vmax.f32 %v3304, 0.0
      %v3361 = vmax.f32 %v3309, 0.0
      %v3362 = vmax.f32 %v3312, 0.0
      %v3363 = vmax.f32 %v3317, 0.0
      %v3364 = vmax.f32 %v3320, 0.0
      %v3365 = vpack.c.bf16 %v3324, %v3323
      %v3366 = vpack.c.bf16 %v3326, %v3325
      %v3367 = vpack.c.bf16 %v3328, %v3327
      %v3368 = vpack.c.bf16 %v3330, %v3329
      %v3369 = vpack.c.bf16 %v3332, %v3331
      %v3370 = vpack.c.bf16 %v3334, %v3333
      %v3371 = vpack.c.bf16 %v3336, %v3335
      %v3372 = vpack.c.bf16 %v3338, %v3337
      %v3373 = vpack.c.bf16 %v3340, %v3339
      %v3374 = vpack.c.bf16 %v3342, %v3341
      %v3375 = vpack.c.bf16 %v3344, %v3343
      %v3376 = vpack.c.bf16 %v3346, %v3345
      %v3377 = vpack.c.bf16 %v3348, %v3347
      %v3378 = vpack.c.bf16 %v3350, %v3349
      %v3379 = vpack.c.bf16 %v3352, %v3351
      %v3380 = vpack.c.bf16 %v3354, %v3353
      %v3381 = vpack.c.bf16 %v3356, %v3355
      %v3382 = vpack.c.bf16 %v3358, %v3357
      %v3383 = vpack.c.bf16 %v3360, %v3359
      %v3384 = vpack.c.bf16 %v3362, %v3361
      %v3385 = vpack.c.bf16 %v3364, %v3363
      %s3386 = scalar_lea.vmem %s6, 128
      %v3387 = vld [vmem:[%s3386] sm:$0xf]
      %v3388 = vld [vmem:[%s3386 + $0x4] sm:$0xf]
      %v3389 = vld [vmem:[%s3386 + $0x8] sm:$0xf]
      %v3390 = vld [vmem:[%s3386 + $0xc] sm:$0xf]
      %v3391 = vld [vmem:[%s3386 + $0x10] sm:$0xf]
      %v3392 = vld [vmem:[%s3386 + $0x14] sm:$0xf]
      %v3393 = vld [vmem:[%s3386 + $0x18] sm:$0xf]
      %v3394 = vld [vmem:[%s3386 + $0x1c] sm:$0xf]
      %v3395 = vld [vmem:[%s3386 + $0x20] sm:$0xf]
      %v3396 = vld [vmem:[%s3386 + $0x24] sm:$0xf]
      %v3397 = vld [vmem:[%s3386 + $0x28] sm:$0xf]
      %v3398 = vld [vmem:[%s3386 + $0x2c] sm:$0xf]
      %v3399 = vld [vmem:[%s3386 + $0x30] sm:$0xf]
      %v3400 = vld [vmem:[%s3386 + $0x34] sm:$0xf]
      %v3401 = vld [vmem:[%s3386 + $0x38] sm:$0xf]
      %v3402 = vld [vmem:[%s3386 + $0x3c] sm:$0xf]
      %s3403 = scalar_lea.vmem %s7, 2
      %v3404 = vld [vmem:[%s3403] sm:$0x1]
      %v3406 = vlaneseq
      %v3407 = vshrl.u32 %v3406, 7
      %v3408 = vsub.s32 0, %v3407
      %v3409 = vrot.slane %v3404, %v3408
      %v3427 = vunpack.c.l.b16 %v3387
      %v3428 = vunpack.c.l.b16 %v3388
      %v3429 = vunpack.c.l.b16 %v3389
      %v3430 = vunpack.c.l.b16 %v3390
      %v3431 = vunpack.c.l.b16 %v3391
      %v3432 = vunpack.c.l.b16 %v3392
      %v3433 = vunpack.c.l.b16 %v3393
      %v3434 = vunpack.c.l.b16 %v3394
      %v3435 = vunpack.c.l.b16 %v3395
      %v3436 = vunpack.c.l.b16 %v3396
      %v3437 = vunpack.c.l.b16 %v3397
      %v3438 = vunpack.c.l.b16 %v3398
      %v3439 = vunpack.c.l.b16 %v3399
      %v3440 = vunpack.c.l.b16 %v3400
      %v3441 = vunpack.c.l.b16 %v3401
      %v3442 = vunpack.c.l.b16 %v3402
      %v3443 = vpack.c.b16 %v3428, %v3427
      %v3444 = vpack.c.b16 %v3430, %v3429
      %v3445 = vpack.c.b16 %v3432, %v3431
      %v3446 = vpack.c.b16 %v3434, %v3433
      %v3447 = vpack.c.b16 %v3436, %v3435
      %v3448 = vpack.c.b16 %v3438, %v3437
      %v3449 = vpack.c.b16 %v3440, %v3439
      %v3450 = vpack.c.b16 %v3442, %v3441
      %3459 = vmatprep.subr.bf16.mxu0 0
      %3460 = vmatpush1.bf16.msra.mxu0 %v3443
      %3461 = vmatprep.subr.bf16.mxu0 0
      %3462 = vmatpush1.bf16.msra.mxu0 %v3444
      %3463 = vmatprep.subr.bf16.mxu0 0
      %3464 = vmatpush1.bf16.msra.mxu0 %v3445
      %3465 = vmatprep.subr.bf16.mxu0 0
      %3466 = vmatpush1.bf16.msra.mxu0 %v3446
      %3467 = vmatprep.subr.bf16.mxu0 0
      %3468 = vmatpush1.bf16.msra.mxu0 %v3447
      %3469 = vmatprep.subr.bf16.mxu0 0
      %3470 = vmatpush1.bf16.msra.mxu0 %v3448
      %3471 = vmatprep.subr.bf16.mxu0 0
      %3472 = vmatpush1.bf16.msra.mxu0 %v3449
      %3473 = vmatprep.subr.bf16.mxu0 0
      %3474 = vmatpush1.bf16.msra.mxu0 %v3450
      %3475 = vmatprep.subr.bf16.mxu0 0
      %3476 = vmatpush1.bf16.msra.mxu0 0
      %3477 = vmatprep.subr.bf16.mxu0 0
      %3478 = vmatpush1.bf16.msra.mxu0 0
      %3479 = vmatprep.subr.bf16.mxu0 0
      %3480 = vmatpush1.bf16.msra.mxu0 0
      %3481 = vmatprep.subr.bf16.mxu0 0
      %3482 = vmatpush1.bf16.msra.mxu0 0
      %3483 = vmatprep.subr.bf16.mxu0 0
      %3484 = vmatpush1.bf16.msra.mxu0 0
      %3485 = vmatprep.subr.bf16.mxu0 0
      %3486 = vmatpush1.bf16.msra.mxu0 0
      %3487 = vmatprep.subr.bf16.mxu0 0
      %3488 = vmatpush1.bf16.msra.mxu0 0
      %3489 = vmatprep.subr.bf16.mxu0 0
      %3490 = vmatpush1.bf16.msra.mxu0 0
      %3491 = vmatprep.mubr.bf16.mxu0 0
      %3492 = vmatmul.mubr.bf16.gmra.mrb[0].mxu0 %v3365
      %v3493 = vpop.f32.mrb[0].mxu0
      %v3494 = vadd.f32 %v3409, %v3493
      %v3495 = vpop.f32.mrb[0].mxu0
      %v3496 = vpop.f32.mrb[0].mxu0
      %v3497 = vadd.f32 %v3409, %v3496
      %v3498 = vpop.f32.mrb[0].mxu0
      %3499 = vmatprep.mubr.bf16.mxu0 0
      %3500 = vmatmul.mubr.bf16.gmra.mrb[0].mxu0 %v3366
      %v3501 = vpop.f32.mrb[0].mxu0
      %v3502 = vadd.f32 %v3409, %v3501
      %v3503 = vpop.f32.mrb[0].mxu0
      %v3504 = vpop.f32.mrb[0].mxu0
      %v3505 = vadd.f32 %v3409, %v3504
      %v3506 = vpop.f32.mrb[0].mxu0
      %3507 = vmatprep.mubr.bf16.mxu0 0
      %3508 = vmatmul.mubr.bf16.gmra.mrb[0].mxu0 %v3367
      %v3509 = vpop.f32.mrb[0].mxu0
      %v3510 = vadd.f32 %v3409, %v3509
      %v3511 = vpop.f32.mrb[0].mxu0
      %v3512 = vpop.f32.mrb[0].mxu0
      %v3513 = vadd.f32 %v3409, %v3512
      %v3514 = vpop.f32.mrb[0].mxu0
      %3515 = vmatprep.mubr.bf16.mxu0 0
      %3516 = vmatmul.mubr.bf16.gmra.mrb[0].mxu0 %v3368
      %v3517 = vpop.f32.mrb[0].mxu0
      %v3518 = vadd.f32 %v3409, %v3517
      %v3519 = vpop.f32.mrb[0].mxu0
      %v3520 = vpop.f32.mrb[0].mxu0
      %v3521 = vadd.f32 %v3409, %v3520
      %v3522 = vpop.f32.mrb[0].mxu0
      %3523 = vmatprep.mubr.bf16.mxu0 0
      %3524 = vmatmul.mubr.bf16.gmra.mrb[0].mxu0 %v3369
      %v3525 = vpop.f32.mrb[0].mxu0
      %v3526 = vadd.f32 %v3409, %v3525
      %v3527 = vpop.f32.mrb[0].mxu0
      %v3528 = vpop.f32.mrb[0].mxu0
      %v3529 = vadd.f32 %v3409, %v3528
      %v3530 = vpop.f32.mrb[0].mxu0
      %3531 = vmatprep.mubr.bf16.mxu0 0
      %3532 = vmatmul.mubr.bf16.gmra.mrb[0].mxu0 %v3370
      %v3533 = vpop.f32.mrb[0].mxu0
      %v3534 = vadd.f32 %v3409, %v3533
      %v3535 = vpop.f32.mrb[0].mxu0
      %v3536 = vpop.f32.mrb[0].mxu0
      %v3537 = vadd.f32 %v3409, %v3536
      %v3538 = vpop.f32.mrb[0].mxu0
      %3539 = vmatprep.mubr.bf16.mxu0 0
      %3540 = vmatmul.mubr.bf16.gmra.mrb[0].mxu0 %v3371
      %v3541 = vpop.f32.mrb[0].mxu0
      %v3542 = vadd.f32 %v3409, %v3541
      %v3543 = vpop.f32.mrb[0].mxu0
      %v3544 = vpop.f32.mrb[0].mxu0
      %v3545 = vadd.f32 %v3409, %v3544
      %v3546 = vpop.f32.mrb[0].mxu0
      %3547 = vmatprep.mubr.bf16.mxu0 0
      %3548 = vmatmul.mubr.bf16.gmra.mrb[0].mxu0 %v3372
      %v3549 = vpop.f32.mrb[0].mxu0
      %v3550 = vadd.f32 %v3409, %v3549
      %v3551 = vpop.f32.mrb[0].mxu0
      %v3552 = vpop.f32.mrb[0].mxu0
      %v3553 = vadd.f32 %v3409, %v3552
      %v3554 = vpop.f32.mrb[0].mxu0
      %3555 = vmatprep.mubr.bf16.mxu0 0
      %3556 = vmatmul.mubr.bf16.gmra.mrb[0].mxu0 %v3373
      %v3557 = vpop.f32.mrb[0].mxu0
      %v3558 = vadd.f32 %v3409, %v3557
      %v3559 = vpop.f32.mrb[0].mxu0
      %v3560 = vpop.f32.mrb[0].mxu0
      %v3561 = vadd.f32 %v3409, %v3560
      %v3562 = vpop.f32.mrb[0].mxu0
      %3563 = vmatprep.mubr.bf16.mxu0 0
      %3564 = vmatmul.mubr.bf16.gmra.mrb[0].mxu0 %v3374
      %v3565 = vpop.f32.mrb[0].mxu0
      %v3566 = vadd.f32 %v3409, %v3565
      %v3567 = vpop.f32.mrb[0].mxu0
      %v3568 = vpop.f32.mrb[0].mxu0
      %v3569 = vadd.f32 %v3409, %v3568
      %v3570 = vpop.f32.mrb[0].mxu0
      %3571 = vmatprep.mubr.bf16.mxu0 0
      %3572 = vmatmul.mubr.bf16.gmra.mrb[0].mxu0 %v3375
      %v3573 = vpop.f32.mrb[0].mxu0
      %v3574 = vadd.f32 %v3409, %v3573
      %v3575 = vpop.f32.mrb[0].mxu0
      %v3576 = vpop.f32.mrb[0].mxu0
      %v3577 = vadd.f32 %v3409, %v3576
      %v3578 = vpop.f32.mrb[0].mxu0
      %3579 = vmatprep.mubr.bf16.mxu0 0
      %3580 = vmatmul.mubr.bf16.gmra.mrb[0].mxu0 %v3376
      %v3581 = vpop.f32.mrb[0].mxu0
      %v3582 = vadd.f32 %v3409, %v3581
      %v3583 = vpop.f32.mrb[0].mxu0
      %v3584 = vpop.f32.mrb[0].mxu0
      %v3585 = vadd.f32 %v3409, %v3584
      %v3586 = vpop.f32.mrb[0].mxu0
      %3587 = vmatprep.mubr.bf16.mxu0 0
      %3588 = vmatmul.mubr.bf16.gmra.mrb[0].mxu0 %v3377
      %v3589 = vpop.f32.mrb[0].mxu0
      %v3590 = vadd.f32 %v3409, %v3589
      %v3591 = vpop.f32.mrb[0].mxu0
      %v3592 = vpop.f32.mrb[0].mxu0
      %v3593 = vadd.f32 %v3409, %v3592
      %v3594 = vpop.f32.mrb[0].mxu0
      %3595 = vmatprep.mubr.bf16.mxu0 0
      %3596 = vmatmul.mubr.bf16.gmra.mrb[0].mxu0 %v3378
      %v3597 = vpop.f32.mrb[0].mxu0
      %v3598 = vadd.f32 %v3409, %v3597
      %v3599 = vpop.f32.mrb[0].mxu0
      %v3600 = vpop.f32.mrb[0].mxu0
      %v3601 = vadd.f32 %v3409, %v3600
      %v3602 = vpop.f32.mrb[0].mxu0
      %3603 = vmatprep.mubr.bf16.mxu0 0
      %3604 = vmatmul.mubr.bf16.gmra.mrb[0].mxu0 %v3379
      %v3605 = vpop.f32.mrb[0].mxu0
      %v3606 = vadd.f32 %v3409, %v3605
      %v3607 = vpop.f32.mrb[0].mxu0
      %v3608 = vpop.f32.mrb[0].mxu0
      %v3609 = vadd.f32 %v3409, %v3608
      %v3610 = vpop.f32.mrb[0].mxu0
      %3611 = vmatprep.mubr.bf16.mxu0 0
      %3612 = vmatmul.mubr.bf16.gmra.mrb[0].mxu0 %v3380
      %v3613 = vpop.f32.mrb[0].mxu0
      %v3614 = vadd.f32 %v3409, %v3613
      %v3615 = vpop.f32.mrb[0].mxu0
      %v3616 = vpop.f32.mrb[0].mxu0
      %v3617 = vadd.f32 %v3409, %v3616
      %v3618 = vpop.f32.mrb[0].mxu0
      %3619 = vmatprep.mubr.bf16.mxu0 0
      %3620 = vmatmul.mubr.bf16.gmra.mrb[0].mxu0 %v3381
      %v3621 = vpop.f32.mrb[0].mxu0
      %v3622 = vadd.f32 %v3409, %v3621
      %v3623 = vpop.f32.mrb[0].mxu0
      %v3624 = vpop.f32.mrb[0].mxu0
      %v3625 = vadd.f32 %v3409, %v3624
      %v3626 = vpop.f32.mrb[0].mxu0
      %3627 = vmatprep.mubr.bf16.mxu0 0
      %3628 = vmatmul.mubr.bf16.gmra.mrb[0].mxu0 %v3382
      %v3629 = vpop.f32.mrb[0].mxu0
      %v3630 = vadd.f32 %v3409, %v3629
      %v3631 = vpop.f32.mrb[0].mxu0
      %v3632 = vpop.f32.mrb[0].mxu0
      %v3633 = vadd.f32 %v3409, %v3632
      %v3634 = vpop.f32.mrb[0].mxu0
      %3635 = vmatprep.mubr.bf16.mxu0 0
      %3636 = vmatmul.mubr.bf16.gmra.mrb[0].mxu0 %v3383
      %v3637 = vpop.f32.mrb[0].mxu0
      %v3638 = vadd.f32 %v3409, %v3637
      %v3639 = vpop.f32.mrb[0].mxu0
      %v3640 = vpop.f32.mrb[0].mxu0
      %v3641 = vadd.f32 %v3409, %v3640
      %v3642 = vpop.f32.mrb[0].mxu0
      %3643 = vmatprep.mubr.bf16.mxu0 0
      %3644 = vmatmul.mubr.bf16.gmra.mrb[0].mxu0 %v3384
      %v3645 = vpop.f32.mrb[0].mxu0
      %v3646 = vadd.f32 %v3409, %v3645
      %v3647 = vpop.f32.mrb[0].mxu0
      %v3648 = vpop.f32.mrb[0].mxu0
      %v3649 = vadd.f32 %v3409, %v3648
      %v3650 = vpop.f32.mrb[0].mxu0
      %3651 = vmatprep.mubr.bf16.mxu0 0
      %3652 = vmatmul.mubr.bf16.gmra.mrb[0].mxu0 %v3385
      %v3653 = vpop.f32.mrb[0].mxu0
      %v3654 = vadd.f32 %v3409, %v3653
      %v3655 = vpop.f32.mrb[0].mxu0
      %v3656 = vpop.f32.mrb[0].mxu0
      %v3657 = vadd.f32 %v3409, %v3656
      %v3658 = vpop.f32.mrb[0].mxu0
      %3659 = vdwg.mxu0
      %v3660 = vadd.f32 %v2986, %v3494
      %v3661 = vadd.f32 %v2987, %v3497
      %v3662 = vadd.f32 %v2988, %v3502
      %v3663 = vadd.f32 %v2989, %v3505
      %v3664 = vadd.f32 %v2990, %v3510
      %v3665 = vadd.f32 %v2991, %v3513
      %v3666 = vadd.f32 %v2992, %v3518
      %v3667 = vadd.f32 %v2993, %v3521
      %v3668 = vadd.f32 %v2994, %v3526
      %v3669 = vadd.f32 %v2995, %v3529
      %v3670 = vadd.f32 %v2996, %v3534
      %v3671 = vadd.f32 %v2997, %v3537
      %v3672 = vadd.f32 %v2998, %v3542
      %v3673 = vadd.f32 %v2999, %v3545
      %v3674 = vadd.f32 %v3000, %v3550
      %v3675 = vadd.f32 %v3001, %v3553
      %v3676 = vadd.f32 %v3002, %v3558
      %v3677 = vadd.f32 %v3003, %v3561
      %v3678 = vadd.f32 %v3004, %v3566
      %v3679 = vadd.f32 %v3005, %v3569
      %v3680 = vadd.f32 %v3006, %v3574
      %v3681 = vadd.f32 %v3007, %v3577
      %v3682 = vadd.f32 %v3008, %v3582
      %v3683 = vadd.f32 %v3009, %v3585
      %v3684 = vadd.f32 %v3010, %v3590
      %v3685 = vadd.f32 %v3011, %v3593
      %v3686 = vadd.f32 %v3012, %v3598
      %v3687 = vadd.f32 %v3013, %v3601
      %v3688 = vadd.f32 %v3014, %v3606
      %v3689 = vadd.f32 %v3015, %v3609
      %v3690 = vadd.f32 %v3016, %v3614
      %v3691 = vadd.f32 %v3017, %v3617
      %v3692 = vadd.f32 %v3018, %v3622
      %v3693 = vadd.f32 %v3019, %v3625
      %v3694 = vadd.f32 %v3020, %v3630
      %v3695 = vadd.f32 %v3021, %v3633
      %v3696 = vadd.f32 %v3022, %v3638
      %v3697 = vadd.f32 %v3023, %v3641
      %v3698 = vadd.f32 %v3024, %v3646
      %v3699 = vadd.f32 %v3025, %v3649
      %v3700 = vadd.f32 %v3026, %v3654
      %v3701 = vadd.f32 %v3027, %v3657
      %v3702 = vpack.c.bf16 %v3661, %v3660
      %v3703 = vpack.c.bf16 %v3663, %v3662
      %v3704 = vpack.c.bf16 %v3665, %v3664
      %v3705 = vpack.c.bf16 %v3667, %v3666
      %v3706 = vpack.c.bf16 %v3669, %v3668
      %v3707 = vpack.c.bf16 %v3671, %v3670
      %v3708 = vpack.c.bf16 %v3673, %v3672
      %v3709 = vpack.c.bf16 %v3675, %v3674
      %v3710 = vpack.c.bf16 %v3677, %v3676
      %v3711 = vpack.c.bf16 %v3679, %v3678
      %v3712 = vpack.c.bf16 %v3681, %v3680
      %v3713 = vpack.c.bf16 %v3683, %v3682
      %v3714 = vpack.c.bf16 %v3685, %v3684
      %v3715 = vpack.c.bf16 %v3687, %v3686
      %v3716 = vpack.c.bf16 %v3689, %v3688
      %v3717 = vpack.c.bf16 %v3691, %v3690
      %v3718 = vpack.c.bf16 %v3693, %v3692
      %v3719 = vpack.c.bf16 %v3695, %v3694
      %v3720 = vpack.c.bf16 %v3697, %v3696
      %v3721 = vpack.c.bf16 %v3699, %v3698
      %v3722 = vpack.c.bf16 %v3701, %v3700
      %s3723 = scalar_lea.vmem %s4, 192
      %v3724 = vld [vmem:[%s3723] sm:$0xf]
      %v3725 = vld [vmem:[%s3723 + $0x4] sm:$0xf]
      %v3726 = vld [vmem:[%s3723 + $0x8] sm:$0xf]
      %v3727 = vld [vmem:[%s3723 + $0xc] sm:$0xf]
      %v3728 = vld [vmem:[%s3723 + $0x10] sm:$0xf]
      %v3729 = vld [vmem:[%s3723 + $0x14] sm:$0xf]
      %v3730 = vld [vmem:[%s3723 + $0x18] sm:$0xf]
      %v3731 = vld [vmem:[%s3723 + $0x1c] sm:$0xf]
      %v3732 = vld [vmem:[%s3723 + $0x20] sm:$0xf]
      %v3733 = vld [vmem:[%s3723 + $0x24] sm:$0xf]
      %v3734 = vld [vmem:[%s3723 + $0x28] sm:$0xf]
      %v3735 = vld [vmem:[%s3723 + $0x2c] sm:$0xf]
      %v3736 = vld [vmem:[%s3723 + $0x30] sm:$0xf]
      %v3737 = vld [vmem:[%s3723 + $0x34] sm:$0xf]
      %v3738 = vld [vmem:[%s3723 + $0x38] sm:$0xf]
      %v3739 = vld [vmem:[%s3723 + $0x3c] sm:$0xf]
      %s3740 = scalar_lea.vmem %s5, 3
      %v3741 = vld [vmem:[%s3740] sm:$0x1]
      %v3743 = vlaneseq
      %v3744 = vshrl.u32 %v3743, 7
      %v3745 = vsub.s32 0, %v3744
      %v3746 = vrot.slane %v3741, %v3745
      %v3764 = vunpack.c.l.b16 %v3724
      %v3765 = vunpack.c.l.b16 %v3725
      %v3766 = vunpack.c.l.b16 %v3726
      %v3767 = vunpack.c.l.b16 %v3727
      %v3768 = vunpack.c.l.b16 %v3728
      %v3769 = vunpack.c.l.b16 %v3729
      %v3770 = vunpack.c.l.b16 %v3730
      %v3771 = vunpack.c.l.b16 %v3731
      %v3772 = vunpack.c.l.b16 %v3732
      %v3773 = vunpack.c.l.b16 %v3733
      %v3774 = vunpack.c.l.b16 %v3734
      %v3775 = vunpack.c.l.b16 %v3735
      %v3776 = vunpack.c.l.b16 %v3736
      %v3777 = vunpack.c.l.b16 %v3737
      %v3778 = vunpack.c.l.b16 %v3738
      %v3779 = vunpack.c.l.b16 %v3739
      %v3780 = vpack.c.b16 %v3765, %v3764
      %v3781 = vpack.c.b16 %v3767, %v3766
      %v3782 = vpack.c.b16 %v3769, %v3768
      %v3783 = vpack.c.b16 %v3771, %v3770
      %v3784 = vpack.c.b16 %v3773, %v3772
      %v3785 = vpack.c.b16 %v3775, %v3774
      %v3786 = vpack.c.b16 %v3777, %v3776
      %v3787 = vpack.c.b16 %v3779, %v3778
      %3796 = vmatprep.subr.bf16.mxu0 0
      %3797 = vmatpush1.bf16.msra.mxu0 %v3780
      %3798 = vmatprep.subr.bf16.mxu0 0
      %3799 = vmatpush1.bf16.msra.mxu0 %v3781
      %3800 = vmatprep.subr.bf16.mxu0 0
      %3801 = vmatpush1.bf16.msra.mxu0 %v3782
      %3802 = vmatprep.subr.bf16.mxu0 0
      %3803 = vmatpush1.bf16.msra.mxu0 %v3783
      %3804 = vmatprep.subr.bf16.mxu0 0
      %3805 = vmatpush1.bf16.msra.mxu0 %v3784
      %3806 = vmatprep.subr.bf16.mxu0 0
      %3807 = vmatpush1.bf16.msra.mxu0 %v3785
      %3808 = vmatprep.subr.bf16.mxu0 0
      %3809 = vmatpush1.bf16.msra.mxu0 %v3786
      %3810 = vmatprep.subr.bf16.mxu0 0
      %3811 = vmatpush1.bf16.msra.mxu0 %v3787
      %3812 = vmatprep.subr.bf16.mxu0 0
      %3813 = vmatpush1.bf16.msra.mxu0 0
      %3814 = vmatprep.subr.bf16.mxu0 0
      %3815 = vmatpush1.bf16.msra.mxu0 0
      %3816 = vmatprep.subr.bf16.mxu0 0
      %3817 = vmatpush1.bf16.msra.mxu0 0
      %3818 = vmatprep.subr.bf16.mxu0 0
      %3819 = vmatpush1.bf16.msra.mxu0 0
      %3820 = vmatprep.subr.bf16.mxu0 0
      %3821 = vmatpush1.bf16.msra.mxu0 0
      %3822 = vmatprep.subr.bf16.mxu0 0
      %3823 = vmatpush1.bf16.msra.mxu0 0
      %3824 = vmatprep.subr.bf16.mxu0 0
      %3825 = vmatpush1.bf16.msra.mxu0 0
      %3826 = vmatprep.subr.bf16.mxu0 0
      %3827 = vmatpush1.bf16.msra.mxu0 0
      %3828 = vmatprep.mubr.bf16.mxu0 0
      %3829 = vmatmul.mubr.bf16.gmra.mrb[0].mxu0 %v3702
      %v3830 = vpop.f32.mrb[0].mxu0
      %v3831 = vadd.f32 %v3746, %v3830
      %v3832 = vpop.f32.mrb[0].mxu0
      %v3833 = vpop.f32.mrb[0].mxu0
      %v3834 = vadd.f32 %v3746, %v3833
      %v3835 = vpop.f32.mrb[0].mxu0
      %3836 = vmatprep.mubr.bf16.mxu0 0
      %3837 = vmatmul.mubr.bf16.gmra.mrb[0].mxu0 %v3703
      %v3838 = vpop.f32.mrb[0].mxu0
      %v3839 = vadd.f32 %v3746, %v3838
      %v3840 = vpop.f32.mrb[0].mxu0
      %v3841 = vpop.f32.mrb[0].mxu0
      %v3842 = vadd.f32 %v3746, %v3841
      %v3843 = vpop.f32.mrb[0].mxu0
      %3844 = vmatprep.mubr.bf16.mxu0 0
      %3845 = vmatmul.mubr.bf16.gmra.mrb[0].mxu0 %v3704
      %v3846 = vpop.f32.mrb[0].mxu0
      %v3847 = vadd.f32 %v3746, %v3846
      %v3848 = vpop.f32.mrb[0].mxu0
      %v3849 = vpop.f32.mrb[0].mxu0
      %v3850 = vadd.f32 %v3746, %v3849
      %v3851 = vpop.f32.mrb[0].mxu0
      %3852 = vmatprep.mubr.bf16.mxu0 0
      %3853 = vmatmul.mubr.bf16.gmra.mrb[0].mxu0 %v3705
      %v3854 = vpop.f32.mrb[0].mxu0
      %v3855 = vadd.f32 %v3746, %v3854
      %v3856 = vpop.f32.mrb[0].mxu0
      %v3857 = vpop.f32.mrb[0].mxu0
      %v3858 = vadd.f32 %v3746, %v3857
      %v3859 = vpop.f32.mrb[0].mxu0
      %3860 = vmatprep.mubr.bf16.mxu0 0
      %3861 = vmatmul.mubr.bf16.gmra.mrb[0].mxu0 %v3706
      %v3862 = vpop.f32.mrb[0].mxu0
      %v3863 = vadd.f32 %v3746, %v3862
      %v3864 = vpop.f32.mrb[0].mxu0
      %v3865 = vpop.f32.mrb[0].mxu0
      %v3866 = vadd.f32 %v3746, %v3865
      %v3867 = vpop.f32.mrb[0].mxu0
      %3868 = vmatprep.mubr.bf16.mxu0 0
      %3869 = vmatmul.mubr.bf16.gmra.mrb[0].mxu0 %v3707
      %v3870 = vpop.f32.mrb[0].mxu0
      %v3871 = vadd.f32 %v3746, %v3870
      %v3872 = vpop.f32.mrb[0].mxu0
      %v3873 = vpop.f32.mrb[0].mxu0
      %v3874 = vadd.f32 %v3746, %v3873
      %v3875 = vpop.f32.mrb[0].mxu0
      %3876 = vmatprep.mubr.bf16.mxu0 0
      %3877 = vmatmul.mubr.bf16.gmra.mrb[0].mxu0 %v3708
      %v3878 = vpop.f32.mrb[0].mxu0
      %v3879 = vadd.f32 %v3746, %v3878
      %v3880 = vpop.f32.mrb[0].mxu0
      %v3881 = vpop.f32.mrb[0].mxu0
      %v3882 = vadd.f32 %v3746, %v3881
      %v3883 = vpop.f32.mrb[0].mxu0
      %3884 = vmatprep.mubr.bf16.mxu0 0
      %3885 = vmatmul.mubr.bf16.gmra.mrb[0].mxu0 %v3709
      %v3886 = vpop.f32.mrb[0].mxu0
      %v3887 = vadd.f32 %v3746, %v3886
      %v3888 = vpop.f32.mrb[0].mxu0
      %v3889 = vpop.f32.mrb[0].mxu0
      %v3890 = vadd.f32 %v3746, %v3889
      %v3891 = vpop.f32.mrb[0].mxu0
      %3892 = vmatprep.mubr.bf16.mxu0 0
      %3893 = vmatmul.mubr.bf16.gmra.mrb[0].mxu0 %v3710
      %v3894 = vpop.f32.mrb[0].mxu0
      %v3895 = vadd.f32 %v3746, %v3894
      %v3896 = vpop.f32.mrb[0].mxu0
      %v3897 = vpop.f32.mrb[0].mxu0
      %v3898 = vadd.f32 %v3746, %v3897
      %v3899 = vpop.f32.mrb[0].mxu0
      %3900 = vmatprep.mubr.bf16.mxu0 0
      %3901 = vmatmul.mubr.bf16.gmra.mrb[0].mxu0 %v3711
      %v3902 = vpop.f32.mrb[0].mxu0
      %v3903 = vadd.f32 %v3746, %v3902
      %v3904 = vpop.f32.mrb[0].mxu0
      %v3905 = vpop.f32.mrb[0].mxu0
      %v3906 = vadd.f32 %v3746, %v3905
      %v3907 = vpop.f32.mrb[0].mxu0
      %3908 = vmatprep.mubr.bf16.mxu0 0
      %3909 = vmatmul.mubr.bf16.gmra.mrb[0].mxu0 %v3712
      %v3910 = vpop.f32.mrb[0].mxu0
      %v3911 = vadd.f32 %v3746, %v3910
      %v3912 = vpop.f32.mrb[0].mxu0
      %v3913 = vpop.f32.mrb[0].mxu0
      %v3914 = vadd.f32 %v3746, %v3913
      %v3915 = vpop.f32.mrb[0].mxu0
      %3916 = vmatprep.mubr.bf16.mxu0 0
      %3917 = vmatmul.mubr.bf16.gmra.mrb[0].mxu0 %v3713
      %v3918 = vpop.f32.mrb[0].mxu0
      %v3919 = vadd.f32 %v3746, %v3918
      %v3920 = vpop.f32.mrb[0].mxu0
      %v3921 = vpop.f32.mrb[0].mxu0
      %v3922 = vadd.f32 %v3746, %v3921
      %v3923 = vpop.f32.mrb[0].mxu0
      %3924 = vmatprep.mubr.bf16.mxu0 0
      %3925 = vmatmul.mubr.bf16.gmra.mrb[0].mxu0 %v3714
      %v3926 = vpop.f32.mrb[0].mxu0
      %v3927 = vadd.f32 %v3746, %v3926
      %v3928 = vpop.f32.mrb[0].mxu0
      %v3929 = vpop.f32.mrb[0].mxu0
      %v3930 = vadd.f32 %v3746, %v3929
      %v3931 = vpop.f32.mrb[0].mxu0
      %3932 = vmatprep.mubr.bf16.mxu0 0
      %3933 = vmatmul.mubr.bf16.gmra.mrb[0].mxu0 %v3715
      %v3934 = vpop.f32.mrb[0].mxu0
      %v3935 = vadd.f32 %v3746, %v3934
      %v3936 = vpop.f32.mrb[0].mxu0
      %v3937 = vpop.f32.mrb[0].mxu0
      %v3938 = vadd.f32 %v3746, %v3937
      %v3939 = vpop.f32.mrb[0].mxu0
      %3940 = vmatprep.mubr.bf16.mxu0 0
      %3941 = vmatmul.mubr.bf16.gmra.mrb[0].mxu0 %v3716
      %v3942 = vpop.f32.mrb[0].mxu0
      %v3943 = vadd.f32 %v3746, %v3942
      %v3944 = vpop.f32.mrb[0].mxu0
      %v3945 = vpop.f32.mrb[0].mxu0
      %v3946 = vadd.f32 %v3746, %v3945
      %v3947 = vpop.f32.mrb[0].mxu0
      %3948 = vmatprep.mubr.bf16.mxu0 0
      %3949 = vmatmul.mubr.bf16.gmra.mrb[0].mxu0 %v3717
      %v3950 = vpop.f32.mrb[0].mxu0
      %v3951 = vadd.f32 %v3746, %v3950
      %v3952 = vpop.f32.mrb[0].mxu0
      %v3953 = vpop.f32.mrb[0].mxu0
      %v3954 = vadd.f32 %v3746, %v3953
      %v3955 = vpop.f32.mrb[0].mxu0
      %3956 = vmatprep.mubr.bf16.mxu0 0
      %3957 = vmatmul.mubr.bf16.gmra.mrb[0].mxu0 %v3718
      %v3958 = vpop.f32.mrb[0].mxu0
      %v3959 = vadd.f32 %v3746, %v3958
      %v3960 = vpop.f32.mrb[0].mxu0
      %v3961 = vpop.f32.mrb[0].mxu0
      %v3962 = vadd.f32 %v3746, %v3961
      %v3963 = vpop.f32.mrb[0].mxu0
      %3964 = vmatprep.mubr.bf16.mxu0 0
      %3965 = vmatmul.mubr.bf16.gmra.mrb[0].mxu0 %v3719
      %v3966 = vpop.f32.mrb[0].mxu0
      %v3967 = vadd.f32 %v3746, %v3966
      %v3968 = vpop.f32.mrb[0].mxu0
      %v3969 = vpop.f32.mrb[0].mxu0
      %v3970 = vadd.f32 %v3746, %v3969
      %v3971 = vpop.f32.mrb[0].mxu0
      %3972 = vmatprep.mubr.bf16.mxu0 0
      %3973 = vmatmul.mubr.bf16.gmra.mrb[0].mxu0 %v3720
      %v3974 = vpop.f32.mrb[0].mxu0
      %v3975 = vadd.f32 %v3746, %v3974
      %v3976 = vpop.f32.mrb[0].mxu0
      %v3977 = vpop.f32.mrb[0].mxu0
      %v3978 = vadd.f32 %v3746, %v3977
      %v3979 = vpop.f32.mrb[0].mxu0
      %3980 = vmatprep.mubr.bf16.mxu0 0
      %3981 = vmatmul.mubr.bf16.gmra.mrb[0].mxu0 %v3721
      %v3982 = vpop.f32.mrb[0].mxu0
      %v3983 = vadd.f32 %v3746, %v3982
      %v3984 = vpop.f32.mrb[0].mxu0
      %v3985 = vpop.f32.mrb[0].mxu0
      %v3986 = vadd.f32 %v3746, %v3985
      %v3987 = vpop.f32.mrb[0].mxu0
      %3988 = vmatprep.mubr.bf16.mxu0 0
      %3989 = vmatmul.mubr.bf16.gmra.mrb[0].mxu0 %v3722
      %v3990 = vpop.f32.mrb[0].mxu0
      %v3991 = vadd.f32 %v3746, %v3990
      %v3992 = vpop.f32.mrb[0].mxu0
      %v3993 = vpop.f32.mrb[0].mxu0
      %v3994 = vadd.f32 %v3746, %v3993
      %v3995 = vpop.f32.mrb[0].mxu0
      %3996 = vdwg.mxu0
      %v3997 = vmax.f32 %v3831, 0.0
      %v3998 = vmax.f32 %v3834, 0.0
      %v3999 = vmax.f32 %v3839, 0.0
      %v4000 = vmax.f32 %v3842, 0.0
      %v4001 = vmax.f32 %v3847, 0.0
      %v4002 = vmax.f32 %v3850, 0.0
      %v4003 = vmax.f32 %v3855, 0.0
      %v4004 = vmax.f32 %v3858, 0.0
      %v4005 = vmax.f32 %v3863, 0.0
      %v4006 = vmax.f32 %v3866, 0.0
      %v4007 = vmax.f32 %v3871, 0.0
      %v4008 = vmax.f32 %v3874, 0.0
      %v4009 = vmax.f32 %v3879, 0.0
      %v4010 = vmax.f32 %v3882, 0.0
      %v4011 = vmax.f32 %v3887, 0.0
      %v4012 = vmax.f32 %v3890, 0.0
      %v4013 = vmax.f32 %v3895, 0.0
      %v4014 = vmax.f32 %v3898, 0.0
      %v4015 = vmax.f32 %v3903, 0.0
      %v4016 = vmax.f32 %v3906, 0.0
      %v4017 = vmax.f32 %v3911, 0.0
      %v4018 = vmax.f32 %v3914, 0.0
      %v4019 = vmax.f32 %v3919, 0.0
      %v4020 = vmax.f32 %v3922, 0.0
      %v4021 = vmax.f32 %v3927, 0.0
      %v4022 = vmax.f32 %v3930, 0.0
      %v4023 = vmax.f32 %v3935, 0.0
      %v4024 = vmax.f32 %v3938, 0.0
      %v4025 = vmax.f32 %v3943, 0.0
      %v4026 = vmax.f32 %v3946, 0.0
      %v4027 = vmax.f32 %v3951, 0.0
      %v4028 = vmax.f32 %v3954, 0.0
      %v4029 = vmax.f32 %v3959, 0.0
      %v4030 = vmax.f32 %v3962, 0.0
      %v4031 = vmax.f32 %v3967, 0.0
      %v4032 = vmax.f32 %v3970, 0.0
      %v4033 = vmax.f32 %v3975, 0.0
      %v4034 = vmax.f32 %v3978, 0.0
      %v4035 = vmax.f32 %v3983, 0.0
      %v4036 = vmax.f32 %v3986, 0.0
      %v4037 = vmax.f32 %v3991, 0.0
      %v4038 = vmax.f32 %v3994, 0.0
      %v4039 = vpack.c.bf16 %v3998, %v3997
      %v4040 = vpack.c.bf16 %v4000, %v3999
      %v4041 = vpack.c.bf16 %v4002, %v4001
      %v4042 = vpack.c.bf16 %v4004, %v4003
      %v4043 = vpack.c.bf16 %v4006, %v4005
      %v4044 = vpack.c.bf16 %v4008, %v4007
      %v4045 = vpack.c.bf16 %v4010, %v4009
      %v4046 = vpack.c.bf16 %v4012, %v4011
      %v4047 = vpack.c.bf16 %v4014, %v4013
      %v4048 = vpack.c.bf16 %v4016, %v4015
      %v4049 = vpack.c.bf16 %v4018, %v4017
      %v4050 = vpack.c.bf16 %v4020, %v4019
      %v4051 = vpack.c.bf16 %v4022, %v4021
      %v4052 = vpack.c.bf16 %v4024, %v4023
      %v4053 = vpack.c.bf16 %v4026, %v4025
      %v4054 = vpack.c.bf16 %v4028, %v4027
      %v4055 = vpack.c.bf16 %v4030, %v4029
      %v4056 = vpack.c.bf16 %v4032, %v4031
      %v4057 = vpack.c.bf16 %v4034, %v4033
      %v4058 = vpack.c.bf16 %v4036, %v4035
      %v4059 = vpack.c.bf16 %v4038, %v4037
      %s4060 = scalar_lea.vmem %s6, 192
      %v4061 = vld [vmem:[%s4060] sm:$0xf]
      %v4062 = vld [vmem:[%s4060 + $0x4] sm:$0xf]
      %v4063 = vld [vmem:[%s4060 + $0x8] sm:$0xf]
      %v4064 = vld [vmem:[%s4060 + $0xc] sm:$0xf]
      %v4065 = vld [vmem:[%s4060 + $0x10] sm:$0xf]
      %v4066 = vld [vmem:[%s4060 + $0x14] sm:$0xf]
      %v4067 = vld [vmem:[%s4060 + $0x18] sm:$0xf]
      %v4068 = vld [vmem:[%s4060 + $0x1c] sm:$0xf]
      %v4069 = vld [vmem:[%s4060 + $0x20] sm:$0xf]
      %v4070 = vld [vmem:[%s4060 + $0x24] sm:$0xf]
      %v4071 = vld [vmem:[%s4060 + $0x28] sm:$0xf]
      %v4072 = vld [vmem:[%s4060 + $0x2c] sm:$0xf]
      %v4073 = vld [vmem:[%s4060 + $0x30] sm:$0xf]
      %v4074 = vld [vmem:[%s4060 + $0x34] sm:$0xf]
      %v4075 = vld [vmem:[%s4060 + $0x38] sm:$0xf]
      %v4076 = vld [vmem:[%s4060 + $0x3c] sm:$0xf]
      %s4077 = scalar_lea.vmem %s7, 3
      %v4078 = vld [vmem:[%s4077] sm:$0x1]
      %v4080 = vlaneseq
      %v4081 = vshrl.u32 %v4080, 7
      %v4082 = vsub.s32 0, %v4081
      %v4083 = vrot.slane %v4078, %v4082
      %v4101 = vunpack.c.l.b16 %v4061
      %v4102 = vunpack.c.l.b16 %v4062
      %v4103 = vunpack.c.l.b16 %v4063
      %v4104 = vunpack.c.l.b16 %v4064
      %v4105 = vunpack.c.l.b16 %v4065
      %v4106 = vunpack.c.l.b16 %v4066
      %v4107 = vunpack.c.l.b16 %v4067
      %v4108 = vunpack.c.l.b16 %v4068
      %v4109 = vunpack.c.l.b16 %v4069
      %v4110 = vunpack.c.l.b16 %v4070
      %v4111 = vunpack.c.l.b16 %v4071
      %v4112 = vunpack.c.l.b16 %v4072
      %v4113 = vunpack.c.l.b16 %v4073
      %v4114 = vunpack.c.l.b16 %v4074
      %v4115 = vunpack.c.l.b16 %v4075
      %v4116 = vunpack.c.l.b16 %v4076
      %v4117 = vpack.c.b16 %v4102, %v4101
      %v4118 = vpack.c.b16 %v4104, %v4103
      %v4119 = vpack.c.b16 %v4106, %v4105
      %v4120 = vpack.c.b16 %v4108, %v4107
      %v4121 = vpack.c.b16 %v4110, %v4109
      %v4122 = vpack.c.b16 %v4112, %v4111
      %v4123 = vpack.c.b16 %v4114, %v4113
      %v4124 = vpack.c.b16 %v4116, %v4115
      %4133 = vmatprep.subr.bf16.mxu0 0
      %4134 = vmatpush1.bf16.msra.mxu0 %v4117
      %4135 = vmatprep.subr.bf16.mxu0 0
      %4136 = vmatpush1.bf16.msra.mxu0 %v4118
      %4137 = vmatprep.subr.bf16.mxu0 0
      %4138 = vmatpush1.bf16.msra.mxu0 %v4119
      %4139 = vmatprep.subr.bf16.mxu0 0
      %4140 = vmatpush1.bf16.msra.mxu0 %v4120
      %4141 = vmatprep.subr.bf16.mxu0 0
      %4142 = vmatpush1.bf16.msra.mxu0 %v4121
      %4143 = vmatprep.subr.bf16.mxu0 0
      %4144 = vmatpush1.bf16.msra.mxu0 %v4122
      %4145 = vmatprep.subr.bf16.mxu0 0
      %4146 = vmatpush1.bf16.msra.mxu0 %v4123
      %4147 = vmatprep.subr.bf16.mxu0 0
      %4148 = vmatpush1.bf16.msra.mxu0 %v4124
      %4149 = vmatprep.subr.bf16.mxu0 0
      %4150 = vmatpush1.bf16.msra.mxu0 0
      %4151 = vmatprep.subr.bf16.mxu0 0
      %4152 = vmatpush1.bf16.msra.mxu0 0
      %4153 = vmatprep.subr.bf16.mxu0 0
      %4154 = vmatpush1.bf16.msra.mxu0 0
      %4155 = vmatprep.subr.bf16.mxu0 0
      %4156 = vmatpush1.bf16.msra.mxu0 0
      %4157 = vmatprep.subr.bf16.mxu0 0
      %4158 = vmatpush1.bf16.msra.mxu0 0
      %4159 = vmatprep.subr.bf16.mxu0 0
      %4160 = vmatpush1.bf16.msra.mxu0 0
      %4161 = vmatprep.subr.bf16.mxu0 0
      %4162 = vmatpush1.bf16.msra.mxu0 0
      %4163 = vmatprep.subr.bf16.mxu0 0
      %4164 = vmatpush1.bf16.msra.mxu0 0
      %4165 = vmatprep.mubr.bf16.mxu0 0
      %4166 = vmatmul.mubr.bf16.gmra.mrb[0].mxu0 %v4039
      %v4167 = vpop.f32.mrb[0].mxu0
      %v4168 = vadd.f32 %v4083, %v4167
      %v4169 = vpop.f32.mrb[0].mxu0
      %v4170 = vpop.f32.mrb[0].mxu0
      %v4171 = vadd.f32 %v4083, %v4170
      %v4172 = vpop.f32.mrb[0].mxu0
      %4173 = vmatprep.mubr.bf16.mxu0 0
      %4174 = vmatmul.mubr.bf16.gmra.mrb[0].mxu0 %v4040
      %v4175 = vpop.f32.mrb[0].mxu0
      %v4176 = vadd.f32 %v4083, %v4175
      %v4177 = vpop.f32.mrb[0].mxu0
      %v4178 = vpop.f32.mrb[0].mxu0
      %v4179 = vadd.f32 %v4083, %v4178
      %v4180 = vpop.f32.mrb[0].mxu0
      %4181 = vmatprep.mubr.bf16.mxu0 0
      %4182 = vmatmul.mubr.bf16.gmra.mrb[0].mxu0 %v4041
      %v4183 = vpop.f32.mrb[0].mxu0
      %v4184 = vadd.f32 %v4083, %v4183
      %v4185 = vpop.f32.mrb[0].mxu0
      %v4186 = vpop.f32.mrb[0].mxu0
      %v4187 = vadd.f32 %v4083, %v4186
      %v4188 = vpop.f32.mrb[0].mxu0
      %4189 = vmatprep.mubr.bf16.mxu0 0
      %4190 = vmatmul.mubr.bf16.gmra.mrb[0].mxu0 %v4042
      %v4191 = vpop.f32.mrb[0].mxu0
      %v4192 = vadd.f32 %v4083, %v4191
      %v4193 = vpop.f32.mrb[0].mxu0
      %v4194 = vpop.f32.mrb[0].mxu0
      %v4195 = vadd.f32 %v4083, %v4194
      %v4196 = vpop.f32.mrb[0].mxu0
      %4197 = vmatprep.mubr.bf16.mxu0 0
      %4198 = vmatmul.mubr.bf16.gmra.mrb[0].mxu0 %v4043
      %v4199 = vpop.f32.mrb[0].mxu0
      %v4200 = vadd.f32 %v4083, %v4199
      %v4201 = vpop.f32.mrb[0].mxu0
      %v4202 = vpop.f32.mrb[0].mxu0
      %v4203 = vadd.f32 %v4083, %v4202
      %v4204 = vpop.f32.mrb[0].mxu0
      %4205 = vmatprep.mubr.bf16.mxu0 0
      %4206 = vmatmul.mubr.bf16.gmra.mrb[0].mxu0 %v4044
      %v4207 = vpop.f32.mrb[0].mxu0
      %v4208 = vadd.f32 %v4083, %v4207
      %v4209 = vpop.f32.mrb[0].mxu0
      %v4210 = vpop.f32.mrb[0].mxu0
      %v4211 = vadd.f32 %v4083, %v4210
      %v4212 = vpop.f32.mrb[0].mxu0
      %4213 = vmatprep.mubr.bf16.mxu0 0
      %4214 = vmatmul.mubr.bf16.gmra.mrb[0].mxu0 %v4045
      %v4215 = vpop.f32.mrb[0].mxu0
      %v4216 = vadd.f32 %v4083, %v4215
      %v4217 = vpop.f32.mrb[0].mxu0
      %v4218 = vpop.f32.mrb[0].mxu0
      %v4219 = vadd.f32 %v4083, %v4218
      %v4220 = vpop.f32.mrb[0].mxu0
      %4221 = vmatprep.mubr.bf16.mxu0 0
      %4222 = vmatmul.mubr.bf16.gmra.mrb[0].mxu0 %v4046
      %v4223 = vpop.f32.mrb[0].mxu0
      %v4224 = vadd.f32 %v4083, %v4223
      %v4225 = vpop.f32.mrb[0].mxu0
      %v4226 = vpop.f32.mrb[0].mxu0
      %v4227 = vadd.f32 %v4083, %v4226
      %v4228 = vpop.f32.mrb[0].mxu0
      %4229 = vmatprep.mubr.bf16.mxu0 0
      %4230 = vmatmul.mubr.bf16.gmra.mrb[0].mxu0 %v4047
      %v4231 = vpop.f32.mrb[0].mxu0
      %v4232 = vadd.f32 %v4083, %v4231
      %v4233 = vpop.f32.mrb[0].mxu0
      %v4234 = vpop.f32.mrb[0].mxu0
      %v4235 = vadd.f32 %v4083, %v4234
      %v4236 = vpop.f32.mrb[0].mxu0
      %4237 = vmatprep.mubr.bf16.mxu0 0
      %4238 = vmatmul.mubr.bf16.gmra.mrb[0].mxu0 %v4048
      %v4239 = vpop.f32.mrb[0].mxu0
      %v4240 = vadd.f32 %v4083, %v4239
      %v4241 = vpop.f32.mrb[0].mxu0
      %v4242 = vpop.f32.mrb[0].mxu0
      %v4243 = vadd.f32 %v4083, %v4242
      %v4244 = vpop.f32.mrb[0].mxu0
      %4245 = vmatprep.mubr.bf16.mxu0 0
      %4246 = vmatmul.mubr.bf16.gmra.mrb[0].mxu0 %v4049
      %v4247 = vpop.f32.mrb[0].mxu0
      %v4248 = vadd.f32 %v4083, %v4247
      %v4249 = vpop.f32.mrb[0].mxu0
      %v4250 = vpop.f32.mrb[0].mxu0
      %v4251 = vadd.f32 %v4083, %v4250
      %v4252 = vpop.f32.mrb[0].mxu0
      %4253 = vmatprep.mubr.bf16.mxu0 0
      %4254 = vmatmul.mubr.bf16.gmra.mrb[0].mxu0 %v4050
      %v4255 = vpop.f32.mrb[0].mxu0
      %v4256 = vadd.f32 %v4083, %v4255
      %v4257 = vpop.f32.mrb[0].mxu0
      %v4258 = vpop.f32.mrb[0].mxu0
      %v4259 = vadd.f32 %v4083, %v4258
      %v4260 = vpop.f32.mrb[0].mxu0
      %4261 = vmatprep.mubr.bf16.mxu0 0
      %4262 = vmatmul.mubr.bf16.gmra.mrb[0].mxu0 %v4051
      %v4263 = vpop.f32.mrb[0].mxu0
      %v4264 = vadd.f32 %v4083, %v4263
      %v4265 = vpop.f32.mrb[0].mxu0
      %v4266 = vpop.f32.mrb[0].mxu0
      %v4267 = vadd.f32 %v4083, %v4266
      %v4268 = vpop.f32.mrb[0].mxu0
      %4269 = vmatprep.mubr.bf16.mxu0 0
      %4270 = vmatmul.mubr.bf16.gmra.mrb[0].mxu0 %v4052
      %v4271 = vpop.f32.mrb[0].mxu0
      %v4272 = vadd.f32 %v4083, %v4271
      %v4273 = vpop.f32.mrb[0].mxu0
      %v4274 = vpop.f32.mrb[0].mxu0
      %v4275 = vadd.f32 %v4083, %v4274
      %v4276 = vpop.f32.mrb[0].mxu0
      %4277 = vmatprep.mubr.bf16.mxu0 0
      %4278 = vmatmul.mubr.bf16.gmra.mrb[0].mxu0 %v4053
      %v4279 = vpop.f32.mrb[0].mxu0
      %v4280 = vadd.f32 %v4083, %v4279
      %v4281 = vpop.f32.mrb[0].mxu0
      %v4282 = vpop.f32.mrb[0].mxu0
      %v4283 = vadd.f32 %v4083, %v4282
      %v4284 = vpop.f32.mrb[0].mxu0
      %4285 = vmatprep.mubr.bf16.mxu0 0
      %4286 = vmatmul.mubr.bf16.gmra.mrb[0].mxu0 %v4054
      %v4287 = vpop.f32.mrb[0].mxu0
      %v4288 = vadd.f32 %v4083, %v4287
      %v4289 = vpop.f32.mrb[0].mxu0
      %v4290 = vpop.f32.mrb[0].mxu0
      %v4291 = vadd.f32 %v4083, %v4290
      %v4292 = vpop.f32.mrb[0].mxu0
      %4293 = vmatprep.mubr.bf16.mxu0 0
      %4294 = vmatmul.mubr.bf16.gmra.mrb[0].mxu0 %v4055
      %v4295 = vpop.f32.mrb[0].mxu0
      %v4296 = vadd.f32 %v4083, %v4295
      %v4297 = vpop.f32.mrb[0].mxu0
      %v4298 = vpop.f32.mrb[0].mxu0
      %v4299 = vadd.f32 %v4083, %v4298
      %v4300 = vpop.f32.mrb[0].mxu0
      %4301 = vmatprep.mubr.bf16.mxu0 0
      %4302 = vmatmul.mubr.bf16.gmra.mrb[0].mxu0 %v4056
      %v4303 = vpop.f32.mrb[0].mxu0
      %v4304 = vadd.f32 %v4083, %v4303
      %v4305 = vpop.f32.mrb[0].mxu0
      %v4306 = vpop.f32.mrb[0].mxu0
      %v4307 = vadd.f32 %v4083, %v4306
      %v4308 = vpop.f32.mrb[0].mxu0
      %4309 = vmatprep.mubr.bf16.mxu0 0
      %4310 = vmatmul.mubr.bf16.gmra.mrb[0].mxu0 %v4057
      %v4311 = vpop.f32.mrb[0].mxu0
      %v4312 = vadd.f32 %v4083, %v4311
      %v4313 = vpop.f32.mrb[0].mxu0
      %v4314 = vpop.f32.mrb[0].mxu0
      %v4315 = vadd.f32 %v4083, %v4314
      %v4316 = vpop.f32.mrb[0].mxu0
      %4317 = vmatprep.mubr.bf16.mxu0 0
      %4318 = vmatmul.mubr.bf16.gmra.mrb[0].mxu0 %v4058
      %v4319 = vpop.f32.mrb[0].mxu0
      %v4320 = vadd.f32 %v4083, %v4319
      %v4321 = vpop.f32.mrb[0].mxu0
      %v4322 = vpop.f32.mrb[0].mxu0
      %v4323 = vadd.f32 %v4083, %v4322
      %v4324 = vpop.f32.mrb[0].mxu0
      %4325 = vmatprep.mubr.bf16.mxu0 0
      %4326 = vmatmul.mubr.bf16.gmra.mrb[0].mxu0 %v4059
      %v4327 = vpop.f32.mrb[0].mxu0
      %v4328 = vadd.f32 %v4083, %v4327
      %v4329 = vpop.f32.mrb[0].mxu0
      %v4330 = vpop.f32.mrb[0].mxu0
      %v4331 = vadd.f32 %v4083, %v4330
      %v4332 = vpop.f32.mrb[0].mxu0
      %4333 = vdwg.mxu0
      %v4334 = vadd.f32 %v3660, %v4168
      %v4335 = vadd.f32 %v3661, %v4171
      %v4336 = vadd.f32 %v3662, %v4176
      %v4337 = vadd.f32 %v3663, %v4179
      %v4338 = vadd.f32 %v3664, %v4184
      %v4339 = vadd.f32 %v3665, %v4187
      %v4340 = vadd.f32 %v3666, %v4192
      %v4341 = vadd.f32 %v3667, %v4195
      %v4342 = vadd.f32 %v3668, %v4200
      %v4343 = vadd.f32 %v3669, %v4203
      %v4344 = vadd.f32 %v3670, %v4208
      %v4345 = vadd.f32 %v3671, %v4211
      %v4346 = vadd.f32 %v3672, %v4216
      %v4347 = vadd.f32 %v3673, %v4219
      %v4348 = vadd.f32 %v3674, %v4224
      %v4349 = vadd.f32 %v3675, %v4227
      %v4350 = vadd.f32 %v3676, %v4232
      %v4351 = vadd.f32 %v3677, %v4235
      %v4352 = vadd.f32 %v3678, %v4240
      %v4353 = vadd.f32 %v3679, %v4243
      %v4354 = vadd.f32 %v3680, %v4248
      %v4355 = vadd.f32 %v3681, %v4251
      %v4356 = vadd.f32 %v3682, %v4256
      %v4357 = vadd.f32 %v3683, %v4259
      %v4358 = vadd.f32 %v3684, %v4264
      %v4359 = vadd.f32 %v3685, %v4267
      %v4360 = vadd.f32 %v3686, %v4272
      %v4361 = vadd.f32 %v3687, %v4275
      %v4362 = vadd.f32 %v3688, %v4280
      %v4363 = vadd.f32 %v3689, %v4283
      %v4364 = vadd.f32 %v3690, %v4288
      %v4365 = vadd.f32 %v3691, %v4291
      %v4366 = vadd.f32 %v3692, %v4296
      %v4367 = vadd.f32 %v3693, %v4299
      %v4368 = vadd.f32 %v3694, %v4304
      %v4369 = vadd.f32 %v3695, %v4307
      %v4370 = vadd.f32 %v3696, %v4312
      %v4371 = vadd.f32 %v3697, %v4315
      %v4372 = vadd.f32 %v3698, %v4320
      %v4373 = vadd.f32 %v3699, %v4323
      %v4374 = vadd.f32 %v3700, %v4328
      %v4375 = vadd.f32 %v3701, %v4331
      %v4376 = vpack.c.bf16 %v4335, %v4334
      %v4377 = vpack.c.bf16 %v4337, %v4336
      %v4378 = vpack.c.bf16 %v4339, %v4338
      %v4379 = vpack.c.bf16 %v4341, %v4340
      %v4380 = vpack.c.bf16 %v4343, %v4342
      %v4381 = vpack.c.bf16 %v4345, %v4344
      %v4382 = vpack.c.bf16 %v4347, %v4346
      %v4383 = vpack.c.bf16 %v4349, %v4348
      %v4384 = vpack.c.bf16 %v4351, %v4350
      %v4385 = vpack.c.bf16 %v4353, %v4352
      %v4386 = vpack.c.bf16 %v4355, %v4354
      %v4387 = vpack.c.bf16 %v4357, %v4356
      %v4388 = vpack.c.bf16 %v4359, %v4358
      %v4389 = vpack.c.bf16 %v4361, %v4360
      %v4390 = vpack.c.bf16 %v4363, %v4362
      %v4391 = vpack.c.bf16 %v4365, %v4364
      %v4392 = vpack.c.bf16 %v4367, %v4366
      %v4393 = vpack.c.bf16 %v4369, %v4368
      %v4394 = vpack.c.bf16 %v4371, %v4370
      %v4395 = vpack.c.bf16 %v4373, %v4372
      %v4396 = vpack.c.bf16 %v4375, %v4374
      %s4397 = scalar_lea.vmem %s4, 256
      %v4398 = vld [vmem:[%s4397] sm:$0xf]
      %v4399 = vld [vmem:[%s4397 + $0x4] sm:$0xf]
      %v4400 = vld [vmem:[%s4397 + $0x8] sm:$0xf]
      %v4401 = vld [vmem:[%s4397 + $0xc] sm:$0xf]
      %v4402 = vld [vmem:[%s4397 + $0x10] sm:$0xf]
      %v4403 = vld [vmem:[%s4397 + $0x14] sm:$0xf]
      %v4404 = vld [vmem:[%s4397 + $0x18] sm:$0xf]
      %v4405 = vld [vmem:[%s4397 + $0x1c] sm:$0xf]
      %v4406 = vld [vmem:[%s4397 + $0x20] sm:$0xf]
      %v4407 = vld [vmem:[%s4397 + $0x24] sm:$0xf]
      %v4408 = vld [vmem:[%s4397 + $0x28] sm:$0xf]
      %v4409 = vld [vmem:[%s4397 + $0x2c] sm:$0xf]
      %v4410 = vld [vmem:[%s4397 + $0x30] sm:$0xf]
      %v4411 = vld [vmem:[%s4397 + $0x34] sm:$0xf]
      %v4412 = vld [vmem:[%s4397 + $0x38] sm:$0xf]
      %v4413 = vld [vmem:[%s4397 + $0x3c] sm:$0xf]
      %s4414 = scalar_lea.vmem %s5, 4
      %v4415 = vld [vmem:[%s4414] sm:$0x1]
      %v4417 = vlaneseq
      %v4418 = vshrl.u32 %v4417, 7
      %v4419 = vsub.s32 0, %v4418
      %v4420 = vrot.slane %v4415, %v4419
      %v4438 = vunpack.c.l.b16 %v4398
      %v4439 = vunpack.c.l.b16 %v4399
      %v4440 = vunpack.c.l.b16 %v4400
      %v4441 = vunpack.c.l.b16 %v4401
      %v4442 = vunpack.c.l.b16 %v4402
      %v4443 = vunpack.c.l.b16 %v4403
      %v4444 = vunpack.c.l.b16 %v4404
      %v4445 = vunpack.c.l.b16 %v4405
      %v4446 = vunpack.c.l.b16 %v4406
      %v4447 = vunpack.c.l.b16 %v4407
      %v4448 = vunpack.c.l.b16 %v4408
      %v4449 = vunpack.c.l.b16 %v4409
      %v4450 = vunpack.c.l.b16 %v4410
      %v4451 = vunpack.c.l.b16 %v4411
      %v4452 = vunpack.c.l.b16 %v4412
      %v4453 = vunpack.c.l.b16 %v4413
      %v4454 = vpack.c.b16 %v4439, %v4438
      %v4455 = vpack.c.b16 %v4441, %v4440
      %v4456 = vpack.c.b16 %v4443, %v4442
      %v4457 = vpack.c.b16 %v4445, %v4444
      %v4458 = vpack.c.b16 %v4447, %v4446
      %v4459 = vpack.c.b16 %v4449, %v4448
      %v4460 = vpack.c.b16 %v4451, %v4450
      %v4461 = vpack.c.b16 %v4453, %v4452
      %4470 = vmatprep.subr.bf16.mxu0 0
      %4471 = vmatpush1.bf16.msra.mxu0 %v4454
      %4472 = vmatprep.subr.bf16.mxu0 0
      %4473 = vmatpush1.bf16.msra.mxu0 %v4455
      %4474 = vmatprep.subr.bf16.mxu0 0
      %4475 = vmatpush1.bf16.msra.mxu0 %v4456
      %4476 = vmatprep.subr.bf16.mxu0 0
      %4477 = vmatpush1.bf16.msra.mxu0 %v4457
      %4478 = vmatprep.subr.bf16.mxu0 0
      %4479 = vmatpush1.bf16.msra.mxu0 %v4458
      %4480 = vmatprep.subr.bf16.mxu0 0
      %4481 = vmatpush1.bf16.msra.mxu0 %v4459
      %4482 = vmatprep.subr.bf16.mxu0 0
      %4483 = vmatpush1.bf16.msra.mxu0 %v4460
      %4484 = vmatprep.subr.bf16.mxu0 0
      %4485 = vmatpush1.bf16.msra.mxu0 %v4461
      %4486 = vmatprep.subr.bf16.mxu0 0
      %4487 = vmatpush1.bf16.msra.mxu0 0
      %4488 = vmatprep.subr.bf16.mxu0 0
      %4489 = vmatpush1.bf16.msra.mxu0 0
      %4490 = vmatprep.subr.bf16.mxu0 0
      %4491 = vmatpush1.bf16.msra.mxu0 0
      %4492 = vmatprep.subr.bf16.mxu0 0
      %4493 = vmatpush1.bf16.msra.mxu0 0
      %4494 = vmatprep.subr.bf16.mxu0 0
      %4495 = vmatpush1.bf16.msra.mxu0 0
      %4496 = vmatprep.subr.bf16.mxu0 0
      %4497 = vmatpush1.bf16.msra.mxu0 0
      %4498 = vmatprep.subr.bf16.mxu0 0
      %4499 = vmatpush1.bf16.msra.mxu0 0
      %4500 = vmatprep.subr.bf16.mxu0 0
      %4501 = vmatpush1.bf16.msra.mxu0 0
      %4502 = vmatprep.mubr.bf16.mxu0 0
      %4503 = vmatmul.mubr.bf16.gmra.mrb[0].mxu0 %v4376
      %v4504 = vpop.f32.mrb[0].mxu0
      %v4505 = vadd.f32 %v4420, %v4504
      %v4506 = vpop.f32.mrb[0].mxu0
      %v4507 = vpop.f32.mrb[0].mxu0
      %v4508 = vadd.f32 %v4420, %v4507
      %v4509 = vpop.f32.mrb[0].mxu0
      %4510 = vmatprep.mubr.bf16.mxu0 0
      %4511 = vmatmul.mubr.bf16.gmra.mrb[0].mxu0 %v4377
      %v4512 = vpop.f32.mrb[0].mxu0
      %v4513 = vadd.f32 %v4420, %v4512
      %v4514 = vpop.f32.mrb[0].mxu0
      %v4515 = vpop.f32.mrb[0].mxu0
      %v4516 = vadd.f32 %v4420, %v4515
      %v4517 = vpop.f32.mrb[0].mxu0
      %4518 = vmatprep.mubr.bf16.mxu0 0
      %4519 = vmatmul.mubr.bf16.gmra.mrb[0].mxu0 %v4378
      %v4520 = vpop.f32.mrb[0].mxu0
      %v4521 = vadd.f32 %v4420, %v4520
      %v4522 = vpop.f32.mrb[0].mxu0
      %v4523 = vpop.f32.mrb[0].mxu0
      %v4524 = vadd.f32 %v4420, %v4523
      %v4525 = vpop.f32.mrb[0].mxu0
      %4526 = vmatprep.mubr.bf16.mxu0 0
      %4527 = vmatmul.mubr.bf16.gmra.mrb[0].mxu0 %v4379
      %v4528 = vpop.f32.mrb[0].mxu0
      %v4529 = vadd.f32 %v4420, %v4528
      %v4530 = vpop.f32.mrb[0].mxu0
      %v4531 = vpop.f32.mrb[0].mxu0
      %v4532 = vadd.f32 %v4420, %v4531
      %v4533 = vpop.f32.mrb[0].mxu0
      %4534 = vmatprep.mubr.bf16.mxu0 0
      %4535 = vmatmul.mubr.bf16.gmra.mrb[0].mxu0 %v4380
      %v4536 = vpop.f32.mrb[0].mxu0
      %v4537 = vadd.f32 %v4420, %v4536
      %v4538 = vpop.f32.mrb[0].mxu0
      %v4539 = vpop.f32.mrb[0].mxu0
      %v4540 = vadd.f32 %v4420, %v4539
      %v4541 = vpop.f32.mrb[0].mxu0
      %4542 = vmatprep.mubr.bf16.mxu0 0
      %4543 = vmatmul.mubr.bf16.gmra.mrb[0].mxu0 %v4381
      %v4544 = vpop.f32.mrb[0].mxu0
      %v4545 = vadd.f32 %v4420, %v4544
      %v4546 = vpop.f32.mrb[0].mxu0
      %v4547 = vpop.f32.mrb[0].mxu0
      %v4548 = vadd.f32 %v4420, %v4547
      %v4549 = vpop.f32.mrb[0].mxu0
      %4550 = vmatprep.mubr.bf16.mxu0 0
      %4551 = vmatmul.mubr.bf16.gmra.mrb[0].mxu0 %v4382
      %v4552 = vpop.f32.mrb[0].mxu0
      %v4553 = vadd.f32 %v4420, %v4552
      %v4554 = vpop.f32.mrb[0].mxu0
      %v4555 = vpop.f32.mrb[0].mxu0
      %v4556 = vadd.f32 %v4420, %v4555
      %v4557 = vpop.f32.mrb[0].mxu0
      %4558 = vmatprep.mubr.bf16.mxu0 0
      %4559 = vmatmul.mubr.bf16.gmra.mrb[0].mxu0 %v4383
      %v4560 = vpop.f32.mrb[0].mxu0
      %v4561 = vadd.f32 %v4420, %v4560
      %v4562 = vpop.f32.mrb[0].mxu0
      %v4563 = vpop.f32.mrb[0].mxu0
      %v4564 = vadd.f32 %v4420, %v4563
      %v4565 = vpop.f32.mrb[0].mxu0
      %4566 = vmatprep.mubr.bf16.mxu0 0
      %4567 = vmatmul.mubr.bf16.gmra.mrb[0].mxu0 %v4384
      %v4568 = vpop.f32.mrb[0].mxu0
      %v4569 = vadd.f32 %v4420, %v4568
      %v4570 = vpop.f32.mrb[0].mxu0
      %v4571 = vpop.f32.mrb[0].mxu0
      %v4572 = vadd.f32 %v4420, %v4571
      %v4573 = vpop.f32.mrb[0].mxu0
      %4574 = vmatprep.mubr.bf16.mxu0 0
      %4575 = vmatmul.mubr.bf16.gmra.mrb[0].mxu0 %v4385
      %v4576 = vpop.f32.mrb[0].mxu0
      %v4577 = vadd.f32 %v4420, %v4576
      %v4578 = vpop.f32.mrb[0].mxu0
      %v4579 = vpop.f32.mrb[0].mxu0
      %v4580 = vadd.f32 %v4420, %v4579
      %v4581 = vpop.f32.mrb[0].mxu0
      %4582 = vmatprep.mubr.bf16.mxu0 0
      %4583 = vmatmul.mubr.bf16.gmra.mrb[0].mxu0 %v4386
      %v4584 = vpop.f32.mrb[0].mxu0
      %v4585 = vadd.f32 %v4420, %v4584
      %v4586 = vpop.f32.mrb[0].mxu0
      %v4587 = vpop.f32.mrb[0].mxu0
      %v4588 = vadd.f32 %v4420, %v4587
      %v4589 = vpop.f32.mrb[0].mxu0
      %4590 = vmatprep.mubr.bf16.mxu0 0
      %4591 = vmatmul.mubr.bf16.gmra.mrb[0].mxu0 %v4387
      %v4592 = vpop.f32.mrb[0].mxu0
      %v4593 = vadd.f32 %v4420, %v4592
      %v4594 = vpop.f32.mrb[0].mxu0
      %v4595 = vpop.f32.mrb[0].mxu0
      %v4596 = vadd.f32 %v4420, %v4595
      %v4597 = vpop.f32.mrb[0].mxu0
      %4598 = vmatprep.mubr.bf16.mxu0 0
      %4599 = vmatmul.mubr.bf16.gmra.mrb[0].mxu0 %v4388
      %v4600 = vpop.f32.mrb[0].mxu0
      %v4601 = vadd.f32 %v4420, %v4600
      %v4602 = vpop.f32.mrb[0].mxu0
      %v4603 = vpop.f32.mrb[0].mxu0
      %v4604 = vadd.f32 %v4420, %v4603
      %v4605 = vpop.f32.mrb[0].mxu0
      %4606 = vmatprep.mubr.bf16.mxu0 0
      %4607 = vmatmul.mubr.bf16.gmra.mrb[0].mxu0 %v4389
      %v4608 = vpop.f32.mrb[0].mxu0
      %v4609 = vadd.f32 %v4420, %v4608
      %v4610 = vpop.f32.mrb[0].mxu0
      %v4611 = vpop.f32.mrb[0].mxu0
      %v4612 = vadd.f32 %v4420, %v4611
      %v4613 = vpop.f32.mrb[0].mxu0
      %4614 = vmatprep.mubr.bf16.mxu0 0
      %4615 = vmatmul.mubr.bf16.gmra.mrb[0].mxu0 %v4390
      %v4616 = vpop.f32.mrb[0].mxu0
      %v4617 = vadd.f32 %v4420, %v4616
      %v4618 = vpop.f32.mrb[0].mxu0
      %v4619 = vpop.f32.mrb[0].mxu0
      %v4620 = vadd.f32 %v4420, %v4619
      %v4621 = vpop.f32.mrb[0].mxu0
      %4622 = vmatprep.mubr.bf16.mxu0 0
      %4623 = vmatmul.mubr.bf16.gmra.mrb[0].mxu0 %v4391
      %v4624 = vpop.f32.mrb[0].mxu0
      %v4625 = vadd.f32 %v4420, %v4624
      %v4626 = vpop.f32.mrb[0].mxu0
      %v4627 = vpop.f32.mrb[0].mxu0
      %v4628 = vadd.f32 %v4420, %v4627
      %v4629 = vpop.f32.mrb[0].mxu0
      %4630 = vmatprep.mubr.bf16.mxu0 0
      %4631 = vmatmul.mubr.bf16.gmra.mrb[0].mxu0 %v4392
      %v4632 = vpop.f32.mrb[0].mxu0
      %v4633 = vadd.f32 %v4420, %v4632
      %v4634 = vpop.f32.mrb[0].mxu0
      %v4635 = vpop.f32.mrb[0].mxu0
      %v4636 = vadd.f32 %v4420, %v4635
      %v4637 = vpop.f32.mrb[0].mxu0
      %4638 = vmatprep.mubr.bf16.mxu0 0
      %4639 = vmatmul.mubr.bf16.gmra.mrb[0].mxu0 %v4393
      %v4640 = vpop.f32.mrb[0].mxu0
      %v4641 = vadd.f32 %v4420, %v4640
      %v4642 = vpop.f32.mrb[0].mxu0
      %v4643 = vpop.f32.mrb[0].mxu0
      %v4644 = vadd.f32 %v4420, %v4643
      %v4645 = vpop.f32.mrb[0].mxu0
      %4646 = vmatprep.mubr.bf16.mxu0 0
      %4647 = vmatmul.mubr.bf16.gmra.mrb[0].mxu0 %v4394
      %v4648 = vpop.f32.mrb[0].mxu0
      %v4649 = vadd.f32 %v4420, %v4648
      %v4650 = vpop.f32.mrb[0].mxu0
      %v4651 = vpop.f32.mrb[0].mxu0
      %v4652 = vadd.f32 %v4420, %v4651
      %v4653 = vpop.f32.mrb[0].mxu0
      %4654 = vmatprep.mubr.bf16.mxu0 0
      %4655 = vmatmul.mubr.bf16.gmra.mrb[0].mxu0 %v4395
      %v4656 = vpop.f32.mrb[0].mxu0
      %v4657 = vadd.f32 %v4420, %v4656
      %v4658 = vpop.f32.mrb[0].mxu0
      %v4659 = vpop.f32.mrb[0].mxu0
      %v4660 = vadd.f32 %v4420, %v4659
      %v4661 = vpop.f32.mrb[0].mxu0
      %4662 = vmatprep.mubr.bf16.mxu0 0
      %4663 = vmatmul.mubr.bf16.gmra.mrb[0].mxu0 %v4396
      %v4664 = vpop.f32.mrb[0].mxu0
      %v4665 = vadd.f32 %v4420, %v4664
      %v4666 = vpop.f32.mrb[0].mxu0
      %v4667 = vpop.f32.mrb[0].mxu0
      %v4668 = vadd.f32 %v4420, %v4667
      %v4669 = vpop.f32.mrb[0].mxu0
      %4670 = vdwg.mxu0
      %v4671 = vmax.f32 %v4505, 0.0
      %v4672 = vmax.f32 %v4508, 0.0
      %v4673 = vmax.f32 %v4513, 0.0
      %v4674 = vmax.f32 %v4516, 0.0
      %v4675 = vmax.f32 %v4521, 0.0
      %v4676 = vmax.f32 %v4524, 0.0
      %v4677 = vmax.f32 %v4529, 0.0
      %v4678 = vmax.f32 %v4532, 0.0
      %v4679 = vmax.f32 %v4537, 0.0
      %v4680 = vmax.f32 %v4540, 0.0
      %v4681 = vmax.f32 %v4545, 0.0
      %v4682 = vmax.f32 %v4548, 0.0
      %v4683 = vmax.f32 %v4553, 0.0
      %v4684 = vmax.f32 %v4556, 0.0
      %v4685 = vmax.f32 %v4561, 0.0
      %v4686 = vmax.f32 %v4564, 0.0
      %v4687 = vmax.f32 %v4569, 0.0
      %v4688 = vmax.f32 %v4572, 0.0
      %v4689 = vmax.f32 %v4577, 0.0
      %v4690 = vmax.f32 %v4580, 0.0
      %v4691 = vmax.f32 %v4585, 0.0
      %v4692 = vmax.f32 %v4588, 0.0
      %v4693 = vmax.f32 %v4593, 0.0
      %v4694 = vmax.f32 %v4596, 0.0
      %v4695 = vmax.f32 %v4601, 0.0
      %v4696 = vmax.f32 %v4604, 0.0
      %v4697 = vmax.f32 %v4609, 0.0
      %v4698 = vmax.f32 %v4612, 0.0
      %v4699 = vmax.f32 %v4617, 0.0
      %v4700 = vmax.f32 %v4620, 0.0
      %v4701 = vmax.f32 %v4625, 0.0
      %v4702 = vmax.f32 %v4628, 0.0
      %v4703 = vmax.f32 %v4633, 0.0
      %v4704 = vmax.f32 %v4636, 0.0
      %v4705 = vmax.f32 %v4641, 0.0
      %v4706 = vmax.f32 %v4644, 0.0
      %v4707 = vmax.f32 %v4649, 0.0
      %v4708 = vmax.f32 %v4652, 0.0
      %v4709 = vmax.f32 %v4657, 0.0
      %v4710 = vmax.f32 %v4660, 0.0
      %v4711 = vmax.f32 %v4665, 0.0
      %v4712 = vmax.f32 %v4668, 0.0
      %v4713 = vpack.c.bf16 %v4672, %v4671
      %v4714 = vpack.c.bf16 %v4674, %v4673
      %v4715 = vpack.c.bf16 %v4676, %v4675
      %v4716 = vpack.c.bf16 %v4678, %v4677
      %v4717 = vpack.c.bf16 %v4680, %v4679
      %v4718 = vpack.c.bf16 %v4682, %v4681
      %v4719 = vpack.c.bf16 %v4684, %v4683
      %v4720 = vpack.c.bf16 %v4686, %v4685
      %v4721 = vpack.c.bf16 %v4688, %v4687
      %v4722 = vpack.c.bf16 %v4690, %v4689
      %v4723 = vpack.c.bf16 %v4692, %v4691
      %v4724 = vpack.c.bf16 %v4694, %v4693
      %v4725 = vpack.c.bf16 %v4696, %v4695
      %v4726 = vpack.c.bf16 %v4698, %v4697
      %v4727 = vpack.c.bf16 %v4700, %v4699
      %v4728 = vpack.c.bf16 %v4702, %v4701
      %v4729 = vpack.c.bf16 %v4704, %v4703
      %v4730 = vpack.c.bf16 %v4706, %v4705
      %v4731 = vpack.c.bf16 %v4708, %v4707
      %v4732 = vpack.c.bf16 %v4710, %v4709
      %v4733 = vpack.c.bf16 %v4712, %v4711
      %s4734 = scalar_lea.vmem %s6, 256
      %v4735 = vld [vmem:[%s4734] sm:$0xf]
      %v4736 = vld [vmem:[%s4734 + $0x4] sm:$0xf]
      %v4737 = vld [vmem:[%s4734 + $0x8] sm:$0xf]
      %v4738 = vld [vmem:[%s4734 + $0xc] sm:$0xf]
      %v4739 = vld [vmem:[%s4734 + $0x10] sm:$0xf]
      %v4740 = vld [vmem:[%s4734 + $0x14] sm:$0xf]
      %v4741 = vld [vmem:[%s4734 + $0x18] sm:$0xf]
      %v4742 = vld [vmem:[%s4734 + $0x1c] sm:$0xf]
      %v4743 = vld [vmem:[%s4734 + $0x20] sm:$0xf]
      %v4744 = vld [vmem:[%s4734 + $0x24] sm:$0xf]
      %v4745 = vld [vmem:[%s4734 + $0x28] sm:$0xf]
      %v4746 = vld [vmem:[%s4734 + $0x2c] sm:$0xf]
      %v4747 = vld [vmem:[%s4734 + $0x30] sm:$0xf]
      %v4748 = vld [vmem:[%s4734 + $0x34] sm:$0xf]
      %v4749 = vld [vmem:[%s4734 + $0x38] sm:$0xf]
      %v4750 = vld [vmem:[%s4734 + $0x3c] sm:$0xf]
      %s4751 = scalar_lea.vmem %s7, 4
      %v4752 = vld [vmem:[%s4751] sm:$0x1]
      %v4754 = vlaneseq
      %v4755 = vshrl.u32 %v4754, 7
      %v4756 = vsub.s32 0, %v4755
      %v4757 = vrot.slane %v4752, %v4756
      %v4775 = vunpack.c.l.b16 %v4735
      %v4776 = vunpack.c.l.b16 %v4736
      %v4777 = vunpack.c.l.b16 %v4737
      %v4778 = vunpack.c.l.b16 %v4738
      %v4779 = vunpack.c.l.b16 %v4739
      %v4780 = vunpack.c.l.b16 %v4740
      %v4781 = vunpack.c.l.b16 %v4741
      %v4782 = vunpack.c.l.b16 %v4742
      %v4783 = vunpack.c.l.b16 %v4743
      %v4784 = vunpack.c.l.b16 %v4744
      %v4785 = vunpack.c.l.b16 %v4745
      %v4786 = vunpack.c.l.b16 %v4746
      %v4787 = vunpack.c.l.b16 %v4747
      %v4788 = vunpack.c.l.b16 %v4748
      %v4789 = vunpack.c.l.b16 %v4749
      %v4790 = vunpack.c.l.b16 %v4750
      %v4791 = vpack.c.b16 %v4776, %v4775
      %v4792 = vpack.c.b16 %v4778, %v4777
      %v4793 = vpack.c.b16 %v4780, %v4779
      %v4794 = vpack.c.b16 %v4782, %v4781
      %v4795 = vpack.c.b16 %v4784, %v4783
      %v4796 = vpack.c.b16 %v4786, %v4785
      %v4797 = vpack.c.b16 %v4788, %v4787
      %v4798 = vpack.c.b16 %v4790, %v4789
      %4807 = vmatprep.subr.bf16.mxu0 0
      %4808 = vmatpush1.bf16.msra.mxu0 %v4791
      %4809 = vmatprep.subr.bf16.mxu0 0
      %4810 = vmatpush1.bf16.msra.mxu0 %v4792
      %4811 = vmatprep.subr.bf16.mxu0 0
      %4812 = vmatpush1.bf16.msra.mxu0 %v4793
      %4813 = vmatprep.subr.bf16.mxu0 0
      %4814 = vmatpush1.bf16.msra.mxu0 %v4794
      %4815 = vmatprep.subr.bf16.mxu0 0
      %4816 = vmatpush1.bf16.msra.mxu0 %v4795
      %4817 = vmatprep.subr.bf16.mxu0 0
      %4818 = vmatpush1.bf16.msra.mxu0 %v4796
      %4819 = vmatprep.subr.bf16.mxu0 0
      %4820 = vmatpush1.bf16.msra.mxu0 %v4797
      %4821 = vmatprep.subr.bf16.mxu0 0
      %4822 = vmatpush1.bf16.msra.mxu0 %v4798
      %4823 = vmatprep.subr.bf16.mxu0 0
      %4824 = vmatpush1.bf16.msra.mxu0 0
      %4825 = vmatprep.subr.bf16.mxu0 0
      %4826 = vmatpush1.bf16.msra.mxu0 0
      %4827 = vmatprep.subr.bf16.mxu0 0
      %4828 = vmatpush1.bf16.msra.mxu0 0
      %4829 = vmatprep.subr.bf16.mxu0 0
      %4830 = vmatpush1.bf16.msra.mxu0 0
      %4831 = vmatprep.subr.bf16.mxu0 0
      %4832 = vmatpush1.bf16.msra.mxu0 0
      %4833 = vmatprep.subr.bf16.mxu0 0
      %4834 = vmatpush1.bf16.msra.mxu0 0
      %4835 = vmatprep.subr.bf16.mxu0 0
      %4836 = vmatpush1.bf16.msra.mxu0 0
      %4837 = vmatprep.subr.bf16.mxu0 0
      %4838 = vmatpush1.bf16.msra.mxu0 0
      %4839 = vmatprep.mubr.bf16.mxu0 0
      %4840 = vmatmul.mubr.bf16.gmra.mrb[0].mxu0 %v4713
      %v4841 = vpop.f32.mrb[0].mxu0
      %v4842 = vadd.f32 %v4757, %v4841
      %v4843 = vpop.f32.mrb[0].mxu0
      %v4844 = vpop.f32.mrb[0].mxu0
      %v4845 = vadd.f32 %v4757, %v4844
      %v4846 = vpop.f32.mrb[0].mxu0
      %4847 = vmatprep.mubr.bf16.mxu0 0
      %4848 = vmatmul.mubr.bf16.gmra.mrb[0].mxu0 %v4714
      %v4849 = vpop.f32.mrb[0].mxu0
      %v4850 = vadd.f32 %v4757, %v4849
      %v4851 = vpop.f32.mrb[0].mxu0
      %v4852 = vpop.f32.mrb[0].mxu0
      %v4853 = vadd.f32 %v4757, %v4852
      %v4854 = vpop.f32.mrb[0].mxu0
      %4855 = vmatprep.mubr.bf16.mxu0 0
      %4856 = vmatmul.mubr.bf16.gmra.mrb[0].mxu0 %v4715
      %v4857 = vpop.f32.mrb[0].mxu0
      %v4858 = vadd.f32 %v4757, %v4857
      %v4859 = vpop.f32.mrb[0].mxu0
      %v4860 = vpop.f32.mrb[0].mxu0
      %v4861 = vadd.f32 %v4757, %v4860
      %v4862 = vpop.f32.mrb[0].mxu0
      %4863 = vmatprep.mubr.bf16.mxu0 0
      %4864 = vmatmul.mubr.bf16.gmra.mrb[0].mxu0 %v4716
      %v4865 = vpop.f32.mrb[0].mxu0
      %v4866 = vadd.f32 %v4757, %v4865
      %v4867 = vpop.f32.mrb[0].mxu0
      %v4868 = vpop.f32.mrb[0].mxu0
      %v4869 = vadd.f32 %v4757, %v4868
      %v4870 = vpop.f32.mrb[0].mxu0
      %4871 = vmatprep.mubr.bf16.mxu0 0
      %4872 = vmatmul.mubr.bf16.gmra.mrb[0].mxu0 %v4717
      %v4873 = vpop.f32.mrb[0].mxu0
      %v4874 = vadd.f32 %v4757, %v4873
      %v4875 = vpop.f32.mrb[0].mxu0
      %v4876 = vpop.f32.mrb[0].mxu0
      %v4877 = vadd.f32 %v4757, %v4876
      %v4878 = vpop.f32.mrb[0].mxu0
      %4879 = vmatprep.mubr.bf16.mxu0 0
      %4880 = vmatmul.mubr.bf16.gmra.mrb[0].mxu0 %v4718
      %v4881 = vpop.f32.mrb[0].mxu0
      %v4882 = vadd.f32 %v4757, %v4881
      %v4883 = vpop.f32.mrb[0].mxu0
      %v4884 = vpop.f32.mrb[0].mxu0
      %v4885 = vadd.f32 %v4757, %v4884
      %v4886 = vpop.f32.mrb[0].mxu0
      %4887 = vmatprep.mubr.bf16.mxu0 0
      %4888 = vmatmul.mubr.bf16.gmra.mrb[0].mxu0 %v4719
      %v4889 = vpop.f32.mrb[0].mxu0
      %v4890 = vadd.f32 %v4757, %v4889
      %v4891 = vpop.f32.mrb[0].mxu0
      %v4892 = vpop.f32.mrb[0].mxu0
      %v4893 = vadd.f32 %v4757, %v4892
      %v4894 = vpop.f32.mrb[0].mxu0
      %4895 = vmatprep.mubr.bf16.mxu0 0
      %4896 = vmatmul.mubr.bf16.gmra.mrb[0].mxu0 %v4720
      %v4897 = vpop.f32.mrb[0].mxu0
      %v4898 = vadd.f32 %v4757, %v4897
      %v4899 = vpop.f32.mrb[0].mxu0
      %v4900 = vpop.f32.mrb[0].mxu0
      %v4901 = vadd.f32 %v4757, %v4900
      %v4902 = vpop.f32.mrb[0].mxu0
      %4903 = vmatprep.mubr.bf16.mxu0 0
      %4904 = vmatmul.mubr.bf16.gmra.mrb[0].mxu0 %v4721
      %v4905 = vpop.f32.mrb[0].mxu0
      %v4906 = vadd.f32 %v4757, %v4905
      %v4907 = vpop.f32.mrb[0].mxu0
      %v4908 = vpop.f32.mrb[0].mxu0
      %v4909 = vadd.f32 %v4757, %v4908
      %v4910 = vpop.f32.mrb[0].mxu0
      %4911 = vmatprep.mubr.bf16.mxu0 0
      %4912 = vmatmul.mubr.bf16.gmra.mrb[0].mxu0 %v4722
      %v4913 = vpop.f32.mrb[0].mxu0
      %v4914 = vadd.f32 %v4757, %v4913
      %v4915 = vpop.f32.mrb[0].mxu0
      %v4916 = vpop.f32.mrb[0].mxu0
      %v4917 = vadd.f32 %v4757, %v4916
      %v4918 = vpop.f32.mrb[0].mxu0
      %4919 = vmatprep.mubr.bf16.mxu0 0
      %4920 = vmatmul.mubr.bf16.gmra.mrb[0].mxu0 %v4723
      %v4921 = vpop.f32.mrb[0].mxu0
      %v4922 = vadd.f32 %v4757, %v4921
      %v4923 = vpop.f32.mrb[0].mxu0
      %v4924 = vpop.f32.mrb[0].mxu0
      %v4925 = vadd.f32 %v4757, %v4924
      %v4926 = vpop.f32.mrb[0].mxu0
      %4927 = vmatprep.mubr.bf16.mxu0 0
      %4928 = vmatmul.mubr.bf16.gmra.mrb[0].mxu0 %v4724
      %v4929 = vpop.f32.mrb[0].mxu0
      %v4930 = vadd.f32 %v4757, %v4929
      %v4931 = vpop.f32.mrb[0].mxu0
      %v4932 = vpop.f32.mrb[0].mxu0
      %v4933 = vadd.f32 %v4757, %v4932
      %v4934 = vpop.f32.mrb[0].mxu0
      %4935 = vmatprep.mubr.bf16.mxu0 0
      %4936 = vmatmul.mubr.bf16.gmra.mrb[0].mxu0 %v4725
      %v4937 = vpop.f32.mrb[0].mxu0
      %v4938 = vadd.f32 %v4757, %v4937
      %v4939 = vpop.f32.mrb[0].mxu0
      %v4940 = vpop.f32.mrb[0].mxu0
      %v4941 = vadd.f32 %v4757, %v4940
      %v4942 = vpop.f32.mrb[0].mxu0
      %4943 = vmatprep.mubr.bf16.mxu0 0
      %4944 = vmatmul.mubr.bf16.gmra.mrb[0].mxu0 %v4726
      %v4945 = vpop.f32.mrb[0].mxu0
      %v4946 = vadd.f32 %v4757, %v4945
      %v4947 = vpop.f32.mrb[0].mxu0
      %v4948 = vpop.f32.mrb[0].mxu0
      %v4949 = vadd.f32 %v4757, %v4948
      %v4950 = vpop.f32.mrb[0].mxu0
      %4951 = vmatprep.mubr.bf16.mxu0 0
      %4952 = vmatmul.mubr.bf16.gmra.mrb[0].mxu0 %v4727
      %v4953 = vpop.f32.mrb[0].mxu0
      %v4954 = vadd.f32 %v4757, %v4953
      %v4955 = vpop.f32.mrb[0].mxu0
      %v4956 = vpop.f32.mrb[0].mxu0
      %v4957 = vadd.f32 %v4757, %v4956
      %v4958 = vpop.f32.mrb[0].mxu0
      %4959 = vmatprep.mubr.bf16.mxu0 0
      %4960 = vmatmul.mubr.bf16.gmra.mrb[0].mxu0 %v4728
      %v4961 = vpop.f32.mrb[0].mxu0
      %v4962 = vadd.f32 %v4757, %v4961
      %v4963 = vpop.f32.mrb[0].mxu0
      %v4964 = vpop.f32.mrb[0].mxu0
      %v4965 = vadd.f32 %v4757, %v4964
      %v4966 = vpop.f32.mrb[0].mxu0
      %4967 = vmatprep.mubr.bf16.mxu0 0
      %4968 = vmatmul.mubr.bf16.gmra.mrb[0].mxu0 %v4729
      %v4969 = vpop.f32.mrb[0].mxu0
      %v4970 = vadd.f32 %v4757, %v4969
      %v4971 = vpop.f32.mrb[0].mxu0
      %v4972 = vpop.f32.mrb[0].mxu0
      %v4973 = vadd.f32 %v4757, %v4972
      %v4974 = vpop.f32.mrb[0].mxu0
      %4975 = vmatprep.mubr.bf16.mxu0 0
      %4976 = vmatmul.mubr.bf16.gmra.mrb[0].mxu0 %v4730
      %v4977 = vpop.f32.mrb[0].mxu0
      %v4978 = vadd.f32 %v4757, %v4977
      %v4979 = vpop.f32.mrb[0].mxu0
      %v4980 = vpop.f32.mrb[0].mxu0
      %v4981 = vadd.f32 %v4757, %v4980
      %v4982 = vpop.f32.mrb[0].mxu0
      %4983 = vmatprep.mubr.bf16.mxu0 0
      %4984 = vmatmul.mubr.bf16.gmra.mrb[0].mxu0 %v4731
      %v4985 = vpop.f32.mrb[0].mxu0
      %v4986 = vadd.f32 %v4757, %v4985
      %v4987 = vpop.f32.mrb[0].mxu0
      %v4988 = vpop.f32.mrb[0].mxu0
      %v4989 = vadd.f32 %v4757, %v4988
      %v4990 = vpop.f32.mrb[0].mxu0
      %4991 = vmatprep.mubr.bf16.mxu0 0
      %4992 = vmatmul.mubr.bf16.gmra.mrb[0].mxu0 %v4732
      %v4993 = vpop.f32.mrb[0].mxu0
      %v4994 = vadd.f32 %v4757, %v4993
      %v4995 = vpop.f32.mrb[0].mxu0
      %v4996 = vpop.f32.mrb[0].mxu0
      %v4997 = vadd.f32 %v4757, %v4996
      %v4998 = vpop.f32.mrb[0].mxu0
      %4999 = vmatprep.mubr.bf16.mxu0 0
      %5000 = vmatmul.mubr.bf16.gmra.mrb[0].mxu0 %v4733
      %v5001 = vpop.f32.mrb[0].mxu0
      %v5002 = vadd.f32 %v4757, %v5001
      %v5003 = vpop.f32.mrb[0].mxu0
      %v5004 = vpop.f32.mrb[0].mxu0
      %v5005 = vadd.f32 %v4757, %v5004
      %v5006 = vpop.f32.mrb[0].mxu0
      %5007 = vdwg.mxu0
      %v5008 = vadd.f32 %v4334, %v4842
      %v5009 = vadd.f32 %v4335, %v4845
      %v5010 = vadd.f32 %v4336, %v4850
      %v5011 = vadd.f32 %v4337, %v4853
      %v5012 = vadd.f32 %v4338, %v4858
      %v5013 = vadd.f32 %v4339, %v4861
      %v5014 = vadd.f32 %v4340, %v4866
      %v5015 = vadd.f32 %v4341, %v4869
      %v5016 = vadd.f32 %v4342, %v4874
      %v5017 = vadd.f32 %v4343, %v4877
      %v5018 = vadd.f32 %v4344, %v4882
      %v5019 = vadd.f32 %v4345, %v4885
      %v5020 = vadd.f32 %v4346, %v4890
      %v5021 = vadd.f32 %v4347, %v4893
      %v5022 = vadd.f32 %v4348, %v4898
      %v5023 = vadd.f32 %v4349, %v4901
      %v5024 = vadd.f32 %v4350, %v4906
      %v5025 = vadd.f32 %v4351, %v4909
      %v5026 = vadd.f32 %v4352, %v4914
      %v5027 = vadd.f32 %v4353, %v4917
      %v5028 = vadd.f32 %v4354, %v4922
      %v5029 = vadd.f32 %v4355, %v4925
      %v5030 = vadd.f32 %v4356, %v4930
      %v5031 = vadd.f32 %v4357, %v4933
      %v5032 = vadd.f32 %v4358, %v4938
      %v5033 = vadd.f32 %v4359, %v4941
      %v5034 = vadd.f32 %v4360, %v4946
      %v5035 = vadd.f32 %v4361, %v4949
      %v5036 = vadd.f32 %v4362, %v4954
      %v5037 = vadd.f32 %v4363, %v4957
      %v5038 = vadd.f32 %v4364, %v4962
      %v5039 = vadd.f32 %v4365, %v4965
      %v5040 = vadd.f32 %v4366, %v4970
      %v5041 = vadd.f32 %v4367, %v4973
      %v5042 = vadd.f32 %v4368, %v4978
      %v5043 = vadd.f32 %v4369, %v4981
      %v5044 = vadd.f32 %v4370, %v4986
      %v5045 = vadd.f32 %v4371, %v4989
      %v5046 = vadd.f32 %v4372, %v4994
      %v5047 = vadd.f32 %v4373, %v4997
      %v5048 = vadd.f32 %v4374, %v5002
      %v5049 = vadd.f32 %v4375, %v5005
      %v5050 = vpack.c.bf16 %v5009, %v5008
      %v5051 = vpack.c.bf16 %v5011, %v5010
      %v5052 = vpack.c.bf16 %v5013, %v5012
      %v5053 = vpack.c.bf16 %v5015, %v5014
      %v5054 = vpack.c.bf16 %v5017, %v5016
      %v5055 = vpack.c.bf16 %v5019, %v5018
      %v5056 = vpack.c.bf16 %v5021, %v5020
      %v5057 = vpack.c.bf16 %v5023, %v5022
      %v5058 = vpack.c.bf16 %v5025, %v5024
      %v5059 = vpack.c.bf16 %v5027, %v5026
      %v5060 = vpack.c.bf16 %v5029, %v5028
      %v5061 = vpack.c.bf16 %v5031, %v5030
      %v5062 = vpack.c.bf16 %v5033, %v5032
      %v5063 = vpack.c.bf16 %v5035, %v5034
      %v5064 = vpack.c.bf16 %v5037, %v5036
      %v5065 = vpack.c.bf16 %v5039, %v5038
      %v5066 = vpack.c.bf16 %v5041, %v5040
      %v5067 = vpack.c.bf16 %v5043, %v5042
      %v5068 = vpack.c.bf16 %v5045, %v5044
      %v5069 = vpack.c.bf16 %v5047, %v5046
      %v5070 = vpack.c.bf16 %v5049, %v5048
      %s5071 = scalar_lea.vmem %s4, 320
      %v5072 = vld [vmem:[%s5071] sm:$0xf]
      %v5073 = vld [vmem:[%s5071 + $0x4] sm:$0xf]
      %v5074 = vld [vmem:[%s5071 + $0x8] sm:$0xf]
      %v5075 = vld [vmem:[%s5071 + $0xc] sm:$0xf]
      %v5076 = vld [vmem:[%s5071 + $0x10] sm:$0xf]
      %v5077 = vld [vmem:[%s5071 + $0x14] sm:$0xf]
      %v5078 = vld [vmem:[%s5071 + $0x18] sm:$0xf]
      %v5079 = vld [vmem:[%s5071 + $0x1c] sm:$0xf]
      %v5080 = vld [vmem:[%s5071 + $0x20] sm:$0xf]
      %v5081 = vld [vmem:[%s5071 + $0x24] sm:$0xf]
      %v5082 = vld [vmem:[%s5071 + $0x28] sm:$0xf]
      %v5083 = vld [vmem:[%s5071 + $0x2c] sm:$0xf]
      %v5084 = vld [vmem:[%s5071 + $0x30] sm:$0xf]
      %v5085 = vld [vmem:[%s5071 + $0x34] sm:$0xf]
      %v5086 = vld [vmem:[%s5071 + $0x38] sm:$0xf]
      %v5087 = vld [vmem:[%s5071 + $0x3c] sm:$0xf]
      %s5088 = scalar_lea.vmem %s5, 5
      %v5089 = vld [vmem:[%s5088] sm:$0x1]
      %v5091 = vlaneseq
      %v5092 = vshrl.u32 %v5091, 7
      %v5093 = vsub.s32 0, %v5092
      %v5094 = vrot.slane %v5089, %v5093
      %v5112 = vunpack.c.l.b16 %v5072
      %v5113 = vunpack.c.l.b16 %v5073
      %v5114 = vunpack.c.l.b16 %v5074
      %v5115 = vunpack.c.l.b16 %v5075
      %v5116 = vunpack.c.l.b16 %v5076
      %v5117 = vunpack.c.l.b16 %v5077
      %v5118 = vunpack.c.l.b16 %v5078
      %v5119 = vunpack.c.l.b16 %v5079
      %v5120 = vunpack.c.l.b16 %v5080
      %v5121 = vunpack.c.l.b16 %v5081
      %v5122 = vunpack.c.l.b16 %v5082
      %v5123 = vunpack.c.l.b16 %v5083
      %v5124 = vunpack.c.l.b16 %v5084
      %v5125 = vunpack.c.l.b16 %v5085
      %v5126 = vunpack.c.l.b16 %v5086
      %v5127 = vunpack.c.l.b16 %v5087
      %v5128 = vpack.c.b16 %v5113, %v5112
      %v5129 = vpack.c.b16 %v5115, %v5114
      %v5130 = vpack.c.b16 %v5117, %v5116
      %v5131 = vpack.c.b16 %v5119, %v5118
      %v5132 = vpack.c.b16 %v5121, %v5120
      %v5133 = vpack.c.b16 %v5123, %v5122
      %v5134 = vpack.c.b16 %v5125, %v5124
      %v5135 = vpack.c.b16 %v5127, %v5126
      %5144 = vmatprep.subr.bf16.mxu0 0
      %5145 = vmatpush1.bf16.msra.mxu0 %v5128
      %5146 = vmatprep.subr.bf16.mxu0 0
      %5147 = vmatpush1.bf16.msra.mxu0 %v5129
      %5148 = vmatprep.subr.bf16.mxu0 0
      %5149 = vmatpush1.bf16.msra.mxu0 %v5130
      %5150 = vmatprep.subr.bf16.mxu0 0
      %5151 = vmatpush1.bf16.msra.mxu0 %v5131
      %5152 = vmatprep.subr.bf16.mxu0 0
      %5153 = vmatpush1.bf16.msra.mxu0 %v5132
      %5154 = vmatprep.subr.bf16.mxu0 0
      %5155 = vmatpush1.bf16.msra.mxu0 %v5133
      %5156 = vmatprep.subr.bf16.mxu0 0
      %5157 = vmatpush1.bf16.msra.mxu0 %v5134
      %5158 = vmatprep.subr.bf16.mxu0 0
      %5159 = vmatpush1.bf16.msra.mxu0 %v5135
      %5160 = vmatprep.subr.bf16.mxu0 0
      %5161 = vmatpush1.bf16.msra.mxu0 0
      %5162 = vmatprep.subr.bf16.mxu0 0
      %5163 = vmatpush1.bf16.msra.mxu0 0
      %5164 = vmatprep.subr.bf16.mxu0 0
      %5165 = vmatpush1.bf16.msra.mxu0 0
      %5166 = vmatprep.subr.bf16.mxu0 0
      %5167 = vmatpush1.bf16.msra.mxu0 0
      %5168 = vmatprep.subr.bf16.mxu0 0
      %5169 = vmatpush1.bf16.msra.mxu0 0
      %5170 = vmatprep.subr.bf16.mxu0 0
      %5171 = vmatpush1.bf16.msra.mxu0 0
      %5172 = vmatprep.subr.bf16.mxu0 0
      %5173 = vmatpush1.bf16.msra.mxu0 0
      %5174 = vmatprep.subr.bf16.mxu0 0
      %5175 = vmatpush1.bf16.msra.mxu0 0
      %5176 = vmatprep.mubr.bf16.mxu0 0
      %5177 = vmatmul.mubr.bf16.gmra.mrb[0].mxu0 %v5050
      %v5178 = vpop.f32.mrb[0].mxu0
      %v5179 = vadd.f32 %v5094, %v5178
      %v5180 = vpop.f32.mrb[0].mxu0
      %v5181 = vpop.f32.mrb[0].mxu0
      %v5182 = vadd.f32 %v5094, %v5181
      %v5183 = vpop.f32.mrb[0].mxu0
      %5184 = vmatprep.mubr.bf16.mxu0 0
      %5185 = vmatmul.mubr.bf16.gmra.mrb[0].mxu0 %v5051
      %v5186 = vpop.f32.mrb[0].mxu0
      %v5187 = vadd.f32 %v5094, %v5186
      %v5188 = vpop.f32.mrb[0].mxu0
      %v5189 = vpop.f32.mrb[0].mxu0
      %v5190 = vadd.f32 %v5094, %v5189
      %v5191 = vpop.f32.mrb[0].mxu0
      %5192 = vmatprep.mubr.bf16.mxu0 0
      %5193 = vmatmul.mubr.bf16.gmra.mrb[0].mxu0 %v5052
      %v5194 = vpop.f32.mrb[0].mxu0
      %v5195 = vadd.f32 %v5094, %v5194
      %v5196 = vpop.f32.mrb[0].mxu0
      %v5197 = vpop.f32.mrb[0].mxu0
      %v5198 = vadd.f32 %v5094, %v5197
      %v5199 = vpop.f32.mrb[0].mxu0
      %5200 = vmatprep.mubr.bf16.mxu0 0
      %5201 = vmatmul.mubr.bf16.gmra.mrb[0].mxu0 %v5053
      %v5202 = vpop.f32.mrb[0].mxu0
      %v5203 = vadd.f32 %v5094, %v5202
      %v5204 = vpop.f32.mrb[0].mxu0
      %v5205 = vpop.f32.mrb[0].mxu0
      %v5206 = vadd.f32 %v5094, %v5205
      %v5207 = vpop.f32.mrb[0].mxu0
      %5208 = vmatprep.mubr.bf16.mxu0 0
      %5209 = vmatmul.mubr.bf16.gmra.mrb[0].mxu0 %v5054
      %v5210 = vpop.f32.mrb[0].mxu0
      %v5211 = vadd.f32 %v5094, %v5210
      %v5212 = vpop.f32.mrb[0].mxu0
      %v5213 = vpop.f32.mrb[0].mxu0
      %v5214 = vadd.f32 %v5094, %v5213
      %v5215 = vpop.f32.mrb[0].mxu0
      %5216 = vmatprep.mubr.bf16.mxu0 0
      %5217 = vmatmul.mubr.bf16.gmra.mrb[0].mxu0 %v5055
      %v5218 = vpop.f32.mrb[0].mxu0
      %v5219 = vadd.f32 %v5094, %v5218
      %v5220 = vpop.f32.mrb[0].mxu0
      %v5221 = vpop.f32.mrb[0].mxu0
      %v5222 = vadd.f32 %v5094, %v5221
      %v5223 = vpop.f32.mrb[0].mxu0
      %5224 = vmatprep.mubr.bf16.mxu0 0
      %5225 = vmatmul.mubr.bf16.gmra.mrb[0].mxu0 %v5056
      %v5226 = vpop.f32.mrb[0].mxu0
      %v5227 = vadd.f32 %v5094, %v5226
      %v5228 = vpop.f32.mrb[0].mxu0
      %v5229 = vpop.f32.mrb[0].mxu0
      %v5230 = vadd.f32 %v5094, %v5229
      %v5231 = vpop.f32.mrb[0].mxu0
      %5232 = vmatprep.mubr.bf16.mxu0 0
      %5233 = vmatmul.mubr.bf16.gmra.mrb[0].mxu0 %v5057
      %v5234 = vpop.f32.mrb[0].mxu0
      %v5235 = vadd.f32 %v5094, %v5234
      %v5236 = vpop.f32.mrb[0].mxu0
      %v5237 = vpop.f32.mrb[0].mxu0
      %v5238 = vadd.f32 %v5094, %v5237
      %v5239 = vpop.f32.mrb[0].mxu0
      %5240 = vmatprep.mubr.bf16.mxu0 0
      %5241 = vmatmul.mubr.bf16.gmra.mrb[0].mxu0 %v5058
      %v5242 = vpop.f32.mrb[0].mxu0
      %v5243 = vadd.f32 %v5094, %v5242
      %v5244 = vpop.f32.mrb[0].mxu0
      %v5245 = vpop.f32.mrb[0].mxu0
      %v5246 = vadd.f32 %v5094, %v5245
      %v5247 = vpop.f32.mrb[0].mxu0
      %5248 = vmatprep.mubr.bf16.mxu0 0
      %5249 = vmatmul.mubr.bf16.gmra.mrb[0].mxu0 %v5059
      %v5250 = vpop.f32.mrb[0].mxu0
      %v5251 = vadd.f32 %v5094, %v5250
      %v5252 = vpop.f32.mrb[0].mxu0
      %v5253 = vpop.f32.mrb[0].mxu0
      %v5254 = vadd.f32 %v5094, %v5253
      %v5255 = vpop.f32.mrb[0].mxu0
      %5256 = vmatprep.mubr.bf16.mxu0 0
      %5257 = vmatmul.mubr.bf16.gmra.mrb[0].mxu0 %v5060
      %v5258 = vpop.f32.mrb[0].mxu0
      %v5259 = vadd.f32 %v5094, %v5258
      %v5260 = vpop.f32.mrb[0].mxu0
      %v5261 = vpop.f32.mrb[0].mxu0
      %v5262 = vadd.f32 %v5094, %v5261
      %v5263 = vpop.f32.mrb[0].mxu0
      %5264 = vmatprep.mubr.bf16.mxu0 0
      %5265 = vmatmul.mubr.bf16.gmra.mrb[0].mxu0 %v5061
      %v5266 = vpop.f32.mrb[0].mxu0
      %v5267 = vadd.f32 %v5094, %v5266
      %v5268 = vpop.f32.mrb[0].mxu0
      %v5269 = vpop.f32.mrb[0].mxu0
      %v5270 = vadd.f32 %v5094, %v5269
      %v5271 = vpop.f32.mrb[0].mxu0
      %5272 = vmatprep.mubr.bf16.mxu0 0
      %5273 = vmatmul.mubr.bf16.gmra.mrb[0].mxu0 %v5062
      %v5274 = vpop.f32.mrb[0].mxu0
      %v5275 = vadd.f32 %v5094, %v5274
      %v5276 = vpop.f32.mrb[0].mxu0
      %v5277 = vpop.f32.mrb[0].mxu0
      %v5278 = vadd.f32 %v5094, %v5277
      %v5279 = vpop.f32.mrb[0].mxu0
      %5280 = vmatprep.mubr.bf16.mxu0 0
      %5281 = vmatmul.mubr.bf16.gmra.mrb[0].mxu0 %v5063
      %v5282 = vpop.f32.mrb[0].mxu0
      %v5283 = vadd.f32 %v5094, %v5282
      %v5284 = vpop.f32.mrb[0].mxu0
      %v5285 = vpop.f32.mrb[0].mxu0
      %v5286 = vadd.f32 %v5094, %v5285
      %v5287 = vpop.f32.mrb[0].mxu0
      %5288 = vmatprep.mubr.bf16.mxu0 0
      %5289 = vmatmul.mubr.bf16.gmra.mrb[0].mxu0 %v5064
      %v5290 = vpop.f32.mrb[0].mxu0
      %v5291 = vadd.f32 %v5094, %v5290
      %v5292 = vpop.f32.mrb[0].mxu0
      %v5293 = vpop.f32.mrb[0].mxu0
      %v5294 = vadd.f32 %v5094, %v5293
      %v5295 = vpop.f32.mrb[0].mxu0
      %5296 = vmatprep.mubr.bf16.mxu0 0
      %5297 = vmatmul.mubr.bf16.gmra.mrb[0].mxu0 %v5065
      %v5298 = vpop.f32.mrb[0].mxu0
      %v5299 = vadd.f32 %v5094, %v5298
      %v5300 = vpop.f32.mrb[0].mxu0
      %v5301 = vpop.f32.mrb[0].mxu0
      %v5302 = vadd.f32 %v5094, %v5301
      %v5303 = vpop.f32.mrb[0].mxu0
      %5304 = vmatprep.mubr.bf16.mxu0 0
      %5305 = vmatmul.mubr.bf16.gmra.mrb[0].mxu0 %v5066
      %v5306 = vpop.f32.mrb[0].mxu0
      %v5307 = vadd.f32 %v5094, %v5306
      %v5308 = vpop.f32.mrb[0].mxu0
      %v5309 = vpop.f32.mrb[0].mxu0
      %v5310 = vadd.f32 %v5094, %v5309
      %v5311 = vpop.f32.mrb[0].mxu0
      %5312 = vmatprep.mubr.bf16.mxu0 0
      %5313 = vmatmul.mubr.bf16.gmra.mrb[0].mxu0 %v5067
      %v5314 = vpop.f32.mrb[0].mxu0
      %v5315 = vadd.f32 %v5094, %v5314
      %v5316 = vpop.f32.mrb[0].mxu0
      %v5317 = vpop.f32.mrb[0].mxu0
      %v5318 = vadd.f32 %v5094, %v5317
      %v5319 = vpop.f32.mrb[0].mxu0
      %5320 = vmatprep.mubr.bf16.mxu0 0
      %5321 = vmatmul.mubr.bf16.gmra.mrb[0].mxu0 %v5068
      %v5322 = vpop.f32.mrb[0].mxu0
      %v5323 = vadd.f32 %v5094, %v5322
      %v5324 = vpop.f32.mrb[0].mxu0
      %v5325 = vpop.f32.mrb[0].mxu0
      %v5326 = vadd.f32 %v5094, %v5325
      %v5327 = vpop.f32.mrb[0].mxu0
      %5328 = vmatprep.mubr.bf16.mxu0 0
      %5329 = vmatmul.mubr.bf16.gmra.mrb[0].mxu0 %v5069
      %v5330 = vpop.f32.mrb[0].mxu0
      %v5331 = vadd.f32 %v5094, %v5330
      %v5332 = vpop.f32.mrb[0].mxu0
      %v5333 = vpop.f32.mrb[0].mxu0
      %v5334 = vadd.f32 %v5094, %v5333
      %v5335 = vpop.f32.mrb[0].mxu0
      %5336 = vmatprep.mubr.bf16.mxu0 0
      %5337 = vmatmul.mubr.bf16.gmra.mrb[0].mxu0 %v5070
      %v5338 = vpop.f32.mrb[0].mxu0
      %v5339 = vadd.f32 %v5094, %v5338
      %v5340 = vpop.f32.mrb[0].mxu0
      %v5341 = vpop.f32.mrb[0].mxu0
      %v5342 = vadd.f32 %v5094, %v5341
      %v5343 = vpop.f32.mrb[0].mxu0
      %5344 = vdwg.mxu0
      %v5345 = vmax.f32 %v5179, 0.0
      %v5346 = vmax.f32 %v5182, 0.0
      %v5347 = vmax.f32 %v5187, 0.0
      %v5348 = vmax.f32 %v5190, 0.0
      %v5349 = vmax.f32 %v5195, 0.0
      %v5350 = vmax.f32 %v5198, 0.0
      %v5351 = vmax.f32 %v5203, 0.0
      %v5352 = vmax.f32 %v5206, 0.0
      %v5353 = vmax.f32 %v5211, 0.0
      %v5354 = vmax.f32 %v5214, 0.0
      %v5355 = vmax.f32 %v5219, 0.0
      %v5356 = vmax.f32 %v5222, 0.0
      %v5357 = vmax.f32 %v5227, 0.0
      %v5358 = vmax.f32 %v5230, 0.0
      %v5359 = vmax.f32 %v5235, 0.0
      %v5360 = vmax.f32 %v5238, 0.0
      %v5361 = vmax.f32 %v5243, 0.0
      %v5362 = vmax.f32 %v5246, 0.0
      %v5363 = vmax.f32 %v5251, 0.0
      %v5364 = vmax.f32 %v5254, 0.0
      %v5365 = vmax.f32 %v5259, 0.0
      %v5366 = vmax.f32 %v5262, 0.0
      %v5367 = vmax.f32 %v5267, 0.0
      %v5368 = vmax.f32 %v5270, 0.0
      %v5369 = vmax.f32 %v5275, 0.0
      %v5370 = vmax.f32 %v5278, 0.0
      %v5371 = vmax.f32 %v5283, 0.0
      %v5372 = vmax.f32 %v5286, 0.0
      %v5373 = vmax.f32 %v5291, 0.0
      %v5374 = vmax.f32 %v5294, 0.0
      %v5375 = vmax.f32 %v5299, 0.0
      %v5376 = vmax.f32 %v5302, 0.0
      %v5377 = vmax.f32 %v5307, 0.0
      %v5378 = vmax.f32 %v5310, 0.0
      %v5379 = vmax.f32 %v5315, 0.0
      %v5380 = vmax.f32 %v5318, 0.0
      %v5381 = vmax.f32 %v5323, 0.0
      %v5382 = vmax.f32 %v5326, 0.0
      %v5383 = vmax.f32 %v5331, 0.0
      %v5384 = vmax.f32 %v5334, 0.0
      %v5385 = vmax.f32 %v5339, 0.0
      %v5386 = vmax.f32 %v5342, 0.0
      %v5387 = vpack.c.bf16 %v5346, %v5345
      %v5388 = vpack.c.bf16 %v5348, %v5347
      %v5389 = vpack.c.bf16 %v5350, %v5349
      %v5390 = vpack.c.bf16 %v5352, %v5351
      %v5391 = vpack.c.bf16 %v5354, %v5353
      %v5392 = vpack.c.bf16 %v5356, %v5355
      %v5393 = vpack.c.bf16 %v5358, %v5357
      %v5394 = vpack.c.bf16 %v5360, %v5359
      %v5395 = vpack.c.bf16 %v5362, %v5361
      %v5396 = vpack.c.bf16 %v5364, %v5363
      %v5397 = vpack.c.bf16 %v5366, %v5365
      %v5398 = vpack.c.bf16 %v5368, %v5367
      %v5399 = vpack.c.bf16 %v5370, %v5369
      %v5400 = vpack.c.bf16 %v5372, %v5371
      %v5401 = vpack.c.bf16 %v5374, %v5373
      %v5402 = vpack.c.bf16 %v5376, %v5375
      %v5403 = vpack.c.bf16 %v5378, %v5377
      %v5404 = vpack.c.bf16 %v5380, %v5379
      %v5405 = vpack.c.bf16 %v5382, %v5381
      %v5406 = vpack.c.bf16 %v5384, %v5383
      %v5407 = vpack.c.bf16 %v5386, %v5385
      %s5408 = scalar_lea.vmem %s6, 320
      %v5409 = vld [vmem:[%s5408] sm:$0xf]
      %v5410 = vld [vmem:[%s5408 + $0x4] sm:$0xf]
      %v5411 = vld [vmem:[%s5408 + $0x8] sm:$0xf]
      %v5412 = vld [vmem:[%s5408 + $0xc] sm:$0xf]
      %v5413 = vld [vmem:[%s5408 + $0x10] sm:$0xf]
      %v5414 = vld [vmem:[%s5408 + $0x14] sm:$0xf]
      %v5415 = vld [vmem:[%s5408 + $0x18] sm:$0xf]
      %v5416 = vld [vmem:[%s5408 + $0x1c] sm:$0xf]
      %v5417 = vld [vmem:[%s5408 + $0x20] sm:$0xf]
      %v5418 = vld [vmem:[%s5408 + $0x24] sm:$0xf]
      %v5419 = vld [vmem:[%s5408 + $0x28] sm:$0xf]
      %v5420 = vld [vmem:[%s5408 + $0x2c] sm:$0xf]
      %v5421 = vld [vmem:[%s5408 + $0x30] sm:$0xf]
      %v5422 = vld [vmem:[%s5408 + $0x34] sm:$0xf]
      %v5423 = vld [vmem:[%s5408 + $0x38] sm:$0xf]
      %v5424 = vld [vmem:[%s5408 + $0x3c] sm:$0xf]
      %s5425 = scalar_lea.vmem %s7, 5
      %v5426 = vld [vmem:[%s5425] sm:$0x1]
      %v5428 = vlaneseq
      %v5429 = vshrl.u32 %v5428, 7
      %v5430 = vsub.s32 0, %v5429
      %v5431 = vrot.slane %v5426, %v5430
      %v5449 = vunpack.c.l.b16 %v5409
      %v5450 = vunpack.c.l.b16 %v5410
      %v5451 = vunpack.c.l.b16 %v5411
      %v5452 = vunpack.c.l.b16 %v5412
      %v5453 = vunpack.c.l.b16 %v5413
      %v5454 = vunpack.c.l.b16 %v5414
      %v5455 = vunpack.c.l.b16 %v5415
      %v5456 = vunpack.c.l.b16 %v5416
      %v5457 = vunpack.c.l.b16 %v5417
      %v5458 = vunpack.c.l.b16 %v5418
      %v5459 = vunpack.c.l.b16 %v5419
      %v5460 = vunpack.c.l.b16 %v5420
      %v5461 = vunpack.c.l.b16 %v5421
      %v5462 = vunpack.c.l.b16 %v5422
      %v5463 = vunpack.c.l.b16 %v5423
      %v5464 = vunpack.c.l.b16 %v5424
      %v5465 = vpack.c.b16 %v5450, %v5449
      %v5466 = vpack.c.b16 %v5452, %v5451
      %v5467 = vpack.c.b16 %v5454, %v5453
      %v5468 = vpack.c.b16 %v5456, %v5455
      %v5469 = vpack.c.b16 %v5458, %v5457
      %v5470 = vpack.c.b16 %v5460, %v5459
      %v5471 = vpack.c.b16 %v5462, %v5461
      %v5472 = vpack.c.b16 %v5464, %v5463
      %5481 = vmatprep.subr.bf16.mxu0 0
      %5482 = vmatpush1.bf16.msra.mxu0 %v5465
      %5483 = vmatprep.subr.bf16.mxu0 0
      %5484 = vmatpush1.bf16.msra.mxu0 %v5466
      %5485 = vmatprep.subr.bf16.mxu0 0
      %5486 = vmatpush1.bf16.msra.mxu0 %v5467
      %5487 = vmatprep.subr.bf16.mxu0 0
      %5488 = vmatpush1.bf16.msra.mxu0 %v5468
      %5489 = vmatprep.subr.bf16.mxu0 0
      %5490 = vmatpush1.bf16.msra.mxu0 %v5469
      %5491 = vmatprep.subr.bf16.mxu0 0
      %5492 = vmatpush1.bf16.msra.mxu0 %v5470
      %5493 = vmatprep.subr.bf16.mxu0 0
      %5494 = vmatpush1.bf16.msra.mxu0 %v5471
      %5495 = vmatprep.subr.bf16.mxu0 0
      %5496 = vmatpush1.bf16.msra.mxu0 %v5472
      %5497 = vmatprep.subr.bf16.mxu0 0
      %5498 = vmatpush1.bf16.msra.mxu0 0
      %5499 = vmatprep.subr.bf16.mxu0 0
      %5500 = vmatpush1.bf16.msra.mxu0 0
      %5501 = vmatprep.subr.bf16.mxu0 0
      %5502 = vmatpush1.bf16.msra.mxu0 0
      %5503 = vmatprep.subr.bf16.mxu0 0
      %5504 = vmatpush1.bf16.msra.mxu0 0
      %5505 = vmatprep.subr.bf16.mxu0 0
      %5506 = vmatpush1.bf16.msra.mxu0 0
      %5507 = vmatprep.subr.bf16.mxu0 0
      %5508 = vmatpush1.bf16.msra.mxu0 0
      %5509 = vmatprep.subr.bf16.mxu0 0
      %5510 = vmatpush1.bf16.msra.mxu0 0
      %5511 = vmatprep.subr.bf16.mxu0 0
      %5512 = vmatpush1.bf16.msra.mxu0 0
      %5513 = vmatprep.mubr.bf16.mxu0 0
      %5514 = vmatmul.mubr.bf16.gmra.mrb[0].mxu0 %v5387
      %v5515 = vpop.f32.mrb[0].mxu0
      %v5516 = vadd.f32 %v5431, %v5515
      %v5517 = vpop.f32.mrb[0].mxu0
      %v5518 = vpop.f32.mrb[0].mxu0
      %v5519 = vadd.f32 %v5431, %v5518
      %v5520 = vpop.f32.mrb[0].mxu0
      %5521 = vmatprep.mubr.bf16.mxu0 0
      %5522 = vmatmul.mubr.bf16.gmra.mrb[0].mxu0 %v5388
      %v5523 = vpop.f32.mrb[0].mxu0
      %v5524 = vadd.f32 %v5431, %v5523
      %v5525 = vpop.f32.mrb[0].mxu0
      %v5526 = vpop.f32.mrb[0].mxu0
      %v5527 = vadd.f32 %v5431, %v5526
      %v5528 = vpop.f32.mrb[0].mxu0
      %5529 = vmatprep.mubr.bf16.mxu0 0
      %5530 = vmatmul.mubr.bf16.gmra.mrb[0].mxu0 %v5389
      %v5531 = vpop.f32.mrb[0].mxu0
      %v5532 = vadd.f32 %v5431, %v5531
      %v5533 = vpop.f32.mrb[0].mxu0
      %v5534 = vpop.f32.mrb[0].mxu0
      %v5535 = vadd.f32 %v5431, %v5534
      %v5536 = vpop.f32.mrb[0].mxu0
      %5537 = vmatprep.mubr.bf16.mxu0 0
      %5538 = vmatmul.mubr.bf16.gmra.mrb[0].mxu0 %v5390
      %v5539 = vpop.f32.mrb[0].mxu0
      %v5540 = vadd.f32 %v5431, %v5539
      %v5541 = vpop.f32.mrb[0].mxu0
      %v5542 = vpop.f32.mrb[0].mxu0
      %v5543 = vadd.f32 %v5431, %v5542
      %v5544 = vpop.f32.mrb[0].mxu0
      %5545 = vmatprep.mubr.bf16.mxu0 0
      %5546 = vmatmul.mubr.bf16.gmra.mrb[0].mxu0 %v5391
      %v5547 = vpop.f32.mrb[0].mxu0
      %v5548 = vadd.f32 %v5431, %v5547
      %v5549 = vpop.f32.mrb[0].mxu0
      %v5550 = vpop.f32.mrb[0].mxu0
      %v5551 = vadd.f32 %v5431, %v5550
      %v5552 = vpop.f32.mrb[0].mxu0
      %5553 = vmatprep.mubr.bf16.mxu0 0
      %5554 = vmatmul.mubr.bf16.gmra.mrb[0].mxu0 %v5392
      %v5555 = vpop.f32.mrb[0].mxu0
      %v5556 = vadd.f32 %v5431, %v5555
      %v5557 = vpop.f32.mrb[0].mxu0
      %v5558 = vpop.f32.mrb[0].mxu0
      %v5559 = vadd.f32 %v5431, %v5558
      %v5560 = vpop.f32.mrb[0].mxu0
      %5561 = vmatprep.mubr.bf16.mxu0 0
      %5562 = vmatmul.mubr.bf16.gmra.mrb[0].mxu0 %v5393
      %v5563 = vpop.f32.mrb[0].mxu0
      %v5564 = vadd.f32 %v5431, %v5563
      %v5565 = vpop.f32.mrb[0].mxu0
      %v5566 = vpop.f32.mrb[0].mxu0
      %v5567 = vadd.f32 %v5431, %v5566
      %v5568 = vpop.f32.mrb[0].mxu0
      %5569 = vmatprep.mubr.bf16.mxu0 0
      %5570 = vmatmul.mubr.bf16.gmra.mrb[0].mxu0 %v5394
      %v5571 = vpop.f32.mrb[0].mxu0
      %v5572 = vadd.f32 %v5431, %v5571
      %v5573 = vpop.f32.mrb[0].mxu0
      %v5574 = vpop.f32.mrb[0].mxu0
      %v5575 = vadd.f32 %v5431, %v5574
      %v5576 = vpop.f32.mrb[0].mxu0
      %5577 = vmatprep.mubr.bf16.mxu0 0
      %5578 = vmatmul.mubr.bf16.gmra.mrb[0].mxu0 %v5395
      %v5579 = vpop.f32.mrb[0].mxu0
      %v5580 = vadd.f32 %v5431, %v5579
      %v5581 = vpop.f32.mrb[0].mxu0
      %v5582 = vpop.f32.mrb[0].mxu0
      %v5583 = vadd.f32 %v5431, %v5582
      %v5584 = vpop.f32.mrb[0].mxu0
      %5585 = vmatprep.mubr.bf16.mxu0 0
      %5586 = vmatmul.mubr.bf16.gmra.mrb[0].mxu0 %v5396
      %v5587 = vpop.f32.mrb[0].mxu0
      %v5588 = vadd.f32 %v5431, %v5587
      %v5589 = vpop.f32.mrb[0].mxu0
      %v5590 = vpop.f32.mrb[0].mxu0
      %v5591 = vadd.f32 %v5431, %v5590
      %v5592 = vpop.f32.mrb[0].mxu0
      %5593 = vmatprep.mubr.bf16.mxu0 0
      %5594 = vmatmul.mubr.bf16.gmra.mrb[0].mxu0 %v5397
      %v5595 = vpop.f32.mrb[0].mxu0
      %v5596 = vadd.f32 %v5431, %v5595
      %v5597 = vpop.f32.mrb[0].mxu0
      %v5598 = vpop.f32.mrb[0].mxu0
      %v5599 = vadd.f32 %v5431, %v5598
      %v5600 = vpop.f32.mrb[0].mxu0
      %5601 = vmatprep.mubr.bf16.mxu0 0
      %5602 = vmatmul.mubr.bf16.gmra.mrb[0].mxu0 %v5398
      %v5603 = vpop.f32.mrb[0].mxu0
      %v5604 = vadd.f32 %v5431, %v5603
      %v5605 = vpop.f32.mrb[0].mxu0
      %v5606 = vpop.f32.mrb[0].mxu0
      %v5607 = vadd.f32 %v5431, %v5606
      %v5608 = vpop.f32.mrb[0].mxu0
      %5609 = vmatprep.mubr.bf16.mxu0 0
      %5610 = vmatmul.mubr.bf16.gmra.mrb[0].mxu0 %v5399
      %v5611 = vpop.f32.mrb[0].mxu0
      %v5612 = vadd.f32 %v5431, %v5611
      %v5613 = vpop.f32.mrb[0].mxu0
      %v5614 = vpop.f32.mrb[0].mxu0
      %v5615 = vadd.f32 %v5431, %v5614
      %v5616 = vpop.f32.mrb[0].mxu0
      %5617 = vmatprep.mubr.bf16.mxu0 0
      %5618 = vmatmul.mubr.bf16.gmra.mrb[0].mxu0 %v5400
      %v5619 = vpop.f32.mrb[0].mxu0
      %v5620 = vadd.f32 %v5431, %v5619
      %v5621 = vpop.f32.mrb[0].mxu0
      %v5622 = vpop.f32.mrb[0].mxu0
      %v5623 = vadd.f32 %v5431, %v5622
      %v5624 = vpop.f32.mrb[0].mxu0
      %5625 = vmatprep.mubr.bf16.mxu0 0
      %5626 = vmatmul.mubr.bf16.gmra.mrb[0].mxu0 %v5401
      %v5627 = vpop.f32.mrb[0].mxu0
      %v5628 = vadd.f32 %v5431, %v5627
      %v5629 = vpop.f32.mrb[0].mxu0
      %v5630 = vpop.f32.mrb[0].mxu0
      %v5631 = vadd.f32 %v5431, %v5630
      %v5632 = vpop.f32.mrb[0].mxu0
      %5633 = vmatprep.mubr.bf16.mxu0 0
      %5634 = vmatmul.mubr.bf16.gmra.mrb[0].mxu0 %v5402
      %v5635 = vpop.f32.mrb[0].mxu0
      %v5636 = vadd.f32 %v5431, %v5635
      %v5637 = vpop.f32.mrb[0].mxu0
      %v5638 = vpop.f32.mrb[0].mxu0
      %v5639 = vadd.f32 %v5431, %v5638
      %v5640 = vpop.f32.mrb[0].mxu0
      %5641 = vmatprep.mubr.bf16.mxu0 0
      %5642 = vmatmul.mubr.bf16.gmra.mrb[0].mxu0 %v5403
      %v5643 = vpop.f32.mrb[0].mxu0
      %v5644 = vadd.f32 %v5431, %v5643
      %v5645 = vpop.f32.mrb[0].mxu0
      %v5646 = vpop.f32.mrb[0].mxu0
      %v5647 = vadd.f32 %v5431, %v5646
      %v5648 = vpop.f32.mrb[0].mxu0
      %5649 = vmatprep.mubr.bf16.mxu0 0
      %5650 = vmatmul.mubr.bf16.gmra.mrb[0].mxu0 %v5404
      %v5651 = vpop.f32.mrb[0].mxu0
      %v5652 = vadd.f32 %v5431, %v5651
      %v5653 = vpop.f32.mrb[0].mxu0
      %v5654 = vpop.f32.mrb[0].mxu0
      %v5655 = vadd.f32 %v5431, %v5654
      %v5656 = vpop.f32.mrb[0].mxu0
      %5657 = vmatprep.mubr.bf16.mxu0 0
      %5658 = vmatmul.mubr.bf16.gmra.mrb[0].mxu0 %v5405
      %v5659 = vpop.f32.mrb[0].mxu0
      %v5660 = vadd.f32 %v5431, %v5659
      %v5661 = vpop.f32.mrb[0].mxu0
      %v5662 = vpop.f32.mrb[0].mxu0
      %v5663 = vadd.f32 %v5431, %v5662
      %v5664 = vpop.f32.mrb[0].mxu0
      %5665 = vmatprep.mubr.bf16.mxu0 0
      %5666 = vmatmul.mubr.bf16.gmra.mrb[0].mxu0 %v5406
      %v5667 = vpop.f32.mrb[0].mxu0
      %v5668 = vadd.f32 %v5431, %v5667
      %v5669 = vpop.f32.mrb[0].mxu0
      %v5670 = vpop.f32.mrb[0].mxu0
      %v5671 = vadd.f32 %v5431, %v5670
      %v5672 = vpop.f32.mrb[0].mxu0
      %5673 = vmatprep.mubr.bf16.mxu0 0
      %5674 = vmatmul.mubr.bf16.gmra.mrb[0].mxu0 %v5407
      %v5675 = vpop.f32.mrb[0].mxu0
      %v5676 = vadd.f32 %v5431, %v5675
      %v5677 = vpop.f32.mrb[0].mxu0
      %v5678 = vpop.f32.mrb[0].mxu0
      %v5679 = vadd.f32 %v5431, %v5678
      %v5680 = vpop.f32.mrb[0].mxu0
      %5681 = vdwg.mxu0
      %v5682 = vadd.f32 %v5008, %v5516
      %v5683 = vadd.f32 %v5009, %v5519
      %v5684 = vadd.f32 %v5010, %v5524
      %v5685 = vadd.f32 %v5011, %v5527
      %v5686 = vadd.f32 %v5012, %v5532
      %v5687 = vadd.f32 %v5013, %v5535
      %v5688 = vadd.f32 %v5014, %v5540
      %v5689 = vadd.f32 %v5015, %v5543
      %v5690 = vadd.f32 %v5016, %v5548
      %v5691 = vadd.f32 %v5017, %v5551
      %v5692 = vadd.f32 %v5018, %v5556
      %v5693 = vadd.f32 %v5019, %v5559
      %v5694 = vadd.f32 %v5020, %v5564
      %v5695 = vadd.f32 %v5021, %v5567
      %v5696 = vadd.f32 %v5022, %v5572
      %v5697 = vadd.f32 %v5023, %v5575
      %v5698 = vadd.f32 %v5024, %v5580
      %v5699 = vadd.f32 %v5025, %v5583
      %v5700 = vadd.f32 %v5026, %v5588
      %v5701 = vadd.f32 %v5027, %v5591
      %v5702 = vadd.f32 %v5028, %v5596
      %v5703 = vadd.f32 %v5029, %v5599
      %v5704 = vadd.f32 %v5030, %v5604
      %v5705 = vadd.f32 %v5031, %v5607
      %v5706 = vadd.f32 %v5032, %v5612
      %v5707 = vadd.f32 %v5033, %v5615
      %v5708 = vadd.f32 %v5034, %v5620
      %v5709 = vadd.f32 %v5035, %v5623
      %v5710 = vadd.f32 %v5036, %v5628
      %v5711 = vadd.f32 %v5037, %v5631
      %v5712 = vadd.f32 %v5038, %v5636
      %v5713 = vadd.f32 %v5039, %v5639
      %v5714 = vadd.f32 %v5040, %v5644
      %v5715 = vadd.f32 %v5041, %v5647
      %v5716 = vadd.f32 %v5042, %v5652
      %v5717 = vadd.f32 %v5043, %v5655
      %v5718 = vadd.f32 %v5044, %v5660
      %v5719 = vadd.f32 %v5045, %v5663
      %v5720 = vadd.f32 %v5046, %v5668
      %v5721 = vadd.f32 %v5047, %v5671
      %v5722 = vadd.f32 %v5048, %v5676
      %v5723 = vadd.f32 %v5049, %v5679
      %v5724 = vpack.c.bf16 %v5683, %v5682
      %v5725 = vpack.c.bf16 %v5685, %v5684
      %v5726 = vpack.c.bf16 %v5687, %v5686
      %v5727 = vpack.c.bf16 %v5689, %v5688
      %v5728 = vpack.c.bf16 %v5691, %v5690
      %v5729 = vpack.c.bf16 %v5693, %v5692
      %v5730 = vpack.c.bf16 %v5695, %v5694
      %v5731 = vpack.c.bf16 %v5697, %v5696
      %v5732 = vpack.c.bf16 %v5699, %v5698
      %v5733 = vpack.c.bf16 %v5701, %v5700
      %v5734 = vpack.c.bf16 %v5703, %v5702
      %v5735 = vpack.c.bf16 %v5705, %v5704
      %v5736 = vpack.c.bf16 %v5707, %v5706
      %v5737 = vpack.c.bf16 %v5709, %v5708
      %v5738 = vpack.c.bf16 %v5711, %v5710
      %v5739 = vpack.c.bf16 %v5713, %v5712
      %v5740 = vpack.c.bf16 %v5715, %v5714
      %v5741 = vpack.c.bf16 %v5717, %v5716
      %v5742 = vpack.c.bf16 %v5719, %v5718
      %v5743 = vpack.c.bf16 %v5721, %v5720
      %v5744 = vpack.c.bf16 %v5723, %v5722
      %v5745 = vld [vmem:[%s8] sm:$0xf]
      %v5746 = vld [vmem:[%s8 + $0x4] sm:$0xf]
      %v5747 = vld [vmem:[%s8 + $0x8] sm:$0xf]
      %v5748 = vld [vmem:[%s8 + $0xc] sm:$0xf]
      %v5749 = vld [vmem:[%s8 + $0x10] sm:$0xf]
      %v5750 = vld [vmem:[%s8 + $0x14] sm:$0xf]
      %v5751 = vld [vmem:[%s8 + $0x18] sm:$0xf]
      %v5752 = vld [vmem:[%s8 + $0x1c] sm:$0xf]
      %v5753 = vld [vmem:[%s8 + $0x20] sm:$0xf]
      %v5754 = vld [vmem:[%s8 + $0x24] sm:$0xf]
      %v5755 = vld [vmem:[%s8 + $0x28] sm:$0xf]
      %v5756 = vld [vmem:[%s8 + $0x2c] sm:$0xf]
      %v5757 = vld [vmem:[%s8 + $0x30] sm:$0xf]
      %v5758 = vld [vmem:[%s8 + $0x34] sm:$0xf]
      %v5759 = vld [vmem:[%s8 + $0x38] sm:$0xf]
      %v5760 = vld [vmem:[%s8 + $0x3c] sm:$0xf]
      %v5761 = vld [vmem:[%s9] sm:$0x1]
      %v5763 = vlaneseq
      %v5764 = vshrl.u32 %v5763, 7
      %v5765 = vsub.s32 0, %v5764
      %v5766 = vrot.slane %v5761, %v5765
      %v5784 = vunpack.c.l.b16 %v5745
      %v5785 = vunpack.c.l.b16 %v5746
      %v5786 = vunpack.c.l.b16 %v5747
      %v5787 = vunpack.c.l.b16 %v5748
      %v5788 = vunpack.c.l.b16 %v5749
      %v5789 = vunpack.c.l.b16 %v5750
      %v5790 = vunpack.c.l.b16 %v5751
      %v5791 = vunpack.c.l.b16 %v5752
      %v5792 = vunpack.c.l.b16 %v5753
      %v5793 = vunpack.c.l.b16 %v5754
      %v5794 = vunpack.c.l.b16 %v5755
      %v5795 = vunpack.c.l.b16 %v5756
      %v5796 = vunpack.c.l.b16 %v5757
      %v5797 = vunpack.c.l.b16 %v5758
      %v5798 = vunpack.c.l.b16 %v5759
      %v5799 = vunpack.c.l.b16 %v5760
      %v5800 = vpack.c.b16 %v5785, %v5784
      %v5801 = vpack.c.b16 %v5787, %v5786
      %v5802 = vpack.c.b16 %v5789, %v5788
      %v5803 = vpack.c.b16 %v5791, %v5790
      %v5804 = vpack.c.b16 %v5793, %v5792
      %v5805 = vpack.c.b16 %v5795, %v5794
      %v5806 = vpack.c.b16 %v5797, %v5796
      %v5807 = vpack.c.b16 %v5799, %v5798
      %5816 = vmatprep.subr.bf16.mxu0 0
      %5817 = vmatpush1.bf16.msra.mxu0 %v5800
      %5818 = vmatprep.subr.bf16.mxu0 0
      %5819 = vmatpush1.bf16.msra.mxu0 %v5801
      %5820 = vmatprep.subr.bf16.mxu0 0
      %5821 = vmatpush1.bf16.msra.mxu0 %v5802
      %5822 = vmatprep.subr.bf16.mxu0 0
      %5823 = vmatpush1.bf16.msra.mxu0 %v5803
      %5824 = vmatprep.subr.bf16.mxu0 0
      %5825 = vmatpush1.bf16.msra.mxu0 %v5804
      %5826 = vmatprep.subr.bf16.mxu0 0
      %5827 = vmatpush1.bf16.msra.mxu0 %v5805
      %5828 = vmatprep.subr.bf16.mxu0 0
      %5829 = vmatpush1.bf16.msra.mxu0 %v5806
      %5830 = vmatprep.subr.bf16.mxu0 0
      %5831 = vmatpush1.bf16.msra.mxu0 %v5807
      %5832 = vmatprep.subr.bf16.mxu0 0
      %5833 = vmatpush1.bf16.msra.mxu0 0
      %5834 = vmatprep.subr.bf16.mxu0 0
      %5835 = vmatpush1.bf16.msra.mxu0 0
      %5836 = vmatprep.subr.bf16.mxu0 0
      %5837 = vmatpush1.bf16.msra.mxu0 0
      %5838 = vmatprep.subr.bf16.mxu0 0
      %5839 = vmatpush1.bf16.msra.mxu0 0
      %5840 = vmatprep.subr.bf16.mxu0 0
      %5841 = vmatpush1.bf16.msra.mxu0 0
      %5842 = vmatprep.subr.bf16.mxu0 0
      %5843 = vmatpush1.bf16.msra.mxu0 0
      %5844 = vmatprep.subr.bf16.mxu0 0
      %5845 = vmatpush1.bf16.msra.mxu0 0
      %5846 = vmatprep.subr.bf16.mxu0 0
      %5847 = vmatpush1.bf16.msra.mxu0 0
      %5848 = vmatprep.mubr.bf16.mxu0 0
      %5849 = vmatmul.mubr.bf16.gmra.mrb[0].mxu0 %v5724
      %v5850 = vpop.f32.mrb[0].mxu0
      %v5851 = vadd.f32 %v5766, %v5850
      %v5852 = vpop.f32.mrb[0].mxu0
      %v5853 = vpop.f32.mrb[0].mxu0
      %v5854 = vadd.f32 %v5766, %v5853
      %v5855 = vpop.f32.mrb[0].mxu0
      %5856 = vmatprep.mubr.bf16.mxu0 0
      %5857 = vmatmul.mubr.bf16.gmra.mrb[0].mxu0 %v5725
      %v5858 = vpop.f32.mrb[0].mxu0
      %v5859 = vadd.f32 %v5766, %v5858
      %v5860 = vpop.f32.mrb[0].mxu0
      %v5861 = vpop.f32.mrb[0].mxu0
      %v5862 = vadd.f32 %v5766, %v5861
      %v5863 = vpop.f32.mrb[0].mxu0
      %5864 = vmatprep.mubr.bf16.mxu0 0
      %5865 = vmatmul.mubr.bf16.gmra.mrb[0].mxu0 %v5726
      %v5866 = vpop.f32.mrb[0].mxu0
      %v5867 = vadd.f32 %v5766, %v5866
      %v5868 = vpop.f32.mrb[0].mxu0
      %v5869 = vpop.f32.mrb[0].mxu0
      %v5870 = vadd.f32 %v5766, %v5869
      %v5871 = vpop.f32.mrb[0].mxu0
      %5872 = vmatprep.mubr.bf16.mxu0 0
      %5873 = vmatmul.mubr.bf16.gmra.mrb[0].mxu0 %v5727
      %v5874 = vpop.f32.mrb[0].mxu0
      %v5875 = vadd.f32 %v5766, %v5874
      %v5876 = vpop.f32.mrb[0].mxu0
      %v5877 = vpop.f32.mrb[0].mxu0
      %v5878 = vadd.f32 %v5766, %v5877
      %v5879 = vpop.f32.mrb[0].mxu0
      %5880 = vmatprep.mubr.bf16.mxu0 0
      %5881 = vmatmul.mubr.bf16.gmra.mrb[0].mxu0 %v5728
      %v5882 = vpop.f32.mrb[0].mxu0
      %v5883 = vadd.f32 %v5766, %v5882
      %v5884 = vpop.f32.mrb[0].mxu0
      %v5885 = vpop.f32.mrb[0].mxu0
      %v5886 = vadd.f32 %v5766, %v5885
      %v5887 = vpop.f32.mrb[0].mxu0
      %5888 = vmatprep.mubr.bf16.mxu0 0
      %5889 = vmatmul.mubr.bf16.gmra.mrb[0].mxu0 %v5729
      %v5890 = vpop.f32.mrb[0].mxu0
      %v5891 = vadd.f32 %v5766, %v5890
      %v5892 = vpop.f32.mrb[0].mxu0
      %v5893 = vpop.f32.mrb[0].mxu0
      %v5894 = vadd.f32 %v5766, %v5893
      %v5895 = vpop.f32.mrb[0].mxu0
      %5896 = vmatprep.mubr.bf16.mxu0 0
      %5897 = vmatmul.mubr.bf16.gmra.mrb[0].mxu0 %v5730
      %v5898 = vpop.f32.mrb[0].mxu0
      %v5899 = vadd.f32 %v5766, %v5898
      %v5900 = vpop.f32.mrb[0].mxu0
      %v5901 = vpop.f32.mrb[0].mxu0
      %v5902 = vadd.f32 %v5766, %v5901
      %v5903 = vpop.f32.mrb[0].mxu0
      %5904 = vmatprep.mubr.bf16.mxu0 0
      %5905 = vmatmul.mubr.bf16.gmra.mrb[0].mxu0 %v5731
      %v5906 = vpop.f32.mrb[0].mxu0
      %v5907 = vadd.f32 %v5766, %v5906
      %v5908 = vpop.f32.mrb[0].mxu0
      %v5909 = vpop.f32.mrb[0].mxu0
      %v5910 = vadd.f32 %v5766, %v5909
      %v5911 = vpop.f32.mrb[0].mxu0
      %5912 = vmatprep.mubr.bf16.mxu0 0
      %5913 = vmatmul.mubr.bf16.gmra.mrb[0].mxu0 %v5732
      %v5914 = vpop.f32.mrb[0].mxu0
      %v5915 = vadd.f32 %v5766, %v5914
      %v5916 = vpop.f32.mrb[0].mxu0
      %v5917 = vpop.f32.mrb[0].mxu0
      %v5918 = vadd.f32 %v5766, %v5917
      %v5919 = vpop.f32.mrb[0].mxu0
      %5920 = vmatprep.mubr.bf16.mxu0 0
      %5921 = vmatmul.mubr.bf16.gmra.mrb[0].mxu0 %v5733
      %v5922 = vpop.f32.mrb[0].mxu0
      %v5923 = vadd.f32 %v5766, %v5922
      %v5924 = vpop.f32.mrb[0].mxu0
      %v5925 = vpop.f32.mrb[0].mxu0
      %v5926 = vadd.f32 %v5766, %v5925
      %v5927 = vpop.f32.mrb[0].mxu0
      %5928 = vmatprep.mubr.bf16.mxu0 0
      %5929 = vmatmul.mubr.bf16.gmra.mrb[0].mxu0 %v5734
      %v5930 = vpop.f32.mrb[0].mxu0
      %v5931 = vadd.f32 %v5766, %v5930
      %v5932 = vpop.f32.mrb[0].mxu0
      %v5933 = vpop.f32.mrb[0].mxu0
      %v5934 = vadd.f32 %v5766, %v5933
      %v5935 = vpop.f32.mrb[0].mxu0
      %5936 = vmatprep.mubr.bf16.mxu0 0
      %5937 = vmatmul.mubr.bf16.gmra.mrb[0].mxu0 %v5735
      %v5938 = vpop.f32.mrb[0].mxu0
      %v5939 = vadd.f32 %v5766, %v5938
      %v5940 = vpop.f32.mrb[0].mxu0
      %v5941 = vpop.f32.mrb[0].mxu0
      %v5942 = vadd.f32 %v5766, %v5941
      %v5943 = vpop.f32.mrb[0].mxu0
      %5944 = vmatprep.mubr.bf16.mxu0 0
      %5945 = vmatmul.mubr.bf16.gmra.mrb[0].mxu0 %v5736
      %v5946 = vpop.f32.mrb[0].mxu0
      %v5947 = vadd.f32 %v5766, %v5946
      %v5948 = vpop.f32.mrb[0].mxu0
      %v5949 = vpop.f32.mrb[0].mxu0
      %v5950 = vadd.f32 %v5766, %v5949
      %v5951 = vpop.f32.mrb[0].mxu0
      %5952 = vmatprep.mubr.bf16.mxu0 0
      %5953 = vmatmul.mubr.bf16.gmra.mrb[0].mxu0 %v5737
      %v5954 = vpop.f32.mrb[0].mxu0
      %v5955 = vadd.f32 %v5766, %v5954
      %v5956 = vpop.f32.mrb[0].mxu0
      %v5957 = vpop.f32.mrb[0].mxu0
      %v5958 = vadd.f32 %v5766, %v5957
      %v5959 = vpop.f32.mrb[0].mxu0
      %5960 = vmatprep.mubr.bf16.mxu0 0
      %5961 = vmatmul.mubr.bf16.gmra.mrb[0].mxu0 %v5738
      %v5962 = vpop.f32.mrb[0].mxu0
      %v5963 = vadd.f32 %v5766, %v5962
      %v5964 = vpop.f32.mrb[0].mxu0
      %v5965 = vpop.f32.mrb[0].mxu0
      %v5966 = vadd.f32 %v5766, %v5965
      %v5967 = vpop.f32.mrb[0].mxu0
      %5968 = vmatprep.mubr.bf16.mxu0 0
      %5969 = vmatmul.mubr.bf16.gmra.mrb[0].mxu0 %v5739
      %v5970 = vpop.f32.mrb[0].mxu0
      %v5971 = vadd.f32 %v5766, %v5970
      %v5972 = vpop.f32.mrb[0].mxu0
      %v5973 = vpop.f32.mrb[0].mxu0
      %v5974 = vadd.f32 %v5766, %v5973
      %v5975 = vpop.f32.mrb[0].mxu0
      %5976 = vmatprep.mubr.bf16.mxu0 0
      %5977 = vmatmul.mubr.bf16.gmra.mrb[0].mxu0 %v5740
      %v5978 = vpop.f32.mrb[0].mxu0
      %v5979 = vadd.f32 %v5766, %v5978
      %v5980 = vpop.f32.mrb[0].mxu0
      %v5981 = vpop.f32.mrb[0].mxu0
      %v5982 = vadd.f32 %v5766, %v5981
      %v5983 = vpop.f32.mrb[0].mxu0
      %5984 = vmatprep.mubr.bf16.mxu0 0
      %5985 = vmatmul.mubr.bf16.gmra.mrb[0].mxu0 %v5741
      %v5986 = vpop.f32.mrb[0].mxu0
      %v5987 = vadd.f32 %v5766, %v5986
      %v5988 = vpop.f32.mrb[0].mxu0
      %v5989 = vpop.f32.mrb[0].mxu0
      %v5990 = vadd.f32 %v5766, %v5989
      %v5991 = vpop.f32.mrb[0].mxu0
      %5992 = vmatprep.mubr.bf16.mxu0 0
      %5993 = vmatmul.mubr.bf16.gmra.mrb[0].mxu0 %v5742
      %v5994 = vpop.f32.mrb[0].mxu0
      %v5995 = vadd.f32 %v5766, %v5994
      %v5996 = vpop.f32.mrb[0].mxu0
      %v5997 = vpop.f32.mrb[0].mxu0
      %v5998 = vadd.f32 %v5766, %v5997
      %v5999 = vpop.f32.mrb[0].mxu0
      %6000 = vmatprep.mubr.bf16.mxu0 0
      %6001 = vmatmul.mubr.bf16.gmra.mrb[0].mxu0 %v5743
      %v6002 = vpop.f32.mrb[0].mxu0
      %v6003 = vadd.f32 %v5766, %v6002
      %v6004 = vpop.f32.mrb[0].mxu0
      %v6005 = vpop.f32.mrb[0].mxu0
      %v6006 = vadd.f32 %v5766, %v6005
      %v6007 = vpop.f32.mrb[0].mxu0
      %6008 = vmatprep.mubr.bf16.mxu0 0
      %6009 = vmatmul.mubr.bf16.gmra.mrb[0].mxu0 %v5744
      %v6010 = vpop.f32.mrb[0].mxu0
      %v6011 = vadd.f32 %v5766, %v6010
      %v6012 = vpop.f32.mrb[0].mxu0
      %v6013 = vpop.f32.mrb[0].mxu0
      %v6014 = vadd.f32 %v5766, %v6013
      %v6015 = vpop.f32.mrb[0].mxu0
      %6016 = vdwg.mxu0
      %6017 = vst [vmem:[%s386] sm:$0xff] %v5851
      %6018 = vst [vmem:[%s386 + $0x8] sm:$0xff] %v5854
      %6019 = vst [vmem:[%s386 + $0x10] sm:$0xff] %v5859
      %6020 = vst [vmem:[%s386 + $0x18] sm:$0xff] %v5862
      %6021 = vst [vmem:[%s386 + $0x20] sm:$0xff] %v5867
      %6022 = vst [vmem:[%s386 + $0x28] sm:$0xff] %v5870
      %6023 = vst [vmem:[%s386 + $0x30] sm:$0xff] %v5875
      %6024 = vst [vmem:[%s386 + $0x38] sm:$0xff] %v5878
      %6025 = vst [vmem:[%s386 + $0x40] sm:$0xff] %v5883
      %6026 = vst [vmem:[%s386 + $0x48] sm:$0xff] %v5886
      %6027 = vst [vmem:[%s386 + $0x50] sm:$0xff] %v5891
      %6028 = vst [vmem:[%s386 + $0x58] sm:$0xff] %v5894
      %6029 = vst [vmem:[%s386 + $0x60] sm:$0xff] %v5899
      %6030 = vst [vmem:[%s386 + $0x68] sm:$0xff] %v5902
      %6031 = vst [vmem:[%s386 + $0x70] sm:$0xff] %v5907
      %6032 = vst [vmem:[%s386 + $0x78] sm:$0xff] %v5910
      %6033 = vst [vmem:[%s386 + $0x80] sm:$0xff] %v5915
      %6034 = vst [vmem:[%s386 + $0x88] sm:$0xff] %v5918
      %6035 = vst [vmem:[%s386 + $0x90] sm:$0xff] %v5923
      %6036 = vst [vmem:[%s386 + $0x98] sm:$0xff] %v5926
      %6037 = vst [vmem:[%s386 + $0xa0] sm:$0xff] %v5931
      %6038 = vst [vmem:[%s386 + $0xa8] sm:$0xff] %v5934
      %6039 = vst [vmem:[%s386 + $0xb0] sm:$0xff] %v5939
      %6040 = vst [vmem:[%s386 + $0xb8] sm:$0xff] %v5942
      %6041 = vst [vmem:[%s386 + $0xc0] sm:$0xff] %v5947
      %6042 = vst [vmem:[%s386 + $0xc8] sm:$0xff] %v5950
      %6043 = vst [vmem:[%s386 + $0xd0] sm:$0xff] %v5955
      %6044 = vst [vmem:[%s386 + $0xd8] sm:$0xff] %v5958
      %6045 = vst [vmem:[%s386 + $0xe0] sm:$0xff] %v5963
      %6046 = vst [vmem:[%s386 + $0xe8] sm:$0xff] %v5966
      %6047 = vst [vmem:[%s386 + $0xf0] sm:$0xff] %v5971
      %6048 = vst [vmem:[%s386 + $0xf8] sm:$0xff] %v5974
      %6049 = vst [vmem:[%s386 + $0x100] sm:$0xff] %v5979
      %6050 = vst [vmem:[%s386 + $0x108] sm:$0xff] %v5982
      %6051 = vst [vmem:[%s386 + $0x110] sm:$0xff] %v5987
      %6052 = vst [vmem:[%s386 + $0x118] sm:$0xff] %v5990
      %6053 = vst [vmem:[%s386 + $0x120] sm:$0xff] %v5995
      %6054 = vst [vmem:[%s386 + $0x128] sm:$0xff] %v5998
      %6055 = vst [vmem:[%s386 + $0x130] sm:$0xff] %v6003
      %6056 = vst [vmem:[%s386 + $0x138] sm:$0xff] %v6006
      %6057 = vst [vmem:[%s386 + $0x140] sm:$0xff] %v6011
      %6058 = vst [vmem:[%s386 + $0x148] sm:$0xff] %v6014
      %s6059 = smul.u32 42, %s21
      %p6060 = scmp.lt.s32.totalorder %s6059, 83
      %s6061 = scalar_select %p6060, %s6059, 83
      %s6062 = smul.addr %s6061, 8
      %s6063 = scalar_lea.vmem %s10, %s6062
      // Predicated region
      $region61: #{stid_dsc_forward.1} parent=59 // pred_check
        %p6064 = pneg %p259
      $region62: #{stid_dsc_forward.1} parent=59 // pred_check_branch
        %6066 = sbr.rel (%p6064) target = $region64
      $region63: #{stid_dsc_forward.1} parent=59 // pred_region
        %s6067 = smul.u32 42, %s21
      $region64: #{stid_dsc_forward.1} parent=59 // pred_fallthru
        _
    $region60: #{stid_dsc_forward.1} parent=5 // pred_fallthru
      _
    %p6068 = scmp.le.s32.totalorder 2, %s16
    // Predicated region
    $region65: #{stid_dsc_forward.1} parent=5 // pred_check
      %p6069 = pneg %p6068
    $region66: #{stid_dsc_forward.1} parent=5 // pred_check_branch
      %6071 = sbr.rel (%p6069) target = $region68
    $region67: #{stid_dsc_forward.1} parent=5 // pred_region
      %s6072 = ssub.s32 %s16, 2
      // Predicated region
      $region69: #{stid_dsc_forward.1} parent=67 // pred_check
        %p6073 = pneg %p265
      $region70: #{stid_dsc_forward.1} parent=67 // pred_check_branch
        %6075 = sbr.rel (%p6073) target = $region72
      $region71: #{stid_dsc_forward.1} parent=67 // pred_region
        %s6076 = smul.u32 42, %s22
        %p6077 = scmp.lt.s32.totalorder %s6076, 83
        %s6078 = scalar_select %p6077, %s6076, 83
        %s6079 = smul.addr %s6078, 8
        %s6080 = scalar_lea.vmem %s10, %s6079
      $region72: #{stid_dsc_forward.1} parent=67 // pred_fallthru
        _
    $region68: #{stid_dsc_forward.1} parent=5 // pred_fallthru
      _
  $region6: #{stid_dsc_forward.1} parent=0 // loop_footer
    %s20 = sadd.s32 1, %s16
  $region7: #{stid_dsc_forward.1} parent=0 // loop_footer_branch
    %15 = sbr.rel target = $region3
  $region8: #{stid_dsc_forward.1} parent=0 // loop_exit
    _

</llo_original>
